<compile_context>
chip_gen: v7x
topology: tpu7x:2x2x1
jax: 0.10.0
libtpu: 0.0.40
codegen_flags: <defaults>
</compile_context>

<pallas_src>
import functools

import jax
import jax.numpy as jnp
from jax import lax
from jax.experimental import pallas as pl
from jax.experimental.pallas import tpu as pltpu


VMEM = pl.BlockSpec(memory_space=pltpu.MemorySpace.VMEM)
SMEM = pl.BlockSpec(memory_space=pltpu.MemorySpace.SMEM)

ATTN_HIDDEN = 128
ATTN_HEADS = 2
ATTN_HEAD_SIZE = ATTN_HIDDEN // ATTN_HEADS

_COMPILER_PARAMS = pltpu.CompilerParams(vmem_limit_bytes=32 * 1024 * 1024)


# ----------------------------- in-kernel helpers ----------------------------

def _eye(n):
    r = lax.broadcasted_iota(jnp.int32, (n, n), 0)
    c = lax.broadcasted_iota(jnp.int32, (n, n), 1)
    return (r == c).astype(jnp.float32)


def _t_via_dot(eye_m, x):
    """Transpose x:[n,m] -> [m,n] as eye_m contracted against x's last dim.

    Uses the rhs-last-dim contraction form (same pattern as Q @ K^T), which is the
    well-supported Mosaic matmul path — avoids relying on in-kernel jnp.transpose.
    """
    return lax.dot_general(eye_m, x, (((1,), (1,)), ((), ())),
                           preferred_element_type=jnp.float32)


def _row_sums_on_lanes(x):
    """Row sums of x:[m,n] laid out on the lane axis as a [1,m] row vector."""
    ones_row = jnp.ones((1, x.shape[0]), jnp.float32)
    return lax.dot_general(ones_row, x, (((1,), (1,)), ((), ())),
                           preferred_element_type=jnp.float32)


# ----------------------------- Pallas kernels -------------------------------

def _down_level_kernel(g_ref, h_ref, w_ref, b_ref,
                       wq_ref, bq_ref, wk_ref, bk_ref, wv_ref, bv_ref,
                       wd_ref, bd_ref, va_ref, vb_ref,
                       h_out_ref, anorm_ref, score_ref,
                       *, num_heads, head_size):
    """Fused down-level: GCN(norm + conv) -> attention + centrality -> pool score."""
    g = g_ref[...]
    n = g.shape[0]
    eye = _eye(n)
    a = (g != 0).astype(jnp.float32)

    # ---- GCNConv normalization (fused; no separate gcn_norm kernel / HBM pass) ----
    a_hat = jnp.maximum(a, eye)                               # binarize + self loops
    deg_col = jnp.sum(a_hat, axis=1, keepdims=True)           # [n,1] degrees
    deg_row = _row_sums_on_lanes(a_hat)                       # same degrees, [1,n] on lanes
    a_norm = a_hat * lax.rsqrt(deg_col) * lax.rsqrt(deg_row)  # D^-1/2 A_hat D^-1/2
    anorm_ref[...] = a_norm                                   # cached for the up pass

    # ---- GCN: relu(A_norm @ (h @ W) + b) (no residual on the down path) ----
    hw = jnp.dot(h_ref[...], w_ref[...], preferred_element_type=jnp.float32)
    h_out = jnp.maximum(
        jnp.dot(a_norm, hw, preferred_element_type=jnp.float32) + b_ref[...], 0.0)
    h_out_ref[...] = h_out

    # ---- SelfAttention score on the GCN output (per-head, reassociated) ----
    q = jnp.dot(h_out, wq_ref[...], preferred_element_type=jnp.float32) + bq_ref[...]
    k = jnp.dot(h_out, wk_ref[...], preferred_element_type=jnp.float32) + bk_ref[...]
    v = jnp.dot(h_out, wv_ref[...], preferred_element_type=jnp.float32) + bv_ref[...]
    wd = wd_ref[...]
    scale = 1.0 / (head_size ** 0.5)
    dn = (((1,), (1,)), ((), ()))                             # contract last dims (Q @ K^T)
    att = None
    for hh in range(num_heads):
        sl = slice(hh * head_size, (hh + 1) * head_size)
        s = lax.dot_general(q[:, sl], k[:, sl], dn,
                            preferred_element_type=jnp.float32) * scale   # [n, n]
        p = jax.nn.softmax(s, axis=-1)
        # reassociated: vd = V_h @ Wd_h (once), then P @ vd — drops the [n,n]@[n,64] matmul
        vd = jnp.dot(v[:, sl], wd[sl, :], preferred_element_type=jnp.float32)   # [n, 1]
        part = jnp.dot(p, vd, preferred_element_type=jnp.float32)               # [n, 1]
        att = part if att is None else att + part
    att = att + bd_ref[...]

    # ---- degree centrality on the symmetrized pattern ----
    # TODO(synk): networkx betweenness/closeness centrality (shortest-path graph
    # algorithms) have no clean Pallas equivalent; only degree centrality is computed.
    a_t = _t_via_dot(eye, a)                                  # a.T via matmul (no relayout)
    und = jnp.maximum(a, a_t)
    cent = jnp.sum(und, axis=1, keepdims=True) / float(max(n - 1, 1))       # [n, 1]

    # ---- view-attention score fusion (matches Pool.forward order:
    #      sigmoid -> max-abs normalize -> sigmoid(matmul) -> softmax -> sigmoid(sum)) ----
    s1 = jax.nn.sigmoid(att)
    s2 = jax.nn.sigmoid(cent)
    sc1 = s1 / jnp.max(jnp.abs(s1), axis=0, keepdims=True)
    sc2 = s2 / jnp.max(jnp.abs(s2), axis=0, keepdims=True)
    w0 = jax.nn.sigmoid(sc1 * va_ref[0, 0] + sc2 * va_ref[1, 0] + vb_ref[0])
    w1 = jax.nn.sigmoid(sc1 * va_ref[0, 1] + sc2 * va_ref[1, 1] + vb_ref[1])
    mx = jnp.maximum(w0, w1)                                  # softmax over the 2 views
    e0 = jnp.exp(w0 - mx)
    e1 = jnp.exp(w1 - mx)
    z = e0 + e1
    scores = jax.nn.sigmoid(sc1 * (e0 / z) + sc2 * (e1 / z))  # [n, 1]

    # lane-dense (1, n) score output (avoids last-dim==1 masked stores)
    score_ref[...] = _t_via_dot(jnp.ones((1, 1), jnp.float32), scores)


def down_level(g, h, gcn_p, pool_p):
    n = g.shape[0]
    dim = h.shape[1]
    ap = pool_p['attn']
    kernel = functools.partial(_down_level_kernel,
                               num_heads=ATTN_HEADS, head_size=ATTN_HEAD_SIZE)
    return pl.pallas_call(
        kernel,
        out_shape=(jax.ShapeDtypeStruct((n, dim), jnp.float32),   # GCN output
                   jax.ShapeDtypeStruct((n, n), jnp.float32),     # cached A_norm
                   jax.ShapeDtypeStruct((1, n), jnp.float32)),    # pool scores (lane-dense)
        in_specs=[VMEM] * 12 + [SMEM, SMEM],
        out_specs=(VMEM, VMEM, VMEM),
        compiler_params=_COMPILER_PARAMS,
    )(g, h, gcn_p['w_t'], gcn_p['b'],
      ap['wq_t'], ap['bq'], ap['wk_t'], ap['bk'], ap['wv_t'], ap['bv'],
      ap['wd_t'], ap['bd'], pool_p['view_att'], pool_p['view_bias'])


def _gcn_bottom_kernel(g_ref, h_ref, w_ref, b_ref, o_ref):
    """Bottom GCN: norm + conv fused, no residual, A_norm not re-used so not emitted."""
    g = g_ref[...]
    n = g.shape[0]
    eye = _eye(n)
    a_hat = jnp.maximum((g != 0).astype(jnp.float32), eye)
    deg_col = jnp.sum(a_hat, axis=1, keepdims=True)
    deg_row = _row_sums_on_lanes(a_hat)
    a_norm = a_hat * lax.rsqrt(deg_col) * lax.rsqrt(deg_row)
    hw = jnp.dot(h_ref[...], w_ref[...], preferred_element_type=jnp.float32)
    o_ref[...] = jnp.maximum(
        jnp.dot(a_norm, hw, preferred_element_type=jnp.float32) + b_ref[...], 0.0)


def gcn_bottom(g, h, gcn_p):
    n = g.shape[0]
    dim = h.shape[1]
    return pl.pallas_call(
        _gcn_bottom_kernel,
        out_shape=jax.ShapeDtypeStruct((n, dim), jnp.float32),
        in_specs=[VMEM] * 4,
        out_specs=VMEM,
        compiler_params=_COMPILER_PARAMS,
    )(g, h, gcn_p['w_t'], gcn_p['b'])


def _gcn_up_kernel(anorm_ref, h_ref, idx_ref, w_ref, b_ref, res_ref, o_ref):
    """Fused up-level: unpool scatter (one-hot matmul) + GCN (cached A_norm) + residual."""
    n = anorm_ref.shape[0]
    kk = h_ref.shape[0]
    idx = idx_ref[...]                                        # [1, kk] int32
    rows = lax.broadcasted_iota(jnp.int32, (n, kk), 0)
    sel = (rows == idx).astype(jnp.float32)                   # sel[i, j] = (i == idx[j])
    # unpool after the (cheaper, pooled-size) feature transform: sel @ (h @ W)
    hw = jnp.dot(h_ref[...], w_ref[...], preferred_element_type=jnp.float32)    # [kk, dim]
    hw_full = jnp.dot(sel, hw, preferred_element_type=jnp.float32)              # [n, dim]
    agg = jnp.dot(anorm_ref[...], hw_full, preferred_element_type=jnp.float32)
    o_ref[...] = jnp.maximum(agg + b_ref[...], 0.0) + res_ref[...]


def gcn_up(a_norm, h, idx, gcn_p, residual):
    n = a_norm.shape[0]
    kk = idx.shape[0]
    dim = h.shape[1]
    idx_row = idx.reshape(1, kk).astype(jnp.int32)
    return pl.pallas_call(
        _gcn_up_kernel,
        out_shape=jax.ShapeDtypeStruct((n, dim), jnp.float32),
        in_specs=[VMEM] * 6,
        out_specs=VMEM,
        compiler_params=_COMPILER_PARAMS,
    )(a_norm, h, idx_row, gcn_p['w_t'], gcn_p['b'], residual)


def _topk_graph_kernel(g_ref, h_ref, idxc_ref, valc_ref, g_out_ref, h_out_ref):
    """Fused top_k_graph tail: 2-hop + row/col gather + norm_g + feature gather*values."""
    g = g_ref[...]
    n = g.shape[0]
    kk = g_out_ref.shape[0]

    # 2-hop reachability: bool(bool(g) @ bool(g)).  0/1 operands are exact in bf16;
    # accumulate in f32 (preferred_element_type) and threshold >0.5, not ==0.
    a = (g != 0).astype(jnp.float32).astype(jnp.bfloat16)
    a2 = jnp.dot(a, a, preferred_element_type=jnp.float32)
    un = (a2 > 0.5).astype(jnp.float32)

    idx = idxc_ref[...]                                       # [kk, 1] int32
    cols = lax.broadcasted_iota(jnp.int32, (kk, n), 1)
    sel_t = (cols == idx).astype(jnp.float32)                 # sel_t[j, i] = (i == idx[j])

    # un[idx, :] then [:, idx] via one-hot matmuls (no N x N intermediate leaves VMEM)
    rows_g = jnp.dot(sel_t, un, preferred_element_type=jnp.float32)          # [kk, n]
    g_gath = lax.dot_general(rows_g, sel_t, (((1,), (1,)), ((), ())),
                             preferred_element_type=jnp.float32)             # [kk, kk]

    # norm_g: torch `g / degrees` broadcasts degrees over the LAST dim,
    # i.e. column j is divided by the row-sum of row j.
    degs = _row_sums_on_lanes(g_gath)                         # [1, kk] on lanes
    g_out_ref[...] = g_gath / degs

    # new_h = h[idx, :] * values[:, None]   (gather + scale via scaled one-hot matmul)
    h_out_ref[...] = jnp.dot(sel_t * valc_ref[...], h_ref[...],
                             preferred_element_type=jnp.float32)             # [kk, dim]


def topk_graph(g, h, idx, values):
    kk = idx.shape[0]
    dim = h.shape[1]
    idx_col = idx.reshape(kk, 1).astype(jnp.int32)
    val_col = values.reshape(kk, 1).astype(jnp.float32)
    return pl.pallas_call(
        _topk_graph_kernel,
        out_shape=(jax.ShapeDtypeStruct((kk, kk), jnp.float32),
                   jax.ShapeDtypeStruct((kk, dim), jnp.float32)),
        in_specs=[VMEM] * 4,
        out_specs=(VMEM, VMEM),
        compiler_params=_COMPILER_PARAMS,
    )(g, h, idx_col, val_col)


# ------------------------------ JAX glue ------------------------------------

def pool_level(g, h, scores_row, k):
    n = g.shape[0]
    kk = max(2, int(k * n))
    values, idx = lax.top_k(scores_row.reshape(-1), kk)       # top-k stays as XLA glue
    g_new, h_new = topk_graph(g, h, idx, values)
    return g_new, h_new, idx


def edmd_pool_forward(params, g, h, ks):
    l_n = len(ks)
    anorm_ms, indices_list, down_outs, hs = [], [], [], []
    org_h = h
    for i in range(l_n):
        h, a_norm, scores = down_level(g, h, params['down'][i], params['pool'][i])
        anorm_ms.append(a_norm)                               # cache A_norm for the up pass
        down_outs.append(h)
        g, h, idx = pool_level(g, h, scores, ks[i])
        indices_list.append(idx)
    h = gcn_bottom(g, h, params['bottom'])
    for i in range(l_n):
        up_idx = l_n - i - 1
        h = gcn_up(anorm_ms[up_idx], h, indices_list[up_idx],
                   params['up'][i], down_outs[up_idx])
        hs.append(h)
    h = h + org_h
    hs.append(h)
    return hs


# --------------------------- parameter init ---------------------------------

def _glorot(key, shape):
    fan_in, fan_out = shape
    lim = (6.0 / (fan_in + fan_out)) ** 0.5
    return jax.random.uniform(key, shape, jnp.float32, -lim, lim)


def _gcn_params(key, dim):
    return {'w_t': _glorot(key, (dim, dim)), 'b': jnp.zeros((1, dim), jnp.float32)}


def _attn_params(key, dim):
    k = jax.random.split(key, 4)
    return {
        'wq_t': _glorot(k[0], (dim, ATTN_HIDDEN)), 'bq': jnp.zeros((1, ATTN_HIDDEN), jnp.float32),
        'wk_t': _glorot(k[1], (dim, ATTN_HIDDEN)), 'bk': jnp.zeros((1, ATTN_HIDDEN), jnp.float32),
        'wv_t': _glorot(k[2], (dim, ATTN_HIDDEN)), 'bv': jnp.zeros((1, ATTN_HIDDEN), jnp.float32),
        'wd_t': _glorot(k[3], (ATTN_HIDDEN, 1)),   'bd': jnp.zeros((1, 1), jnp.float32),
    }


def init_params(key, dim, ks):
    l_n = len(ks)
    keys = iter(jax.random.split(key, 3 * l_n + 1 + l_n))
    params = {
        'down': [_gcn_params(next(keys), dim) for _ in range(l_n)],
        'up': [_gcn_params(next(keys), dim) for _ in range(l_n)],
        'bottom': _gcn_params(next(keys), dim),
        'pool': [],
    }
    for _ in range(l_n):
        params['pool'].append({
            'attn': _attn_params(next(keys), dim),
            'view_att': _glorot(next(keys), (2, 2)),
            'view_bias': jnp.zeros((2,), jnp.float32),
        })
    return params


# --------------------------------- main --------------------------------------

if __name__ == "__main__":
    key = jax.random.PRNGKey(0)
    k_g, k_h, k_p = jax.random.split(key, 3)

    N, dim = 16, 32
    ks = [0.8, 0.6]

    # Random symmetric adjacency with a ring to avoid isolated nodes.
    a = (jax.random.uniform(k_g, (N, N)) < 0.3).astype(jnp.float32)
    a = jnp.maximum(a, a.T)
    a = a * (1.0 - jnp.eye(N, dtype=jnp.float32))
    ring = jnp.roll(jnp.eye(N, dtype=jnp.float32), 1, axis=1)
    g = jnp.minimum(a + ring + ring.T, 1.0)

    h = jax.random.normal(k_h, (N, dim), jnp.float32)

    params = init_params(k_p, dim, ks)

    forward = jax.jit(functools.partial(edmd_pool_forward, ks=ks))
    hs = forward(params, g, h)
    for out in hs:
        jax.block_until_ready(out)
    print("KERNEL_OK")
</pallas_src>

<mosaic_0001>
module attributes {stable_mosaic.version = 11 : i64} {
  func.func @_down_level_kernel(%arg0: memref<16x16xf32, #tpu.memory_space<vmem>>, %arg1: memref<16x32xf32, #tpu.memory_space<vmem>>, %arg2: memref<32x32xf32, #tpu.memory_space<vmem>>, %arg3: memref<1x32xf32, #tpu.memory_space<vmem>>, %arg4: memref<32x128xf32, #tpu.memory_space<vmem>>, %arg5: memref<1x128xf32, #tpu.memory_space<vmem>>, %arg6: memref<32x128xf32, #tpu.memory_space<vmem>>, %arg7: memref<1x128xf32, #tpu.memory_space<vmem>>, %arg8: memref<32x128xf32, #tpu.memory_space<vmem>>, %arg9: memref<1x128xf32, #tpu.memory_space<vmem>>, %arg10: memref<128x1xf32, #tpu.memory_space<vmem>>, %arg11: memref<1x1xf32, #tpu.memory_space<vmem>>, %arg12: memref<2x2xf32, #tpu.memory_space<smem>>, %arg13: memref<2xf32, #tpu.memory_space<smem>>, %arg14: memref<16x32xf32, #tpu.memory_space<vmem>>, %arg15: memref<16x16xf32, #tpu.memory_space<vmem>>, %arg16: memref<1x16xf32, #tpu.memory_space<vmem>>) attributes {dimension_semantics = [], scalar_prefetch = 0 : i64, scratch_operands = 0 : i64, tpu.core_type = #tpu.core_type<tc>} {
    %c0 = arith.constant 0 : index
    %c0_0 = arith.constant 0 : index
    %0 = vector.load %arg0[%c0, %c0_0] : memref<16x16xf32, #tpu.memory_space<vmem>>, vector<16x16xf32>
    %1 = tpu.iota {dimensions = array<i32: 0>} : vector<16x16xi32>
    %2 = tpu.iota {dimensions = array<i32: 1>} : vector<16x16xi32>
    %3 = arith.cmpi eq, %1, %2 : vector<16x16xi32>
    %4 = arith.extui %3 : vector<16x16xi1> to vector<16x16xi32>
    %5 = arith.sitofp %4 : vector<16x16xi32> to vector<16x16xf32>
    %cst = arith.constant 0.000000e+00 : f32
    %6 = vector.broadcast %cst : f32 to vector<16x16xf32>
    %7 = arith.cmpf one, %0, %6 : vector<16x16xf32>
    %8 = arith.extui %7 : vector<16x16xi1> to vector<16x16xi32>
    %9 = arith.sitofp %8 : vector<16x16xi32> to vector<16x16xf32>
    %10 = arith.maximumf %9, %5 : vector<16x16xf32>
    %cst_1 = arith.constant dense<0.000000e+00> : vector<16xf32>
    %11 = vector.multi_reduction <add>, %10, %cst_1 [1] : vector<16x16xf32> to vector<16xf32>
    %12 = vector.shape_cast %11 : vector<16xf32> to vector<16x1xf32>
    %cst_2 = arith.constant 1.000000e+00 : f32
    %13 = vector.broadcast %cst_2 : f32 to vector<1x16xf32>
    %cst_3 = arith.constant dense<0.000000e+00> : vector<1x16xf32>
    %14 = tpu.matmul %13, %10, %cst_3 {dimension_numbers = #tpu.dot_dimension_numbers<[1], [1], [0], [0], [0, 0, 1, 0], [], []>} : vector<1x16xf32>, vector<16x16xf32>, vector<1x16xf32> -> vector<1x16xf32>
    %15 = math.rsqrt %12 : vector<16x1xf32>
    %16 = vector.broadcast %15 : vector<16x1xf32> to vector<16x16xf32>
    %17 = arith.mulf %10, %16 : vector<16x16xf32>
    %18 = math.rsqrt %14 : vector<1x16xf32>
    %19 = vector.broadcast %18 : vector<1x16xf32> to vector<16x16xf32>
    %20 = arith.mulf %17, %19 : vector<16x16xf32>
    %c0_4 = arith.constant 0 : index
    %c0_5 = arith.constant 0 : index
    %21 = vector.load %arg15[%c0_4, %c0_5] : memref<16x16xf32, #tpu.memory_space<vmem>>, vector<16x16xf32>
    tpu.vector_store %arg15[%c0_4, %c0_5], %20 {strides = array<i32>} : memref<16x16xf32, #tpu.memory_space<vmem>>, vector<16x16xf32>,
    %c0_6 = arith.constant 0 : index
    %c0_7 = arith.constant 0 : index
    %22 = vector.load %arg1[%c0_6, %c0_7] : memref<16x32xf32, #tpu.memory_space<vmem>>, vector<16x32xf32>
    %c0_8 = arith.constant 0 : index
    %c0_9 = arith.constant 0 : index
    %23 = vector.load %arg2[%c0_8, %c0_9] : memref<32x32xf32, #tpu.memory_space<vmem>>, vector<32x32xf32>
    %cst_10 = arith.constant dense<0.000000e+00> : vector<16x32xf32>
    %24 = tpu.matmul %22, %23, %cst_10 {dimension_numbers = #tpu.dot_dimension_numbers<[1], [0], [0], [1], [0, 0, 1, 1], [], []>} : vector<16x32xf32>, vector<32x32xf32>, vector<16x32xf32> -> vector<16x32xf32>
    %cst_11 = arith.constant dense<0.000000e+00> : vector<16x32xf32>
    %25 = tpu.matmul %20, %24, %cst_11 {dimension_numbers = #tpu.dot_dimension_numbers<[1], [0], [0], [1], [0, 0, 1, 1], [], []>} : vector<16x16xf32>, vector<16x32xf32>, vector<16x32xf32> -> vector<16x32xf32>
    %c0_12 = arith.constant 0 : index
    %c0_13 = arith.constant 0 : index
    %26 = vector.load %arg3[%c0_12, %c0_13] : memref<1x32xf32, #tpu.memory_space<vmem>>, vector<1x32xf32>
    %27 = vector.broadcast %26 : vector<1x32xf32> to vector<16x32xf32>
    %28 = arith.addf %25, %27 : vector<16x32xf32>
    %cst_14 = arith.constant 0.000000e+00 : f32
    %29 = vector.broadcast %cst_14 : f32 to vector<16x32xf32>
    %30 = arith.maximumf %28, %29 : vector<16x32xf32>
    %c0_15 = arith.constant 0 : index
    %c0_16 = arith.constant 0 : index
    %31 = vector.load %arg14[%c0_15, %c0_16] : memref<16x32xf32, #tpu.memory_space<vmem>>, vector<16x32xf32>
    tpu.vector_store %arg14[%c0_15, %c0_16], %30 {strides = array<i32>} : memref<16x32xf32, #tpu.memory_space<vmem>>, vector<16x32xf32>,
    %c0_17 = arith.constant 0 : index
    %c0_18 = arith.constant 0 : index
    %32 = vector.load %arg4[%c0_17, %c0_18] : memref<32x128xf32, #tpu.memory_space<vmem>>, vector<32x128xf32>
    %cst_19 = arith.constant dense<0.000000e+00> : vector<16x128xf32>
    %33 = tpu.matmul %30, %32, %cst_19 {dimension_numbers = #tpu.dot_dimension_numbers<[1], [0], [0], [1], [0, 0, 1, 1], [], []>} : vector<16x32xf32>, vector<32x128xf32>, vector<16x128xf32> -> vector<16x128xf32>
    %c0_20 = arith.constant 0 : index
    %c0_21 = arith.constant 0 : index
    %34 = vector.load %arg5[%c0_20, %c0_21] : memref<1x128xf32, #tpu.memory_space<vmem>>, vector<1x128xf32>
    %35 = vector.broadcast %34 : vector<1x128xf32> to vector<16x128xf32>
    %36 = arith.addf %33, %35 : vector<16x128xf32>
    %c0_22 = arith.constant 0 : index
    %c0_23 = arith.constant 0 : index
    %37 = vector.load %arg6[%c0_22, %c0_23] : memref<32x128xf32, #tpu.memory_space<vmem>>, vector<32x128xf32>
    %cst_24 = arith.constant dense<0.000000e+00> : vector<16x128xf32>
    %38 = tpu.matmul %30, %37, %cst_24 {dimension_numbers = #tpu.dot_dimension_numbers<[1], [0], [0], [1], [0, 0, 1, 1], [], []>} : vector<16x32xf32>, vector<32x128xf32>, vector<16x128xf32> -> vector<16x128xf32>
    %c0_25 = arith.constant 0 : index
    %c0_26 = arith.constant 0 : index
    %39 = vector.load %arg7[%c0_25, %c0_26] : memref<1x128xf32, #tpu.memory_space<vmem>>, vector<1x128xf32>
    %40 = vector.broadcast %39 : vector<1x128xf32> to vector<16x128xf32>
    %41 = arith.addf %38, %40 : vector<16x128xf32>
    %c0_27 = arith.constant 0 : index
    %c0_28 = arith.constant 0 : index
    %42 = vector.load %arg8[%c0_27, %c0_28] : memref<32x128xf32, #tpu.memory_space<vmem>>, vector<32x128xf32>
    %cst_29 = arith.constant dense<0.000000e+00> : vector<16x128xf32>
    %43 = tpu.matmul %30, %42, %cst_29 {dimension_numbers = #tpu.dot_dimension_numbers<[1], [0], [0], [1], [0, 0, 1, 1], [], []>} : vector<16x32xf32>, vector<32x128xf32>, vector<16x128xf32> -> vector<16x128xf32>
    %c0_30 = arith.constant 0 : index
    %c0_31 = arith.constant 0 : index
    %44 = vector.load %arg9[%c0_30, %c0_31] : memref<1x128xf32, #tpu.memory_space<vmem>>, vector<1x128xf32>
    %45 = vector.broadcast %44 : vector<1x128xf32> to vector<16x128xf32>
    %46 = arith.addf %43, %45 : vector<16x128xf32>
    %c0_32 = arith.constant 0 : index
    %c0_33 = arith.constant 0 : index
    %47 = vector.load %arg10[%c0_32, %c0_33] : memref<128x1xf32, #tpu.memory_space<vmem>>, vector<128x1xf32>
    %48 = vector.extract_strided_slice %36 {offsets = [0, 0], sizes = [16, 64], strides = [1, 1]} : vector<16x128xf32> to vector<16x64xf32>
    %49 = vector.extract_strided_slice %41 {offsets = [0, 0], sizes = [16, 64], strides = [1, 1]} : vector<16x128xf32> to vector<16x64xf32>
    %cst_34 = arith.constant dense<0.000000e+00> : vector<16x16xf32>
    %50 = tpu.matmul %48, %49, %cst_34 {dimension_numbers = #tpu.dot_dimension_numbers<[1], [1], [0], [0], [0, 0, 1, 0], [], []>} : vector<16x64xf32>, vector<16x64xf32>, vector<16x16xf32> -> vector<16x16xf32>
    %cst_35 = arith.constant 1.250000e-01 : f32
    %51 = vector.broadcast %cst_35 : f32 to vector<16x16xf32>
    %52 = arith.mulf %50, %51 : vector<16x16xf32>
    %cst_36 = arith.constant dense<0xFF800000> : vector<16xf32>
    %53 = vector.multi_reduction <maximumf>, %52, %cst_36 [1] : vector<16x16xf32> to vector<16xf32>
    %cst_37 = arith.constant 0xFF800000 : f32
    %54 = vector.broadcast %cst_37 : f32 to vector<16xf32>
    %55 = arith.maximumf %54, %53 : vector<16xf32>
    %56 = vector.shape_cast %55 : vector<16xf32> to vector<16x1xf32>
    %57 = vector.broadcast %56 : vector<16x1xf32> to vector<16x16xf32>
    %58 = arith.subf %52, %57 : vector<16x16xf32>
    %59 = math.exp %58 : vector<16x16xf32>
    %cst_38 = arith.constant dense<0.000000e+00> : vector<16xf32>
    %60 = vector.multi_reduction <add>, %59, %cst_38 [1] : vector<16x16xf32> to vector<16xf32>
    %61 = vector.shape_cast %60 : vector<16xf32> to vector<16x1xf32>
    %62 = vector.broadcast %61 : vector<16x1xf32> to vector<16x16xf32>
    %63 = arith.divf %59, %62 : vector<16x16xf32>
    %64 = vector.extract_strided_slice %46 {offsets = [0, 0], sizes = [16, 64], strides = [1, 1]} : vector<16x128xf32> to vector<16x64xf32>
    %65 = vector.extract_strided_slice %47 {offsets = [0, 0], sizes = [64, 1], strides = [1, 1]} : vector<128x1xf32> to vector<64x1xf32>
    %cst_39 = arith.constant dense<0.000000e+00> : vector<16x1xf32>
    %66 = tpu.matmul %64, %65, %cst_39 {dimension_numbers = #tpu.dot_dimension_numbers<[1], [0], [0], [1], [0, 0, 1, 1], [], []>} : vector<16x64xf32>, vector<64x1xf32>, vector<16x1xf32> -> vector<16x1xf32>
    %cst_40 = arith.constant dense<0.000000e+00> : vector<16x1xf32>
    %67 = tpu.matmul %63, %66, %cst_40 {dimension_numbers = #tpu.dot_dimension_numbers<[1], [0], [0], [1], [0, 0, 1, 1], [], []>} : vector<16x16xf32>, vector<16x1xf32>, vector<16x1xf32> -> vector<16x1xf32>
    %68 = vector.extract_strided_slice %36 {offsets = [0, 64], sizes = [16, 64], strides = [1, 1]} : vector<16x128xf32> to vector<16x64xf32>
    %69 = vector.extract_strided_slice %41 {offsets = [0, 64], sizes = [16, 64], strides = [1, 1]} : vector<16x128xf32> to vector<16x64xf32>
    %cst_41 = arith.constant dense<0.000000e+00> : vector<16x16xf32>
    %70 = tpu.matmul %68, %69, %cst_41 {dimension_numbers = #tpu.dot_dimension_numbers<[1], [1], [0], [0], [0, 0, 1, 0], [], []>} : vector<16x64xf32>, vector<16x64xf32>, vector<16x16xf32> -> vector<16x16xf32>
    %cst_42 = arith.constant 1.250000e-01 : f32
    %71 = vector.broadcast %cst_42 : f32 to vector<16x16xf32>
    %72 = arith.mulf %70, %71 : vector<16x16xf32>
    %cst_43 = arith.constant dense<0xFF800000> : vector<16xf32>
    %73 = vector.multi_reduction <maximumf>, %72, %cst_43 [1] : vector<16x16xf32> to vector<16xf32>
    %cst_44 = arith.constant 0xFF800000 : f32
    %74 = vector.broadcast %cst_44 : f32 to vector<16xf32>
    %75 = arith.maximumf %74, %73 : vector<16xf32>
    %76 = vector.shape_cast %75 : vector<16xf32> to vector<16x1xf32>
    %77 = vector.broadcast %76 : vector<16x1xf32> to vector<16x16xf32>
    %78 = arith.subf %72, %77 : vector<16x16xf32>
    %79 = math.exp %78 : vector<16x16xf32>
    %cst_45 = arith.constant dense<0.000000e+00> : vector<16xf32>
    %80 = vector.multi_reduction <add>, %79, %cst_45 [1] : vector<16x16xf32> to vector<16xf32>
    %81 = vector.shape_cast %80 : vector<16xf32> to vector<16x1xf32>
    %82 = vector.broadcast %81 : vector<16x1xf32> to vector<16x16xf32>
    %83 = arith.divf %79, %82 : vector<16x16xf32>
    %84 = vector.extract_strided_slice %46 {offsets = [0, 64], sizes = [16, 64], strides = [1, 1]} : vector<16x128xf32> to vector<16x64xf32>
    %85 = vector.extract_strided_slice %47 {offsets = [64, 0], sizes = [64, 1], strides = [1, 1]} : vector<128x1xf32> to vector<64x1xf32>
    %cst_46 = arith.constant dense<0.000000e+00> : vector<16x1xf32>
    %86 = tpu.matmul %84, %85, %cst_46 {dimension_numbers = #tpu.dot_dimension_numbers<[1], [0], [0], [1], [0, 0, 1, 1], [], []>} : vector<16x64xf32>, vector<64x1xf32>, vector<16x1xf32> -> vector<16x1xf32>
    %cst_47 = arith.constant dense<0.000000e+00> : vector<16x1xf32>
    %87 = tpu.matmul %83, %86, %cst_47 {dimension_numbers = #tpu.dot_dimension_numbers<[1], [0], [0], [1], [0, 0, 1, 1], [], []>} : vector<16x16xf32>, vector<16x1xf32>, vector<16x1xf32> -> vector<16x1xf32>
    %88 = arith.addf %67, %87 : vector<16x1xf32>
    %c0_48 = arith.constant 0 : index
    %c0_49 = arith.constant 0 : index
    %89 = vector.load %arg11[%c0_48, %c0_49] : memref<1x1xf32, #tpu.memory_space<vmem>>, vector<1x1xf32>
    %90 = vector.broadcast %89 : vector<1x1xf32> to vector<16x1xf32>
    %91 = arith.addf %88, %90 : vector<16x1xf32>
    %cst_50 = arith.constant dense<0.000000e+00> : vector<16x16xf32>
    %92 = tpu.matmul %5, %9, %cst_50 {dimension_numbers = #tpu.dot_dimension_numbers<[1], [1], [0], [0], [0, 0, 1, 0], [], []>} : vector<16x16xf32>, vector<16x16xf32>, vector<16x16xf32> -> vector<16x16xf32>
    %93 = arith.maximumf %9, %92 : vector<16x16xf32>
    %cst_51 = arith.constant dense<0.000000e+00> : vector<16xf32>
    %94 = vector.multi_reduction <add>, %93, %cst_51 [1] : vector<16x16xf32> to vector<16xf32>
    %95 = vector.shape_cast %94 : vector<16xf32> to vector<16x1xf32>
    %cst_52 = arith.constant 1.500000e+01 : f32
    %96 = vector.broadcast %cst_52 : f32 to vector<16x1xf32>
    %97 = arith.divf %95, %96 : vector<16x1xf32>
    %98 = arith.negf %91 : vector<16x1xf32>
    %99 = math.exp %98 : vector<16x1xf32>
    %cst_53 = arith.constant 1.000000e+00 : f32
    %100 = vector.broadcast %cst_53 : f32 to vector<16x1xf32>
    %101 = arith.addf %100, %99 : vector<16x1xf32>
    %102 = arith.divf %100, %101 : vector<16x1xf32>
    %103 = arith.negf %97 : vector<16x1xf32>
    %104 = math.exp %103 : vector<16x1xf32>
    %cst_54 = arith.constant 1.000000e+00 : f32
    %105 = vector.broadcast %cst_54 : f32 to vector<16x1xf32>
    %106 = arith.addf %105, %104 : vector<16x1xf32>
    %107 = arith.divf %105, %106 : vector<16x1xf32>
    %108 = math.absf %102 : vector<16x1xf32>
    %cst_55 = arith.constant dense<0xFF800000> : vector<1xf32>
    %109 = vector.multi_reduction <maximumf>, %108, %cst_55 [0] : vector<16x1xf32> to vector<1xf32>
    %110 = vector.shape_cast %109 : vector<1xf32> to vector<1x1xf32>
    %111 = vector.broadcast %110 : vector<1x1xf32> to vector<16x1xf32>
    %112 = arith.divf %102, %111 : vector<16x1xf32>
    %113 = math.absf %107 : vector<16x1xf32>
    %cst_56 = arith.constant dense<0xFF800000> : vector<1xf32>
    %114 = vector.multi_reduction <maximumf>, %113, %cst_56 [0] : vector<16x1xf32> to vector<1xf32>
    %115 = vector.shape_cast %114 : vector<1xf32> to vector<1x1xf32>
    %116 = vector.broadcast %115 : vector<1x1xf32> to vector<16x1xf32>
    %117 = arith.divf %107, %116 : vector<16x1xf32>
    %c0_57 = arith.constant 0 : index
    %c0_58 = arith.constant 0 : index
    %118 = memref.load %arg12[%c0_57, %c0_58] : memref<2x2xf32, #tpu.memory_space<smem>>
    %119 = vector.broadcast %118 : f32 to vector<16x1xf32>
    %120 = arith.mulf %112, %119 : vector<16x1xf32>
    %c1 = arith.constant 1 : index
    %c0_59 = arith.constant 0 : index
    %121 = memref.load %arg12[%c1, %c0_59] : memref<2x2xf32, #tpu.memory_space<smem>>
    %122 = vector.broadcast %121 : f32 to vector<16x1xf32>
    %123 = arith.mulf %117, %122 : vector<16x1xf32>
    %124 = arith.addf %120, %123 : vector<16x1xf32>
    %c0_60 = arith.constant 0 : index
    %125 = memref.load %arg13[%c0_60] : memref<2xf32, #tpu.memory_space<smem>>
    %126 = vector.broadcast %125 : f32 to vector<16x1xf32>
    %127 = arith.addf %124, %126 : vector<16x1xf32>
    %128 = arith.negf %127 : vector<16x1xf32>
    %129 = math.exp %128 : vector<16x1xf32>
    %cst_61 = arith.constant 1.000000e+00 : f32
    %130 = vector.broadcast %cst_61 : f32 to vector<16x1xf32>
    %131 = arith.addf %130, %129 : vector<16x1xf32>
    %132 = arith.divf %130, %131 : vector<16x1xf32>
    %c0_62 = arith.constant 0 : index
    %c1_63 = arith.constant 1 : index
    %133 = memref.load %arg12[%c0_62, %c1_63] : memref<2x2xf32, #tpu.memory_space<smem>>
    %134 = vector.broadcast %133 : f32 to vector<16x1xf32>
    %135 = arith.mulf %112, %134 : vector<16x1xf32>
    %c1_64 = arith.constant 1 : index
    %c1_65 = arith.constant 1 : index
    %136 = memref.load %arg12[%c1_64, %c1_65] : memref<2x2xf32, #tpu.memory_space<smem>>
    %137 = vector.broadcast %136 : f32 to vector<16x1xf32>
    %138 = arith.mulf %117, %137 : vector<16x1xf32>
    %139 = arith.addf %135, %138 : vector<16x1xf32>
    %c1_66 = arith.constant 1 : index
    %140 = memref.load %arg13[%c1_66] : memref<2xf32, #tpu.memory_space<smem>>
    %141 = vector.broadcast %140 : f32 to vector<16x1xf32>
    %142 = arith.addf %139, %141 : vector<16x1xf32>
    %143 = arith.negf %142 : vector<16x1xf32>
    %144 = math.exp %143 : vector<16x1xf32>
    %cst_67 = arith.constant 1.000000e+00 : f32
    %145 = vector.broadcast %cst_67 : f32 to vector<16x1xf32>
    %146 = arith.addf %145, %144 : vector<16x1xf32>
    %147 = arith.divf %145, %146 : vector<16x1xf32>
    %148 = arith.maximumf %132, %147 : vector<16x1xf32>
    %149 = arith.subf %132, %148 : vector<16x1xf32>
    %150 = math.exp %149 : vector<16x1xf32>
    %151 = arith.subf %147, %148 : vector<16x1xf32>
    %152 = math.exp %151 : vector<16x1xf32>
    %153 = arith.addf %150, %152 : vector<16x1xf32>
    %154 = arith.divf %150, %153 : vector<16x1xf32>
    %155 = arith.mulf %112, %154 : vector<16x1xf32>
    %156 = arith.divf %152, %153 : vector<16x1xf32>
    %157 = arith.mulf %117, %156 : vector<16x1xf32>
    %158 = arith.addf %155, %157 : vector<16x1xf32>
    %159 = arith.negf %158 : vector<16x1xf32>
    %160 = math.exp %159 : vector<16x1xf32>
    %cst_68 = arith.constant 1.000000e+00 : f32
    %161 = vector.broadcast %cst_68 : f32 to vector<16x1xf32>
    %162 = arith.addf %161, %160 : vector<16x1xf32>
    %163 = arith.divf %161, %162 : vector<16x1xf32>
    %cst_69 = arith.constant 1.000000e+00 : f32
    %164 = vector.broadcast %cst_69 : f32 to vector<1x1xf32>
    %cst_70 = arith.constant dense<0.000000e+00> : vector<1x16xf32>
    %165 = tpu.matmul %164, %163, %cst_70 {dimension_numbers = #tpu.dot_dimension_numbers<[1], [1], [0], [0], [0, 0, 1, 0], [], []>} : vector<1x1xf32>, vector<16x1xf32>, vector<1x16xf32> -> vector<1x16xf32>
    %c0_71 = arith.constant 0 : index
    %c0_72 = arith.constant 0 : index
    %166 = vector.load %arg16[%c0_71, %c0_72] : memref<1x16xf32, #tpu.memory_space<vmem>>, vector<1x16xf32>
    tpu.vector_store %arg16[%c0_71, %c0_72], %165 {strides = array<i32>} : memref<1x16xf32, #tpu.memory_space<vmem>>, vector<1x16xf32>,
    return
  }
}

module attributes {stable_mosaic.version = 11 : i64} {
  func.func @_topk_graph_kernel(%arg0: memref<16x16xf32, #tpu.memory_space<vmem>>, %arg1: memref<16x32xf32, #tpu.memory_space<vmem>>, %arg2: memref<12x1xi32, #tpu.memory_space<vmem>>, %arg3: memref<12x1xf32, #tpu.memory_space<vmem>>, %arg4: memref<12x12xf32, #tpu.memory_space<vmem>>, %arg5: memref<12x32xf32, #tpu.memory_space<vmem>>) attributes {dimension_semantics = [], scalar_prefetch = 0 : i64, scratch_operands = 0 : i64, tpu.core_type = #tpu.core_type<tc>} {
    %c0 = arith.constant 0 : index
    %c0_0 = arith.constant 0 : index
    %0 = vector.load %arg0[%c0, %c0_0] : memref<16x16xf32, #tpu.memory_space<vmem>>, vector<16x16xf32>
    %cst = arith.constant 0.000000e+00 : f32
    %1 = vector.broadcast %cst : f32 to vector<16x16xf32>
    %2 = arith.cmpf one, %0, %1 : vector<16x16xf32>
    %3 = arith.extui %2 : vector<16x16xi1> to vector<16x16xi32>
    %4 = arith.sitofp %3 : vector<16x16xi32> to vector<16x16xf32>
    %5 = arith.truncf %4 : vector<16x16xf32> to vector<16x16xbf16>
    %cst_1 = arith.constant dense<0.000000e+00> : vector<16x16xf32>
    %6 = tpu.matmul %5, %5, %cst_1 {dimension_numbers = #tpu.dot_dimension_numbers<[1], [0], [0], [1], [0, 0, 1, 1], [], []>} : vector<16x16xbf16>, vector<16x16xbf16>, vector<16x16xf32> -> vector<16x16xf32>
    %cst_2 = arith.constant 5.000000e-01 : f32
    %7 = vector.broadcast %cst_2 : f32 to vector<16x16xf32>
    %8 = arith.cmpf ogt, %6, %7 : vector<16x16xf32>
    %9 = arith.extui %8 : vector<16x16xi1> to vector<16x16xi32>
    %10 = arith.sitofp %9 : vector<16x16xi32> to vector<16x16xf32>
    %c0_3 = arith.constant 0 : index
    %c0_4 = arith.constant 0 : index
    %11 = vector.load %arg2[%c0_3, %c0_4] : memref<12x1xi32, #tpu.memory_space<vmem>>, vector<12x1xi32>
    %12 = tpu.iota {dimensions = array<i32: 1>} : vector<12x16xi32>
    %13 = vector.broadcast %11 : vector<12x1xi32> to vector<12x16xi32>
    %14 = arith.cmpi eq, %12, %13 : vector<12x16xi32>
    %15 = arith.extui %14 : vector<12x16xi1> to vector<12x16xi32>
    %16 = arith.sitofp %15 : vector<12x16xi32> to vector<12x16xf32>
    %cst_5 = arith.constant dense<0.000000e+00> : vector<12x16xf32>
    %17 = tpu.matmul %16, %10, %cst_5 {dimension_numbers = #tpu.dot_dimension_numbers<[1], [0], [0], [1], [0, 0, 1, 1], [], []>} : vector<12x16xf32>, vector<16x16xf32>, vector<12x16xf32> -> vector<12x16xf32>
    %cst_6 = arith.constant dense<0.000000e+00> : vector<12x12xf32>
    %18 = tpu.matmul %17, %16, %cst_6 {dimension_numbers = #tpu.dot_dimension_numbers<[1], [1], [0], [0], [0, 0, 1, 0], [], []>} : vector<12x16xf32>, vector<12x16xf32>, vector<12x12xf32> -> vector<12x12xf32>
    %cst_7 = arith.constant 1.000000e+00 : f32
    %19 = vector.broadcast %cst_7 : f32 to vector<1x12xf32>
    %cst_8 = arith.constant dense<0.000000e+00> : vector<1x12xf32>
    %20 = tpu.matmul %19, %18, %cst_8 {dimension_numbers = #tpu.dot_dimension_numbers<[1], [1], [0], [0], [0, 0, 1, 0], [], []>} : vector<1x12xf32>, vector<12x12xf32>, vector<1x12xf32> -> vector<1x12xf32>
    %21 = vector.broadcast %20 : vector<1x12xf32> to vector<12x12xf32>
    %22 = arith.divf %18, %21 : vector<12x12xf32>
    %c0_9 = arith.constant 0 : index
    %c0_10 = arith.constant 0 : index
    %23 = vector.load %arg4[%c0_9, %c0_10] : memref<12x12xf32, #tpu.memory_space<vmem>>, vector<12x12xf32>
    tpu.vector_store %arg4[%c0_9, %c0_10], %22 {strides = array<i32>} : memref<12x12xf32, #tpu.memory_space<vmem>>, vector<12x12xf32>,
    %c0_11 = arith.constant 0 : index
    %c0_12 = arith.constant 0 : index
    %24 = vector.load %arg3[%c0_11, %c0_12] : memref<12x1xf32, #tpu.memory_space<vmem>>, vector<12x1xf32>
    %25 = vector.broadcast %24 : vector<12x1xf32> to vector<12x16xf32>
    %26 = arith.mulf %16, %25 : vector<12x16xf32>
    %c0_13 = arith.constant 0 : index
    %c0_14 = arith.constant 0 : index
    %27 = vector.load %arg1[%c0_13, %c0_14] : memref<16x32xf32, #tpu.memory_space<vmem>>, vector<16x32xf32>
    %cst_15 = arith.constant dense<0.000000e+00> : vector<12x32xf32>
    %28 = tpu.matmul %26, %27, %cst_15 {dimension_numbers = #tpu.dot_dimension_numbers<[1], [0], [0], [1], [0, 0, 1, 1], [], []>} : vector<12x16xf32>, vector<16x32xf32>, vector<12x32xf32> -> vector<12x32xf32>
    %c0_16 = arith.constant 0 : index
    %c0_17 = arith.constant 0 : index
    %29 = vector.load %arg5[%c0_16, %c0_17] : memref<12x32xf32, #tpu.memory_space<vmem>>, vector<12x32xf32>
    tpu.vector_store %arg5[%c0_16, %c0_17], %28 {strides = array<i32>} : memref<12x32xf32, #tpu.memory_space<vmem>>, vector<12x32xf32>,
    return
  }
}

module attributes {stable_mosaic.version = 11 : i64} {
  func.func @_down_level_kernel(%arg0: memref<12x12xf32, #tpu.memory_space<vmem>>, %arg1: memref<12x32xf32, #tpu.memory_space<vmem>>, %arg2: memref<32x32xf32, #tpu.memory_space<vmem>>, %arg3: memref<1x32xf32, #tpu.memory_space<vmem>>, %arg4: memref<32x128xf32, #tpu.memory_space<vmem>>, %arg5: memref<1x128xf32, #tpu.memory_space<vmem>>, %arg6: memref<32x128xf32, #tpu.memory_space<vmem>>, %arg7: memref<1x128xf32, #tpu.memory_space<vmem>>, %arg8: memref<32x128xf32, #tpu.memory_space<vmem>>, %arg9: memref<1x128xf32, #tpu.memory_space<vmem>>, %arg10: memref<128x1xf32, #tpu.memory_space<vmem>>, %arg11: memref<1x1xf32, #tpu.memory_space<vmem>>, %arg12: memref<2x2xf32, #tpu.memory_space<smem>>, %arg13: memref<2xf32, #tpu.memory_space<smem>>, %arg14: memref<12x32xf32, #tpu.memory_space<vmem>>, %arg15: memref<12x12xf32, #tpu.memory_space<vmem>>, %arg16: memref<1x12xf32, #tpu.memory_space<vmem>>) attributes {dimension_semantics = [], scalar_prefetch = 0 : i64, scratch_operands = 0 : i64, tpu.core_type = #tpu.core_type<tc>} {
    %c0 = arith.constant 0 : index
    %c0_0 = arith.constant 0 : index
    %0 = vector.load %arg0[%c0, %c0_0] : memref<12x12xf32, #tpu.memory_space<vmem>>, vector<12x12xf32>
    %1 = tpu.iota {dimensions = array<i32: 0>} : vector<12x12xi32>
    %2 = tpu.iota {dimensions = array<i32: 1>} : vector<12x12xi32>
    %3 = arith.cmpi eq, %1, %2 : vector<12x12xi32>
    %4 = arith.extui %3 : vector<12x12xi1> to vector<12x12xi32>
    %5 = arith.sitofp %4 : vector<12x12xi32> to vector<12x12xf32>
    %cst = arith.constant 0.000000e+00 : f32
    %6 = vector.broadcast %cst : f32 to vector<12x12xf32>
    %7 = arith.cmpf one, %0, %6 : vector<12x12xf32>
    %8 = arith.extui %7 : vector<12x12xi1> to vector<12x12xi32>
    %9 = arith.sitofp %8 : vector<12x12xi32> to vector<12x12xf32>
    %10 = arith.maximumf %9, %5 : vector<12x12xf32>
    %cst_1 = arith.constant dense<0.000000e+00> : vector<12xf32>
    %11 = vector.multi_reduction <add>, %10, %cst_1 [1] : vector<12x12xf32> to vector<12xf32>
    %12 = vector.shape_cast %11 : vector<12xf32> to vector<12x1xf32>
    %cst_2 = arith.constant 1.000000e+00 : f32
    %13 = vector.broadcast %cst_2 : f32 to vector<1x12xf32>
    %cst_3 = arith.constant dense<0.000000e+00> : vector<1x12xf32>
    %14 = tpu.matmul %13, %10, %cst_3 {dimension_numbers = #tpu.dot_dimension_numbers<[1], [1], [0], [0], [0, 0, 1, 0], [], []>} : vector<1x12xf32>, vector<12x12xf32>, vector<1x12xf32> -> vector<1x12xf32>
    %15 = math.rsqrt %12 : vector<12x1xf32>
    %16 = vector.broadcast %15 : vector<12x1xf32> to vector<12x12xf32>
    %17 = arith.mulf %10, %16 : vector<12x12xf32>
    %18 = math.rsqrt %14 : vector<1x12xf32>
    %19 = vector.broadcast %18 : vector<1x12xf32> to vector<12x12xf32>
    %20 = arith.mulf %17, %19 : vector<12x12xf32>
    %c0_4 = arith.constant 0 : index
    %c0_5 = arith.constant 0 : index
    %21 = vector.load %arg15[%c0_4, %c0_5] : memref<12x12xf32, #tpu.memory_space<vmem>>, vector<12x12xf32>
    tpu.vector_store %arg15[%c0_4, %c0_5], %20 {strides = array<i32>} : memref<12x12xf32, #tpu.memory_space<vmem>>, vector<12x12xf32>,
    %c0_6 = arith.constant 0 : index
    %c0_7 = arith.constant 0 : index
    %22 = vector.load %arg1[%c0_6, %c0_7] : memref<12x32xf32, #tpu.memory_space<vmem>>, vector<12x32xf32>
    %c0_8 = arith.constant 0 : index
    %c0_9 = arith.constant 0 : index
    %23 = vector.load %arg2[%c0_8, %c0_9] : memref<32x32xf32, #tpu.memory_space<vmem>>, vector<32x32xf32>
    %cst_10 = arith.constant dense<0.000000e+00> : vector<12x32xf32>
    %24 = tpu.matmul %22, %23, %cst_10 {dimension_numbers = #tpu.dot_dimension_numbers<[1], [0], [0], [1], [0, 0, 1, 1], [], []>} : vector<12x32xf32>, vector<32x32xf32>, vector<12x32xf32> -> vector<12x32xf32>
    %cst_11 = arith.constant dense<0.000000e+00> : vector<12x32xf32>
    %25 = tpu.matmul %20, %24, %cst_11 {dimension_numbers = #tpu.dot_dimension_numbers<[1], [0], [0], [1], [0, 0, 1, 1], [], []>} : vector<12x12xf32>, vector<12x32xf32>, vector<12x32xf32> -> vector<12x32xf32>
    %c0_12 = arith.constant 0 : index
    %c0_13 = arith.constant 0 : index
    %26 = vector.load %arg3[%c0_12, %c0_13] : memref<1x32xf32, #tpu.memory_space<vmem>>, vector<1x32xf32>
    %27 = vector.broadcast %26 : vector<1x32xf32> to vector<12x32xf32>
    %28 = arith.addf %25, %27 : vector<12x32xf32>
    %cst_14 = arith.constant 0.000000e+00 : f32
    %29 = vector.broadcast %cst_14 : f32 to vector<12x32xf32>
    %30 = arith.maximumf %28, %29 : vector<12x32xf32>
    %c0_15 = arith.constant 0 : index
    %c0_16 = arith.constant 0 : index
    %31 = vector.load %arg14[%c0_15, %c0_16] : memref<12x32xf32, #tpu.memory_space<vmem>>, vector<12x32xf32>
    tpu.vector_store %arg14[%c0_15, %c0_16], %30 {strides = array<i32>} : memref<12x32xf32, #tpu.memory_space<vmem>>, vector<12x32xf32>,
    %c0_17 = arith.constant 0 : index
    %c0_18 = arith.constant 0 : index
    %32 = vector.load %arg4[%c0_17, %c0_18] : memref<32x128xf32, #tpu.memory_space<vmem>>, vector<32x128xf32>
    %cst_19 = arith.constant dense<0.000000e+00> : vector<12x128xf32>
    %33 = tpu.matmul %30, %32, %cst_19 {dimension_numbers = #tpu.dot_dimension_numbers<[1], [0], [0], [1], [0, 0, 1, 1], [], []>} : vector<12x32xf32>, vector<32x128xf32>, vector<12x128xf32> -> vector<12x128xf32>
    %c0_20 = arith.constant 0 : index
    %c0_21 = arith.constant 0 : index
    %34 = vector.load %arg5[%c0_20, %c0_21] : memref<1x128xf32, #tpu.memory_space<vmem>>, vector<1x128xf32>
    %35 = vector.broadcast %34 : vector<1x128xf32> to vector<12x128xf32>
    %36 = arith.addf %33, %35 : vector<12x128xf32>
    %c0_22 = arith.constant 0 : index
    %c0_23 = arith.constant 0 : index
    %37 = vector.load %arg6[%c0_22, %c0_23] : memref<32x128xf32, #tpu.memory_space<vmem>>, vector<32x128xf32>
    %cst_24 = arith.constant dense<0.000000e+00> : vector<12x128xf32>
    %38 = tpu.matmul %30, %37, %cst_24 {dimension_numbers = #tpu.dot_dimension_numbers<[1], [0], [0], [1], [0, 0, 1, 1], [], []>} : vector<12x32xf32>, vector<32x128xf32>, vector<12x128xf32> -> vector<12x128xf32>
    %c0_25 = arith.constant 0 : index
    %c0_26 = arith.constant 0 : index
    %39 = vector.load %arg7[%c0_25, %c0_26] : memref<1x128xf32, #tpu.memory_space<vmem>>, vector<1x128xf32>
    %40 = vector.broadcast %39 : vector<1x128xf32> to vector<12x128xf32>
    %41 = arith.addf %38, %40 : vector<12x128xf32>
    %c0_27 = arith.constant 0 : index
    %c0_28 = arith.constant 0 : index
    %42 = vector.load %arg8[%c0_27, %c0_28] : memref<32x128xf32, #tpu.memory_space<vmem>>, vector<32x128xf32>
    %cst_29 = arith.constant dense<0.000000e+00> : vector<12x128xf32>
    %43 = tpu.matmul %30, %42, %cst_29 {dimension_numbers = #tpu.dot_dimension_numbers<[1], [0], [0], [1], [0, 0, 1, 1], [], []>} : vector<12x32xf32>, vector<32x128xf32>, vector<12x128xf32> -> vector<12x128xf32>
    %c0_30 = arith.constant 0 : index
    %c0_31 = arith.constant 0 : index
    %44 = vector.load %arg9[%c0_30, %c0_31] : memref<1x128xf32, #tpu.memory_space<vmem>>, vector<1x128xf32>
    %45 = vector.broadcast %44 : vector<1x128xf32> to vector<12x128xf32>
    %46 = arith.addf %43, %45 : vector<12x128xf32>
    %c0_32 = arith.constant 0 : index
    %c0_33 = arith.constant 0 : index
    %47 = vector.load %arg10[%c0_32, %c0_33] : memref<128x1xf32, #tpu.memory_space<vmem>>, vector<128x1xf32>
    %48 = vector.extract_strided_slice %36 {offsets = [0, 0], sizes = [12, 64], strides = [1, 1]} : vector<12x128xf32> to vector<12x64xf32>
    %49 = vector.extract_strided_slice %41 {offsets = [0, 0], sizes = [12, 64], strides = [1, 1]} : vector<12x128xf32> to vector<12x64xf32>
    %cst_34 = arith.constant dense<0.000000e+00> : vector<12x12xf32>
    %50 = tpu.matmul %48, %49, %cst_34 {dimension_numbers = #tpu.dot_dimension_numbers<[1], [1], [0], [0], [0, 0, 1, 0], [], []>} : vector<12x64xf32>, vector<12x64xf32>, vector<12x12xf32> -> vector<12x12xf32>
    %cst_35 = arith.constant 1.250000e-01 : f32
    %51 = vector.broadcast %cst_35 : f32 to vector<12x12xf32>
    %52 = arith.mulf %50, %51 : vector<12x12xf32>
    %cst_36 = arith.constant dense<0xFF800000> : vector<12xf32>
    %53 = vector.multi_reduction <maximumf>, %52, %cst_36 [1] : vector<12x12xf32> to vector<12xf32>
    %cst_37 = arith.constant 0xFF800000 : f32
    %54 = vector.broadcast %cst_37 : f32 to vector<12xf32>
    %55 = arith.maximumf %54, %53 : vector<12xf32>
    %56 = vector.shape_cast %55 : vector<12xf32> to vector<12x1xf32>
    %57 = vector.broadcast %56 : vector<12x1xf32> to vector<12x12xf32>
    %58 = arith.subf %52, %57 : vector<12x12xf32>
    %59 = math.exp %58 : vector<12x12xf32>
    %cst_38 = arith.constant dense<0.000000e+00> : vector<12xf32>
    %60 = vector.multi_reduction <add>, %59, %cst_38 [1] : vector<12x12xf32> to vector<12xf32>
    %61 = vector.shape_cast %60 : vector<12xf32> to vector<12x1xf32>
    %62 = vector.broadcast %61 : vector<12x1xf32> to vector<12x12xf32>
    %63 = arith.divf %59, %62 : vector<12x12xf32>
    %64 = vector.extract_strided_slice %46 {offsets = [0, 0], sizes = [12, 64], strides = [1, 1]} : vector<12x128xf32> to vector<12x64xf32>
    %65 = vector.extract_strided_slice %47 {offsets = [0, 0], sizes = [64, 1], strides = [1, 1]} : vector<128x1xf32> to vector<64x1xf32>
    %cst_39 = arith.constant dense<0.000000e+00> : vector<12x1xf32>
    %66 = tpu.matmul %64, %65, %cst_39 {dimension_numbers = #tpu.dot_dimension_numbers<[1], [0], [0], [1], [0, 0, 1, 1], [], []>} : vector<12x64xf32>, vector<64x1xf32>, vector<12x1xf32> -> vector<12x1xf32>
    %cst_40 = arith.constant dense<0.000000e+00> : vector<12x1xf32>
    %67 = tpu.matmul %63, %66, %cst_40 {dimension_numbers = #tpu.dot_dimension_numbers<[1], [0], [0], [1], [0, 0, 1, 1], [], []>} : vector<12x12xf32>, vector<12x1xf32>, vector<12x1xf32> -> vector<12x1xf32>
    %68 = vector.extract_strided_slice %36 {offsets = [0, 64], sizes = [12, 64], strides = [1, 1]} : vector<12x128xf32> to vector<12x64xf32>
    %69 = vector.extract_strided_slice %41 {offsets = [0, 64], sizes = [12, 64], strides = [1, 1]} : vector<12x128xf32> to vector<12x64xf32>
    %cst_41 = arith.constant dense<0.000000e+00> : vector<12x12xf32>
    %70 = tpu.matmul %68, %69, %cst_41 {dimension_numbers = #tpu.dot_dimension_numbers<[1], [1], [0], [0], [0, 0, 1, 0], [], []>} : vector<12x64xf32>, vector<12x64xf32>, vector<12x12xf32> -> vector<12x12xf32>
    %cst_42 = arith.constant 1.250000e-01 : f32
    %71 = vector.broadcast %cst_42 : f32 to vector<12x12xf32>
    %72 = arith.mulf %70, %71 : vector<12x12xf32>
    %cst_43 = arith.constant dense<0xFF800000> : vector<12xf32>
    %73 = vector.multi_reduction <maximumf>, %72, %cst_43 [1] : vector<12x12xf32> to vector<12xf32>
    %cst_44 = arith.constant 0xFF800000 : f32
    %74 = vector.broadcast %cst_44 : f32 to vector<12xf32>
    %75 = arith.maximumf %74, %73 : vector<12xf32>
    %76 = vector.shape_cast %75 : vector<12xf32> to vector<12x1xf32>
    %77 = vector.broadcast %76 : vector<12x1xf32> to vector<12x12xf32>
    %78 = arith.subf %72, %77 : vector<12x12xf32>
    %79 = math.exp %78 : vector<12x12xf32>
    %cst_45 = arith.constant dense<0.000000e+00> : vector<12xf32>
    %80 = vector.multi_reduction <add>, %79, %cst_45 [1] : vector<12x12xf32> to vector<12xf32>
    %81 = vector.shape_cast %80 : vector<12xf32> to vector<12x1xf32>
    %82 = vector.broadcast %81 : vector<12x1xf32> to vector<12x12xf32>
    %83 = arith.divf %79, %82 : vector<12x12xf32>
    %84 = vector.extract_strided_slice %46 {offsets = [0, 64], sizes = [12, 64], strides = [1, 1]} : vector<12x128xf32> to vector<12x64xf32>
    %85 = vector.extract_strided_slice %47 {offsets = [64, 0], sizes = [64, 1], strides = [1, 1]} : vector<128x1xf32> to vector<64x1xf32>
    %cst_46 = arith.constant dense<0.000000e+00> : vector<12x1xf32>
    %86 = tpu.matmul %84, %85, %cst_46 {dimension_numbers = #tpu.dot_dimension_numbers<[1], [0], [0], [1], [0, 0, 1, 1], [], []>} : vector<12x64xf32>, vector<64x1xf32>, vector<12x1xf32> -> vector<12x1xf32>
    %cst_47 = arith.constant dense<0.000000e+00> : vector<12x1xf32>
    %87 = tpu.matmul %83, %86, %cst_47 {dimension_numbers = #tpu.dot_dimension_numbers<[1], [0], [0], [1], [0, 0, 1, 1], [], []>} : vector<12x12xf32>, vector<12x1xf32>, vector<12x1xf32> -> vector<12x1xf32>
    %88 = arith.addf %67, %87 : vector<12x1xf32>
    %c0_48 = arith.constant 0 : index
    %c0_49 = arith.constant 0 : index
    %89 = vector.load %arg11[%c0_48, %c0_49] : memref<1x1xf32, #tpu.memory_space<vmem>>, vector<1x1xf32>
    %90 = vector.broadcast %89 : vector<1x1xf32> to vector<12x1xf32>
    %91 = arith.addf %88, %90 : vector<12x1xf32>
    %cst_50 = arith.constant dense<0.000000e+00> : vector<12x12xf32>
    %92 = tpu.matmul %5, %9, %cst_50 {dimension_numbers = #tpu.dot_dimension_numbers<[1], [1], [0], [0], [0, 0, 1, 0], [], []>} : vector<12x12xf32>, vector<12x12xf32>, vector<12x12xf32> -> vector<12x12xf32>
    %93 = arith.maximumf %9, %92 : vector<12x12xf32>
    %cst_51 = arith.constant dense<0.000000e+00> : vector<12xf32>
    %94 = vector.multi_reduction <add>, %93, %cst_51 [1] : vector<12x12xf32> to vector<12xf32>
    %95 = vector.shape_cast %94 : vector<12xf32> to vector<12x1xf32>
    %cst_52 = arith.constant 1.100000e+01 : f32
    %96 = vector.broadcast %cst_52 : f32 to vector<12x1xf32>
    %97 = arith.divf %95, %96 : vector<12x1xf32>
    %98 = arith.negf %91 : vector<12x1xf32>
    %99 = math.exp %98 : vector<12x1xf32>
    %cst_53 = arith.constant 1.000000e+00 : f32
    %100 = vector.broadcast %cst_53 : f32 to vector<12x1xf32>
    %101 = arith.addf %100, %99 : vector<12x1xf32>
    %102 = arith.divf %100, %101 : vector<12x1xf32>
    %103 = arith.negf %97 : vector<12x1xf32>
    %104 = math.exp %103 : vector<12x1xf32>
    %cst_54 = arith.constant 1.000000e+00 : f32
    %105 = vector.broadcast %cst_54 : f32 to vector<12x1xf32>
    %106 = arith.addf %105, %104 : vector<12x1xf32>
    %107 = arith.divf %105, %106 : vector<12x1xf32>
    %108 = math.absf %102 : vector<12x1xf32>
    %cst_55 = arith.constant dense<0xFF800000> : vector<1xf32>
    %109 = vector.multi_reduction <maximumf>, %108, %cst_55 [0] : vector<12x1xf32> to vector<1xf32>
    %110 = vector.shape_cast %109 : vector<1xf32> to vector<1x1xf32>
    %111 = vector.broadcast %110 : vector<1x1xf32> to vector<12x1xf32>
    %112 = arith.divf %102, %111 : vector<12x1xf32>
    %113 = math.absf %107 : vector<12x1xf32>
    %cst_56 = arith.constant dense<0xFF800000> : vector<1xf32>
    %114 = vector.multi_reduction <maximumf>, %113, %cst_56 [0] : vector<12x1xf32> to vector<1xf32>
    %115 = vector.shape_cast %114 : vector<1xf32> to vector<1x1xf32>
    %116 = vector.broadcast %115 : vector<1x1xf32> to vector<12x1xf32>
    %117 = arith.divf %107, %116 : vector<12x1xf32>
    %c0_57 = arith.constant 0 : index
    %c0_58 = arith.constant 0 : index
    %118 = memref.load %arg12[%c0_57, %c0_58] : memref<2x2xf32, #tpu.memory_space<smem>>
    %119 = vector.broadcast %118 : f32 to vector<12x1xf32>
    %120 = arith.mulf %112, %119 : vector<12x1xf32>
    %c1 = arith.constant 1 : index
    %c0_59 = arith.constant 0 : index
    %121 = memref.load %arg12[%c1, %c0_59] : memref<2x2xf32, #tpu.memory_space<smem>>
    %122 = vector.broadcast %121 : f32 to vector<12x1xf32>
    %123 = arith.mulf %117, %122 : vector<12x1xf32>
    %124 = arith.addf %120, %123 : vector<12x1xf32>
    %c0_60 = arith.constant 0 : index
    %125 = memref.load %arg13[%c0_60] : memref<2xf32, #tpu.memory_space<smem>>
    %126 = vector.broadcast %125 : f32 to vector<12x1xf32>
    %127 = arith.addf %124, %126 : vector<12x1xf32>
    %128 = arith.negf %127 : vector<12x1xf32>
    %129 = math.exp %128 : vector<12x1xf32>
    %cst_61 = arith.constant 1.000000e+00 : f32
    %130 = vector.broadcast %cst_61 : f32 to vector<12x1xf32>
    %131 = arith.addf %130, %129 : vector<12x1xf32>
    %132 = arith.divf %130, %131 : vector<12x1xf32>
    %c0_62 = arith.constant 0 : index
    %c1_63 = arith.constant 1 : index
    %133 = memref.load %arg12[%c0_62, %c1_63] : memref<2x2xf32, #tpu.memory_space<smem>>
    %134 = vector.broadcast %133 : f32 to vector<12x1xf32>
    %135 = arith.mulf %112, %134 : vector<12x1xf32>
    %c1_64 = arith.constant 1 : index
    %c1_65 = arith.constant 1 : index
    %136 = memref.load %arg12[%c1_64, %c1_65] : memref<2x2xf32, #tpu.memory_space<smem>>
    %137 = vector.broadcast %136 : f32 to vector<12x1xf32>
    %138 = arith.mulf %117, %137 : vector<12x1xf32>
    %139 = arith.addf %135, %138 : vector<12x1xf32>
    %c1_66 = arith.constant 1 : index
    %140 = memref.load %arg13[%c1_66] : memref<2xf32, #tpu.memory_space<smem>>
    %141 = vector.broadcast %140 : f32 to vector<12x1xf32>
    %142 = arith.addf %139, %141 : vector<12x1xf32>
    %143 = arith.negf %142 : vector<12x1xf32>
    %144 = math.exp %143 : vector<12x1xf32>
    %cst_67 = arith.constant 1.000000e+00 : f32
    %145 = vector.broadcast %cst_67 : f32 to vector<12x1xf32>
    %146 = arith.addf %145, %144 : vector<12x1xf32>
    %147 = arith.divf %145, %146 : vector<12x1xf32>
    %148 = arith.maximumf %132, %147 : vector<12x1xf32>
    %149 = arith.subf %132, %148 : vector<12x1xf32>
    %150 = math.exp %149 : vector<12x1xf32>
    %151 = arith.subf %147, %148 : vector<12x1xf32>
    %152 = math.exp %151 : vector<12x1xf32>
    %153 = arith.addf %150, %152 : vector<12x1xf32>
    %154 = arith.divf %150, %153 : vector<12x1xf32>
    %155 = arith.mulf %112, %154 : vector<12x1xf32>
    %156 = arith.divf %152, %153 : vector<12x1xf32>
    %157 = arith.mulf %117, %156 : vector<12x1xf32>
    %158 = arith.addf %155, %157 : vector<12x1xf32>
    %159 = arith.negf %158 : vector<12x1xf32>
    %160 = math.exp %159 : vector<12x1xf32>
    %cst_68 = arith.constant 1.000000e+00 : f32
    %161 = vector.broadcast %cst_68 : f32 to vector<12x1xf32>
    %162 = arith.addf %161, %160 : vector<12x1xf32>
    %163 = arith.divf %161, %162 : vector<12x1xf32>
    %cst_69 = arith.constant 1.000000e+00 : f32
    %164 = vector.broadcast %cst_69 : f32 to vector<1x1xf32>
    %cst_70 = arith.constant dense<0.000000e+00> : vector<1x12xf32>
    %165 = tpu.matmul %164, %163, %cst_70 {dimension_numbers = #tpu.dot_dimension_numbers<[1], [1], [0], [0], [0, 0, 1, 0], [], []>} : vector<1x1xf32>, vector<12x1xf32>, vector<1x12xf32> -> vector<1x12xf32>
    %c0_71 = arith.constant 0 : index
    %c0_72 = arith.constant 0 : index
    %166 = vector.load %arg16[%c0_71, %c0_72] : memref<1x12xf32, #tpu.memory_space<vmem>>, vector<1x12xf32>
    tpu.vector_store %arg16[%c0_71, %c0_72], %165 {strides = array<i32>} : memref<1x12xf32, #tpu.memory_space<vmem>>, vector<1x12xf32>,
    return
  }
}

module attributes {stable_mosaic.version = 11 : i64} {
  func.func @_topk_graph_kernel(%arg0: memref<12x12xf32, #tpu.memory_space<vmem>>, %arg1: memref<12x32xf32, #tpu.memory_space<vmem>>, %arg2: memref<7x1xi32, #tpu.memory_space<vmem>>, %arg3: memref<7x1xf32, #tpu.memory_space<vmem>>, %arg4: memref<7x7xf32, #tpu.memory_space<vmem>>, %arg5: memref<7x32xf32, #tpu.memory_space<vmem>>) attributes {dimension_semantics = [], scalar_prefetch = 0 : i64, scratch_operands = 0 : i64, tpu.core_type = #tpu.core_type<tc>} {
    %c0 = arith.constant 0 : index
    %c0_0 = arith.constant 0 : index
    %0 = vector.load %arg0[%c0, %c0_0] : memref<12x12xf32, #tpu.memory_space<vmem>>, vector<12x12xf32>
    %cst = arith.constant 0.000000e+00 : f32
    %1 = vector.broadcast %cst : f32 to vector<12x12xf32>
    %2 = arith.cmpf one, %0, %1 : vector<12x12xf32>
    %3 = arith.extui %2 : vector<12x12xi1> to vector<12x12xi32>
    %4 = arith.sitofp %3 : vector<12x12xi32> to vector<12x12xf32>
    %5 = arith.truncf %4 : vector<12x12xf32> to vector<12x12xbf16>
    %cst_1 = arith.constant dense<0.000000e+00> : vector<12x12xf32>
    %6 = tpu.matmul %5, %5, %cst_1 {dimension_numbers = #tpu.dot_dimension_numbers<[1], [0], [0], [1], [0, 0, 1, 1], [], []>} : vector<12x12xbf16>, vector<12x12xbf16>, vector<12x12xf32> -> vector<12x12xf32>
    %cst_2 = arith.constant 5.000000e-01 : f32
    %7 = vector.broadcast %cst_2 : f32 to vector<12x12xf32>
    %8 = arith.cmpf ogt, %6, %7 : vector<12x12xf32>
    %9 = arith.extui %8 : vector<12x12xi1> to vector<12x12xi32>
    %10 = arith.sitofp %9 : vector<12x12xi32> to vector<12x12xf32>
    %c0_3 = arith.constant 0 : index
    %c0_4 = arith.constant 0 : index
    %11 = vector.load %arg2[%c0_3, %c0_4] : memref<7x1xi32, #tpu.memory_space<vmem>>, vector<7x1xi32>
    %12 = tpu.iota {dimensions = array<i32: 1>} : vector<7x12xi32>
    %13 = vector.broadcast %11 : vector<7x1xi32> to vector<7x12xi32>
    %14 = arith.cmpi eq, %12, %13 : vector<7x12xi32>
    %15 = arith.extui %14 : vector<7x12xi1> to vector<7x12xi32>
    %16 = arith.sitofp %15 : vector<7x12xi32> to vector<7x12xf32>
    %cst_5 = arith.constant dense<0.000000e+00> : vector<7x12xf32>
    %17 = tpu.matmul %16, %10, %cst_5 {dimension_numbers = #tpu.dot_dimension_numbers<[1], [0], [0], [1], [0, 0, 1, 1], [], []>} : vector<7x12xf32>, vector<12x12xf32>, vector<7x12xf32> -> vector<7x12xf32>
    %cst_6 = arith.constant dense<0.000000e+00> : vector<7x7xf32>
    %18 = tpu.matmul %17, %16, %cst_6 {dimension_numbers = #tpu.dot_dimension_numbers<[1], [1], [0], [0], [0, 0, 1, 0], [], []>} : vector<7x12xf32>, vector<7x12xf32>, vector<7x7xf32> -> vector<7x7xf32>
    %cst_7 = arith.constant 1.000000e+00 : f32
    %19 = vector.broadcast %cst_7 : f32 to vector<1x7xf32>
    %cst_8 = arith.constant dense<0.000000e+00> : vector<1x7xf32>
    %20 = tpu.matmul %19, %18, %cst_8 {dimension_numbers = #tpu.dot_dimension_numbers<[1], [1], [0], [0], [0, 0, 1, 0], [], []>} : vector<1x7xf32>, vector<7x7xf32>, vector<1x7xf32> -> vector<1x7xf32>
    %21 = vector.broadcast %20 : vector<1x7xf32> to vector<7x7xf32>
    %22 = arith.divf %18, %21 : vector<7x7xf32>
    %c0_9 = arith.constant 0 : index
    %c0_10 = arith.constant 0 : index
    %23 = vector.load %arg4[%c0_9, %c0_10] : memref<7x7xf32, #tpu.memory_space<vmem>>, vector<7x7xf32>
    tpu.vector_store %arg4[%c0_9, %c0_10], %22 {strides = array<i32>} : memref<7x7xf32, #tpu.memory_space<vmem>>, vector<7x7xf32>,
    %c0_11 = arith.constant 0 : index
    %c0_12 = arith.constant 0 : index
    %24 = vector.load %arg3[%c0_11, %c0_12] : memref<7x1xf32, #tpu.memory_space<vmem>>, vector<7x1xf32>
    %25 = vector.broadcast %24 : vector<7x1xf32> to vector<7x12xf32>
    %26 = arith.mulf %16, %25 : vector<7x12xf32>
    %c0_13 = arith.constant 0 : index
    %c0_14 = arith.constant 0 : index
    %27 = vector.load %arg1[%c0_13, %c0_14] : memref<12x32xf32, #tpu.memory_space<vmem>>, vector<12x32xf32>
    %cst_15 = arith.constant dense<0.000000e+00> : vector<7x32xf32>
    %28 = tpu.matmul %26, %27, %cst_15 {dimension_numbers = #tpu.dot_dimension_numbers<[1], [0], [0], [1], [0, 0, 1, 1], [], []>} : vector<7x12xf32>, vector<12x32xf32>, vector<7x32xf32> -> vector<7x32xf32>
    %c0_16 = arith.constant 0 : index
    %c0_17 = arith.constant 0 : index
    %29 = vector.load %arg5[%c0_16, %c0_17] : memref<7x32xf32, #tpu.memory_space<vmem>>, vector<7x32xf32>
    tpu.vector_store %arg5[%c0_16, %c0_17], %28 {strides = array<i32>} : memref<7x32xf32, #tpu.memory_space<vmem>>, vector<7x32xf32>,
    return
  }
}

module attributes {stable_mosaic.version = 11 : i64} {
  func.func @_gcn_bottom_kernel(%arg0: memref<7x7xf32, #tpu.memory_space<vmem>>, %arg1: memref<7x32xf32, #tpu.memory_space<vmem>>, %arg2: memref<32x32xf32, #tpu.memory_space<vmem>>, %arg3: memref<1x32xf32, #tpu.memory_space<vmem>>, %arg4: memref<7x32xf32, #tpu.memory_space<vmem>>) attributes {dimension_semantics = [], scalar_prefetch = 0 : i64, scratch_operands = 0 : i64, tpu.core_type = #tpu.core_type<tc>} {
    %c0 = arith.constant 0 : index
    %c0_0 = arith.constant 0 : index
    %0 = vector.load %arg0[%c0, %c0_0] : memref<7x7xf32, #tpu.memory_space<vmem>>, vector<7x7xf32>
    %1 = tpu.iota {dimensions = array<i32: 0>} : vector<7x7xi32>
    %2 = tpu.iota {dimensions = array<i32: 1>} : vector<7x7xi32>
    %3 = arith.cmpi eq, %1, %2 : vector<7x7xi32>
    %4 = arith.extui %3 : vector<7x7xi1> to vector<7x7xi32>
    %5 = arith.sitofp %4 : vector<7x7xi32> to vector<7x7xf32>
    %cst = arith.constant 0.000000e+00 : f32
    %6 = vector.broadcast %cst : f32 to vector<7x7xf32>
    %7 = arith.cmpf one, %0, %6 : vector<7x7xf32>
    %8 = arith.extui %7 : vector<7x7xi1> to vector<7x7xi32>
    %9 = arith.sitofp %8 : vector<7x7xi32> to vector<7x7xf32>
    %10 = arith.maximumf %9, %5 : vector<7x7xf32>
    %cst_1 = arith.constant dense<0.000000e+00> : vector<7xf32>
    %11 = vector.multi_reduction <add>, %10, %cst_1 [1] : vector<7x7xf32> to vector<7xf32>
    %12 = vector.shape_cast %11 : vector<7xf32> to vector<7x1xf32>
    %cst_2 = arith.constant 1.000000e+00 : f32
    %13 = vector.broadcast %cst_2 : f32 to vector<1x7xf32>
    %cst_3 = arith.constant dense<0.000000e+00> : vector<1x7xf32>
    %14 = tpu.matmul %13, %10, %cst_3 {dimension_numbers = #tpu.dot_dimension_numbers<[1], [1], [0], [0], [0, 0, 1, 0], [], []>} : vector<1x7xf32>, vector<7x7xf32>, vector<1x7xf32> -> vector<1x7xf32>
    %15 = math.rsqrt %12 : vector<7x1xf32>
    %16 = vector.broadcast %15 : vector<7x1xf32> to vector<7x7xf32>
    %17 = arith.mulf %10, %16 : vector<7x7xf32>
    %18 = math.rsqrt %14 : vector<1x7xf32>
    %19 = vector.broadcast %18 : vector<1x7xf32> to vector<7x7xf32>
    %20 = arith.mulf %17, %19 : vector<7x7xf32>
    %c0_4 = arith.constant 0 : index
    %c0_5 = arith.constant 0 : index
    %21 = vector.load %arg1[%c0_4, %c0_5] : memref<7x32xf32, #tpu.memory_space<vmem>>, vector<7x32xf32>
    %c0_6 = arith.constant 0 : index
    %c0_7 = arith.constant 0 : index
    %22 = vector.load %arg2[%c0_6, %c0_7] : memref<32x32xf32, #tpu.memory_space<vmem>>, vector<32x32xf32>
    %cst_8 = arith.constant dense<0.000000e+00> : vector<7x32xf32>
    %23 = tpu.matmul %21, %22, %cst_8 {dimension_numbers = #tpu.dot_dimension_numbers<[1], [0], [0], [1], [0, 0, 1, 1], [], []>} : vector<7x32xf32>, vector<32x32xf32>, vector<7x32xf32> -> vector<7x32xf32>
    %cst_9 = arith.constant dense<0.000000e+00> : vector<7x32xf32>
    %24 = tpu.matmul %20, %23, %cst_9 {dimension_numbers = #tpu.dot_dimension_numbers<[1], [0], [0], [1], [0, 0, 1, 1], [], []>} : vector<7x7xf32>, vector<7x32xf32>, vector<7x32xf32> -> vector<7x32xf32>
    %c0_10 = arith.constant 0 : index
    %c0_11 = arith.constant 0 : index
    %25 = vector.load %arg3[%c0_10, %c0_11] : memref<1x32xf32, #tpu.memory_space<vmem>>, vector<1x32xf32>
    %26 = vector.broadcast %25 : vector<1x32xf32> to vector<7x32xf32>
    %27 = arith.addf %24, %26 : vector<7x32xf32>
    %cst_12 = arith.constant 0.000000e+00 : f32
    %28 = vector.broadcast %cst_12 : f32 to vector<7x32xf32>
    %29 = arith.maximumf %27, %28 : vector<7x32xf32>
    %c0_13 = arith.constant 0 : index
    %c0_14 = arith.constant 0 : index
    %30 = vector.load %arg4[%c0_13, %c0_14] : memref<7x32xf32, #tpu.memory_space<vmem>>, vector<7x32xf32>
    tpu.vector_store %arg4[%c0_13, %c0_14], %29 {strides = array<i32>} : memref<7x32xf32, #tpu.memory_space<vmem>>, vector<7x32xf32>,
    return
  }
}

module attributes {stable_mosaic.version = 11 : i64} {
  func.func @_gcn_up_kernel(%arg0: memref<16x16xf32, #tpu.memory_space<vmem>>, %arg1: memref<12x32xf32, #tpu.memory_space<vmem>>, %arg2: memref<1x12xi32, #tpu.memory_space<vmem>>, %arg3: memref<32x32xf32, #tpu.memory_space<vmem>>, %arg4: memref<1x32xf32, #tpu.memory_space<vmem>>, %arg5: memref<16x32xf32, #tpu.memory_space<vmem>>, %arg6: memref<16x32xf32, #tpu.memory_space<vmem>>) attributes {dimension_semantics = [], scalar_prefetch = 0 : i64, scratch_operands = 0 : i64, tpu.core_type = #tpu.core_type<tc>} {
    %c0 = arith.constant 0 : index
    %c0_0 = arith.constant 0 : index
    %0 = vector.load %arg2[%c0, %c0_0] : memref<1x12xi32, #tpu.memory_space<vmem>>, vector<1x12xi32>
    %1 = tpu.iota {dimensions = array<i32: 0>} : vector<16x12xi32>
    %2 = vector.broadcast %0 : vector<1x12xi32> to vector<16x12xi32>
    %3 = arith.cmpi eq, %1, %2 : vector<16x12xi32>
    %4 = arith.extui %3 : vector<16x12xi1> to vector<16x12xi32>
    %5 = arith.sitofp %4 : vector<16x12xi32> to vector<16x12xf32>
    %c0_1 = arith.constant 0 : index
    %c0_2 = arith.constant 0 : index
    %6 = vector.load %arg1[%c0_1, %c0_2] : memref<12x32xf32, #tpu.memory_space<vmem>>, vector<12x32xf32>
    %c0_3 = arith.constant 0 : index
    %c0_4 = arith.constant 0 : index
    %7 = vector.load %arg3[%c0_3, %c0_4] : memref<32x32xf32, #tpu.memory_space<vmem>>, vector<32x32xf32>
    %cst = arith.constant dense<0.000000e+00> : vector<12x32xf32>
    %8 = tpu.matmul %6, %7, %cst {dimension_numbers = #tpu.dot_dimension_numbers<[1], [0], [0], [1], [0, 0, 1, 1], [], []>} : vector<12x32xf32>, vector<32x32xf32>, vector<12x32xf32> -> vector<12x32xf32>
    %cst_5 = arith.constant dense<0.000000e+00> : vector<16x32xf32>
    %9 = tpu.matmul %5, %8, %cst_5 {dimension_numbers = #tpu.dot_dimension_numbers<[1], [0], [0], [1], [0, 0, 1, 1], [], []>} : vector<16x12xf32>, vector<12x32xf32>, vector<16x32xf32> -> vector<16x32xf32>
    %c0_6 = arith.constant 0 : index
    %c0_7 = arith.constant 0 : index
    %10 = vector.load %arg0[%c0_6, %c0_7] : memref<16x16xf32, #tpu.memory_space<vmem>>, vector<16x16xf32>
    %cst_8 = arith.constant dense<0.000000e+00> : vector<16x32xf32>
    %11 = tpu.matmul %10, %9, %cst_8 {dimension_numbers = #tpu.dot_dimension_numbers<[1], [0], [0], [1], [0, 0, 1, 1], [], []>} : vector<16x16xf32>, vector<16x32xf32>, vector<16x32xf32> -> vector<16x32xf32>
    %c0_9 = arith.constant 0 : index
    %c0_10 = arith.constant 0 : index
    %12 = vector.load %arg4[%c0_9, %c0_10] : memref<1x32xf32, #tpu.memory_space<vmem>>, vector<1x32xf32>
    %13 = vector.broadcast %12 : vector<1x32xf32> to vector<16x32xf32>
    %14 = arith.addf %11, %13 : vector<16x32xf32>
    %cst_11 = arith.constant 0.000000e+00 : f32
    %15 = vector.broadcast %cst_11 : f32 to vector<16x32xf32>
    %16 = arith.maximumf %14, %15 : vector<16x32xf32>
    %c0_12 = arith.constant 0 : index
    %c0_13 = arith.constant 0 : index
    %17 = vector.load %arg5[%c0_12, %c0_13] : memref<16x32xf32, #tpu.memory_space<vmem>>, vector<16x32xf32>
    %18 = arith.addf %16, %17 : vector<16x32xf32>
    %c0_14 = arith.constant 0 : index
    %c0_15 = arith.constant 0 : index
    %19 = vector.load %arg6[%c0_14, %c0_15] : memref<16x32xf32, #tpu.memory_space<vmem>>, vector<16x32xf32>
    tpu.vector_store %arg6[%c0_14, %c0_15], %18 {strides = array<i32>} : memref<16x32xf32, #tpu.memory_space<vmem>>, vector<16x32xf32>,
    return
  }
}

module attributes {stable_mosaic.version = 11 : i64} {
  func.func @_gcn_up_kernel(%arg0: memref<12x12xf32, #tpu.memory_space<vmem>>, %arg1: memref<7x32xf32, #tpu.memory_space<vmem>>, %arg2: memref<1x7xi32, #tpu.memory_space<vmem>>, %arg3: memref<32x32xf32, #tpu.memory_space<vmem>>, %arg4: memref<1x32xf32, #tpu.memory_space<vmem>>, %arg5: memref<12x32xf32, #tpu.memory_space<vmem>>, %arg6: memref<12x32xf32, #tpu.memory_space<vmem>>) attributes {dimension_semantics = [], scalar_prefetch = 0 : i64, scratch_operands = 0 : i64, tpu.core_type = #tpu.core_type<tc>} {
    %c0 = arith.constant 0 : index
    %c0_0 = arith.constant 0 : index
    %0 = vector.load %arg2[%c0, %c0_0] : memref<1x7xi32, #tpu.memory_space<vmem>>, vector<1x7xi32>
    %1 = tpu.iota {dimensions = array<i32: 0>} : vector<12x7xi32>
    %2 = vector.broadcast %0 : vector<1x7xi32> to vector<12x7xi32>
    %3 = arith.cmpi eq, %1, %2 : vector<12x7xi32>
    %4 = arith.extui %3 : vector<12x7xi1> to vector<12x7xi32>
    %5 = arith.sitofp %4 : vector<12x7xi32> to vector<12x7xf32>
    %c0_1 = arith.constant 0 : index
    %c0_2 = arith.constant 0 : index
    %6 = vector.load %arg1[%c0_1, %c0_2] : memref<7x32xf32, #tpu.memory_space<vmem>>, vector<7x32xf32>
    %c0_3 = arith.constant 0 : index
    %c0_4 = arith.constant 0 : index
    %7 = vector.load %arg3[%c0_3, %c0_4] : memref<32x32xf32, #tpu.memory_space<vmem>>, vector<32x32xf32>
    %cst = arith.constant dense<0.000000e+00> : vector<7x32xf32>
    %8 = tpu.matmul %6, %7, %cst {dimension_numbers = #tpu.dot_dimension_numbers<[1], [0], [0], [1], [0, 0, 1, 1], [], []>} : vector<7x32xf32>, vector<32x32xf32>, vector<7x32xf32> -> vector<7x32xf32>
    %cst_5 = arith.constant dense<0.000000e+00> : vector<12x32xf32>
    %9 = tpu.matmul %5, %8, %cst_5 {dimension_numbers = #tpu.dot_dimension_numbers<[1], [0], [0], [1], [0, 0, 1, 1], [], []>} : vector<12x7xf32>, vector<7x32xf32>, vector<12x32xf32> -> vector<12x32xf32>
    %c0_6 = arith.constant 0 : index
    %c0_7 = arith.constant 0 : index
    %10 = vector.load %arg0[%c0_6, %c0_7] : memref<12x12xf32, #tpu.memory_space<vmem>>, vector<12x12xf32>
    %cst_8 = arith.constant dense<0.000000e+00> : vector<12x32xf32>
    %11 = tpu.matmul %10, %9, %cst_8 {dimension_numbers = #tpu.dot_dimension_numbers<[1], [0], [0], [1], [0, 0, 1, 1], [], []>} : vector<12x12xf32>, vector<12x32xf32>, vector<12x32xf32> -> vector<12x32xf32>
    %c0_9 = arith.constant 0 : index
    %c0_10 = arith.constant 0 : index
    %12 = vector.load %arg4[%c0_9, %c0_10] : memref<1x32xf32, #tpu.memory_space<vmem>>, vector<1x32xf32>
    %13 = vector.broadcast %12 : vector<1x32xf32> to vector<12x32xf32>
    %14 = arith.addf %11, %13 : vector<12x32xf32>
    %cst_11 = arith.constant 0.000000e+00 : f32
    %15 = vector.broadcast %cst_11 : f32 to vector<12x32xf32>
    %16 = arith.maximumf %14, %15 : vector<12x32xf32>
    %c0_12 = arith.constant 0 : index
    %c0_13 = arith.constant 0 : index
    %17 = vector.load %arg5[%c0_12, %c0_13] : memref<12x32xf32, #tpu.memory_space<vmem>>, vector<12x32xf32>
    %18 = arith.addf %16, %17 : vector<12x32xf32>
    %c0_14 = arith.constant 0 : index
    %c0_15 = arith.constant 0 : index
    %19 = vector.load %arg6[%c0_14, %c0_15] : memref<12x32xf32, #tpu.memory_space<vmem>>, vector<12x32xf32>
    tpu.vector_store %arg6[%c0_14, %c0_15], %18 {strides = array<i32>} : memref<12x32xf32, #tpu.memory_space<vmem>>, vector<12x32xf32>,
    return
  }
}

</mosaic_0001>

<llo_original>
// kernel: edmd_pool_forward.8
$region0: #{edmd_pool_forward.8}
  #allocation0 [shape = 'u32[]', space=smem, size = 0x4, offset = 0x4, fixed_abs, tag = 'smem constant byte address 0x4 - core index']
  #allocation1 [shape = 'u32[144,128]{1,0:T(1,128)}', space=vmem, size = 0x12000, scoped, tag = 'internal scratch']
  %s0 = inlined_call_operand.vmem [shape: f32[16,16], index: 0, kind: input, shape index: {}]
  %s1 = inlined_call_operand.vmem [shape: f32[16,32], index: 1, kind: input, shape index: {}]
  %s2 = inlined_call_operand.vmem [shape: s32[12,1], index: 2, kind: input, shape index: {}]
  %s3 = inlined_call_operand.vmem [shape: f32[12,1], index: 3, kind: input, shape index: {}]
  %s4 = inlined_call_operand.vmem [shape: f32[12,12], index: 4, kind: output, shape index: {0}]
  %s5 = inlined_call_operand.vmem [shape: f32[12,32], index: 5, kind: output, shape index: {1}]
  %6 = xla_tuple %s4, %s5
  %s7 = sld [smem:[#allocation0]]
  $region34: #{edmd_pool_forward.8} parent=0
    _
  %s9 = ssub.s32 1, %s7
  %s10 = scalar_select 0, %s9, %s7
  // Predicated region
  $region2: #{edmd_pool_forward.8} parent=0 // pred_check
    _
  $region3: #{edmd_pool_forward.8} parent=0 // pred_check_branch
    %12 = sbr.rel (0) target = $region5
  $region4: #{edmd_pool_forward.8} parent=0 // pred_region
    _
  $region5: #{edmd_pool_forward.8} parent=0 // pred_fallthru
    _
  // Predicated region
  $region6: #{edmd_pool_forward.8} parent=0 // pred_check
    _
  $region7: #{edmd_pool_forward.8} parent=0 // pred_check_branch
    %14 = sbr.rel (0) target = $region9
  $region8: #{edmd_pool_forward.8} parent=0 // pred_region
    _
  $region9: #{edmd_pool_forward.8} parent=0 // pred_fallthru
    _
  // Predicated region
  $region10: #{edmd_pool_forward.8} parent=0 // pred_check
    _
  $region11: #{edmd_pool_forward.8} parent=0 // pred_check_branch
    %16 = sbr.rel (0) target = $region13
  $region12: #{edmd_pool_forward.8} parent=0 // pred_region
    _
  $region13: #{edmd_pool_forward.8} parent=0 // pred_fallthru
    _
  // Predicated region
  $region14: #{edmd_pool_forward.8} parent=0 // pred_check
    _
  $region15: #{edmd_pool_forward.8} parent=0 // pred_check_branch
    %18 = sbr.rel (0) target = $region17
  $region16: #{edmd_pool_forward.8} parent=0 // pred_region
    _
  $region17: #{edmd_pool_forward.8} parent=0 // pred_fallthru
    _
  %v20 = vld [vmem:[%s0] sm:$0xff]
  %v21 = vld [vmem:[%s0 + $0x8] sm:$0xff]
  %vm22 = vcmp.ne.f32.partialorder %v20, 0.0
  %vm23 = vcmp.ne.f32.partialorder %v21, 0.0
  %v24 = vsel %vm22, 1, 0
  %v25 = vsel %vm23, 1, 0
  %v26 = vcvt.s32.f32 %v24
  %v27 = vcvt.s32.f32 %v25
  %v28 = vpack.c.bf16 %v27, %v26
  %vm29 = vcmask 130048
  %v31 = vsel %vm29, %v28, 0
  %33 = vmatprep.subr.bf16.mxu0 0
  %34 = vmatpush1.bf16.msra.mxu0 %v28
  %35 = vmatprep.subr.bf16.mxu0 0
  %36 = vmatpush1.bf16.msra.mxu0 0
  %37 = vmatprep.subr.bf16.mxu0 0
  %38 = vmatpush1.bf16.msra.mxu0 0
  %39 = vmatprep.subr.bf16.mxu0 0
  %40 = vmatpush1.bf16.msra.mxu0 0
  %41 = vmatprep.subr.bf16.mxu0 0
  %42 = vmatpush1.bf16.msra.mxu0 0
  %43 = vmatprep.subr.bf16.mxu0 0
  %44 = vmatpush1.bf16.msra.mxu0 0
  %45 = vmatprep.subr.bf16.mxu0 0
  %46 = vmatpush1.bf16.msra.mxu0 0
  %47 = vmatprep.subr.bf16.mxu0 0
  %48 = vmatpush1.bf16.msra.mxu0 0
  %49 = vmatprep.subr.bf16.mxu0 0
  %50 = vmatpush1.bf16.msra.mxu0 0
  %51 = vmatprep.subr.bf16.mxu0 0
  %52 = vmatpush1.bf16.msra.mxu0 0
  %53 = vmatprep.subr.bf16.mxu0 0
  %54 = vmatpush1.bf16.msra.mxu0 0
  %55 = vmatprep.subr.bf16.mxu0 0
  %56 = vmatpush1.bf16.msra.mxu0 0
  %57 = vmatprep.subr.bf16.mxu0 0
  %58 = vmatpush1.bf16.msra.mxu0 0
  %59 = vmatprep.subr.bf16.mxu0 0
  %60 = vmatpush1.bf16.msra.mxu0 0
  %61 = vmatprep.subr.bf16.mxu0 0
  %62 = vmatpush1.bf16.msra.mxu0 0
  %63 = vmatprep.subr.bf16.mxu0 0
  %64 = vmatpush1.bf16.msra.mxu0 0
  %65 = vmatprep.mubr.bf16.mxu0 0
  %66 = vmatmul.mubr.bf16.gmra.mrb[0].mxu0 %v31
  %v67 = vpop.f32.mrb[0].mxu0
  %v68 = vadd.f32 0.0, %v67
  %v69 = vpop.f32.mrb[0].mxu0
  %v70 = vpop.f32.mrb[0].mxu0
  %v71 = vadd.f32 0.0, %v70
  %v72 = vpop.f32.mrb[0].mxu0
  %73 = vdwg.mxu0
  %vm74 = vcmp.gt.f32.partialorder %v68, 0.5
  %vm75 = vcmp.gt.f32.partialorder %v71, 0.5
  %v76 = vsel %vm74, 1, 0
  %v77 = vsel %vm75, 1, 0
  %v78 = vcvt.s32.f32 %v76
  %v79 = vcvt.s32.f32 %v77
  %v80 = vld [vmem:[%s2] sm:$0xff]
  %v81 = vld [vmem:[%s2 + $0x8] sm:$0xf]
  %v82 = vlaneseq
  %v83 = vand.u32 %v82, 127
  %84 = vset.pattern.permute.xlu0 0
  %85 = vperm.xlu0 %84, %v80
  %v86 = vpop.permute.xlu0 %85
  %87 = vset.pattern.permute.xlu0 0
  %88 = vperm.xlu0 %87, %v81
  %v89 = vpop.permute.xlu0 %88
  %vm90 = vcmp.eq.s32.totalorder %v83, %v86
  %vm91 = vcmp.eq.s32.totalorder %v83, %v89
  %v92 = vsel %vm90, 1, 0
  %v93 = vsel %vm91, 1, 0
  %v94 = vcvt.s32.f32 %v92
  %v95 = vcvt.s32.f32 %v93
  %v97 = vsel %vm29, %v94, 0
  %v100 = vsel %vm29, %v95, 0
  %102 = vmatprep.subr.mxu0 0.0
  %103 = vmatpush1.msra.mxu0 %v78
  %104 = vmatprep.subr.mxu0 0.0
  %105 = vmatpush1.msra.mxu0 %v79
  %106 = vmatprep.subr.mxu0 0.0
  %107 = vmatpush1.msra.mxu0 0.0
  %108 = vmatprep.subr.mxu0 0.0
  %109 = vmatpush1.msra.mxu0 0.0
  %110 = vmatprep.subr.mxu0 0.0
  %111 = vmatpush1.msra.mxu0 0.0
  %112 = vmatprep.subr.mxu0 0.0
  %113 = vmatpush1.msra.mxu0 0.0
  %114 = vmatprep.subr.mxu0 0.0
  %115 = vmatpush1.msra.mxu0 0.0
  %116 = vmatprep.subr.mxu0 0.0
  %117 = vmatpush1.msra.mxu0 0.0
  %118 = vmatprep.subr.mxu0 0.0
  %119 = vmatpush1.msra.mxu0 0.0
  %120 = vmatprep.subr.mxu0 0.0
  %121 = vmatpush1.msra.mxu0 0.0
  %122 = vmatprep.subr.mxu0 0.0
  %123 = vmatpush1.msra.mxu0 0.0
  %124 = vmatprep.subr.mxu0 0.0
  %125 = vmatpush1.msra.mxu0 0.0
  %126 = vmatprep.subr.mxu0 0.0
  %127 = vmatpush1.msra.mxu0 0.0
  %128 = vmatprep.subr.mxu0 0.0
  %129 = vmatpush1.msra.mxu0 0.0
  %130 = vmatprep.subr.mxu0 0.0
  %131 = vmatpush1.msra.mxu0 0.0
  %132 = vmatprep.subr.mxu0 0.0
  %133 = vmatpush1.msra.mxu0 0.0
  %134 = vmatprep.subr.mxu0 0.0
  %135 = vmatpush1.msra.mxu0 0.0
  %136 = vmatprep.subr.mxu0 0.0
  %137 = vmatpush1.msra.mxu0 0.0
  %138 = vmatprep.subr.mxu0 0.0
  %139 = vmatpush1.msra.mxu0 0.0
  %140 = vmatprep.subr.mxu0 0.0
  %141 = vmatpush1.msra.mxu0 0.0
  %142 = vmatprep.subr.mxu0 0.0
  %143 = vmatpush1.msra.mxu0 0.0
  %144 = vmatprep.subr.mxu0 0.0
  %145 = vmatpush1.msra.mxu0 0.0
  %146 = vmatprep.subr.mxu0 0.0
  %147 = vmatpush1.msra.mxu0 0.0
  %148 = vmatprep.subr.mxu0 0.0
  %149 = vmatpush1.msra.mxu0 0.0
  %150 = vmatprep.subr.mxu0 0.0
  %151 = vmatpush1.msra.mxu0 0.0
  %152 = vmatprep.subr.mxu0 0.0
  %153 = vmatpush1.msra.mxu0 0.0
  %154 = vmatprep.subr.mxu0 0.0
  %155 = vmatpush1.msra.mxu0 0.0
  %156 = vmatprep.subr.mxu0 0.0
  %157 = vmatpush1.msra.mxu0 0.0
  %158 = vmatprep.subr.mxu0 0.0
  %159 = vmatpush1.msra.mxu0 0.0
  %160 = vmatprep.subr.mxu0 0.0
  %161 = vmatpush1.msra.mxu0 0.0
  %162 = vmatprep.subr.mxu0 0.0
  %163 = vmatpush1.msra.mxu0 0.0
  %164 = vmatprep.subr.mxu0 0.0
  %165 = vmatpush1.msra.mxu0 0.0
  %166 = vmatprep.mubr.f32.mxu0 0.0
  %167 = vmatmul.mubr.f32.gmra.mrb[0].mxu0 %v97
  %v168 = vpop.f32.mrb[0].mxu0
  %v169 = vadd.f32 0.0, %v168
  %v170 = vpop.f32.mrb[0].mxu0
  %171 = vmatprep.mubr.f32.mxu0 0.0
  %172 = vmatmul.mubr.f32.gmra.mrb[0].mxu0 %v100
  %v173 = vpop.f32.mrb[0].mxu0
  %v174 = vadd.f32 0.0, %v173
  %v175 = vpop.f32.mrb[0].mxu0
  %176 = vdwg.mxu0
  %v178 = vsel %vm29, %v169, 0
  %v181 = vsel %vm29, %v174, 0
  %183 = vmatprep.subr.mxu0 0.0
  %184 = vmatpush1.xpose.msra.mxu0 %v97
  %185 = vmatprep.subr.mxu0 0.0
  %186 = vmatpush1.xpose.msra.mxu0 %v100
  %187 = vmatprep.subr.mxu0 0.0
  %188 = vmatpush1.xpose.msra.mxu0 0.0
  %189 = vmatprep.subr.mxu0 0.0
  %190 = vmatpush1.xpose.msra.mxu0 0.0
  %191 = vmatprep.subr.mxu0 0.0
  %192 = vmatpush1.xpose.msra.mxu0 0.0
  %193 = vmatprep.subr.mxu0 0.0
  %194 = vmatpush1.xpose.msra.mxu0 0.0
  %195 = vmatprep.subr.mxu0 0.0
  %196 = vmatpush1.xpose.msra.mxu0 0.0
  %197 = vmatprep.subr.mxu0 0.0
  %198 = vmatpush1.xpose.msra.mxu0 0.0
  %199 = vmatprep.subr.mxu0 0.0
  %200 = vmatpush1.xpose.msra.mxu0 0.0
  %201 = vmatprep.subr.mxu0 0.0
  %202 = vmatpush1.xpose.msra.mxu0 0.0
  %203 = vmatprep.subr.mxu0 0.0
  %204 = vmatpush1.xpose.msra.mxu0 0.0
  %205 = vmatprep.subr.mxu0 0.0
  %206 = vmatpush1.xpose.msra.mxu0 0.0
  %207 = vmatprep.subr.mxu0 0.0
  %208 = vmatpush1.xpose.msra.mxu0 0.0
  %209 = vmatprep.subr.mxu0 0.0
  %210 = vmatpush1.xpose.msra.mxu0 0.0
  %211 = vmatprep.subr.mxu0 0.0
  %212 = vmatpush1.xpose.msra.mxu0 0.0
  %213 = vmatprep.subr.mxu0 0.0
  %214 = vmatpush1.xpose.msra.mxu0 0.0
  %215 = vmatprep.subr.mxu0 0.0
  %216 = vmatpush1.xpose.msra.mxu0 0.0
  %217 = vmatprep.subr.mxu0 0.0
  %218 = vmatpush1.xpose.msra.mxu0 0.0
  %219 = vmatprep.subr.mxu0 0.0
  %220 = vmatpush1.xpose.msra.mxu0 0.0
  %221 = vmatprep.subr.mxu0 0.0
  %222 = vmatpush1.xpose.msra.mxu0 0.0
  %223 = vmatprep.subr.mxu0 0.0
  %224 = vmatpush1.xpose.msra.mxu0 0.0
  %225 = vmatprep.subr.mxu0 0.0
  %226 = vmatpush1.xpose.msra.mxu0 0.0
  %227 = vmatprep.subr.mxu0 0.0
  %228 = vmatpush1.xpose.msra.mxu0 0.0
  %229 = vmatprep.subr.mxu0 0.0
  %230 = vmatpush1.xpose.msra.mxu0 0.0
  %231 = vmatprep.subr.mxu0 0.0
  %232 = vmatpush1.xpose.msra.mxu0 0.0
  %233 = vmatprep.subr.mxu0 0.0
  %234 = vmatpush1.xpose.msra.mxu0 0.0
  %235 = vmatprep.subr.mxu0 0.0
  %236 = vmatpush1.xpose.msra.mxu0 0.0
  %237 = vmatprep.subr.mxu0 0.0
  %238 = vmatpush1.xpose.msra.mxu0 0.0
  %239 = vmatprep.subr.mxu0 0.0
  %240 = vmatpush1.xpose.msra.mxu0 0.0
  %241 = vmatprep.subr.mxu0 0.0
  %242 = vmatpush1.xpose.msra.mxu0 0.0
  %243 = vmatprep.subr.mxu0 0.0
  %244 = vmatpush1.xpose.msra.mxu0 0.0
  %245 = vmatprep.subr.mxu0 0.0
  %246 = vmatpush1.xpose.msra.mxu0 0.0
  %247 = vmatprep.mubr.f32.mxu0 0.0
  %248 = vmatmul.mubr.f32.gmra.mrb[0].mxu0 %v178
  %v249 = vpop.f32.mrb[0].mxu0
  %v250 = vadd.f32 0.0, %v249
  %v251 = vpop.f32.mrb[0].mxu0
  %252 = vmatprep.mubr.f32.mxu0 0.0
  %253 = vmatmul.mubr.f32.gmra.mrb[0].mxu0 %v181
  %v254 = vpop.f32.mrb[0].mxu0
  %v255 = vadd.f32 0.0, %v254
  %v256 = vpop.f32.mrb[0].mxu0
  %257 = vdwg.mxu0
  %vm258 = vcmask 97280
  %v260 = vsel %vm258, 1.0, 0
  %v263 = vsel %vm258, %v250, 0
  %v266 = vsel %vm258, %v255, 0
  %268 = vmatprep.subr.mxu0 0.0
  %269 = vmatpush1.xpose.msra.mxu0 %v263
  %270 = vmatprep.subr.mxu0 0.0
  %271 = vmatpush1.xpose.msra.mxu0 %v266
  %272 = vmatprep.subr.mxu0 0.0
  %273 = vmatpush1.xpose.msra.mxu0 0.0
  %274 = vmatprep.subr.mxu0 0.0
  %275 = vmatpush1.xpose.msra.mxu0 0.0
  %276 = vmatprep.subr.mxu0 0.0
  %277 = vmatpush1.xpose.msra.mxu0 0.0
  %278 = vmatprep.subr.mxu0 0.0
  %279 = vmatpush1.xpose.msra.mxu0 0.0
  %280 = vmatprep.subr.mxu0 0.0
  %281 = vmatpush1.xpose.msra.mxu0 0.0
  %282 = vmatprep.subr.mxu0 0.0
  %283 = vmatpush1.xpose.msra.mxu0 0.0
  %284 = vmatprep.subr.mxu0 0.0
  %285 = vmatpush1.xpose.msra.mxu0 0.0
  %286 = vmatprep.subr.mxu0 0.0
  %287 = vmatpush1.xpose.msra.mxu0 0.0
  %288 = vmatprep.subr.mxu0 0.0
  %289 = vmatpush1.xpose.msra.mxu0 0.0
  %290 = vmatprep.subr.mxu0 0.0
  %291 = vmatpush1.xpose.msra.mxu0 0.0
  %292 = vmatprep.subr.mxu0 0.0
  %293 = vmatpush1.xpose.msra.mxu0 0.0
  %294 = vmatprep.subr.mxu0 0.0
  %295 = vmatpush1.xpose.msra.mxu0 0.0
  %296 = vmatprep.subr.mxu0 0.0
  %297 = vmatpush1.xpose.msra.mxu0 0.0
  %298 = vmatprep.subr.mxu0 0.0
  %299 = vmatpush1.xpose.msra.mxu0 0.0
  %300 = vmatprep.subr.mxu0 0.0
  %301 = vmatpush1.xpose.msra.mxu0 0.0
  %302 = vmatprep.subr.mxu0 0.0
  %303 = vmatpush1.xpose.msra.mxu0 0.0
  %304 = vmatprep.subr.mxu0 0.0
  %305 = vmatpush1.xpose.msra.mxu0 0.0
  %306 = vmatprep.subr.mxu0 0.0
  %307 = vmatpush1.xpose.msra.mxu0 0.0
  %308 = vmatprep.subr.mxu0 0.0
  %309 = vmatpush1.xpose.msra.mxu0 0.0
  %310 = vmatprep.subr.mxu0 0.0
  %311 = vmatpush1.xpose.msra.mxu0 0.0
  %312 = vmatprep.subr.mxu0 0.0
  %313 = vmatpush1.xpose.msra.mxu0 0.0
  %314 = vmatprep.subr.mxu0 0.0
  %315 = vmatpush1.xpose.msra.mxu0 0.0
  %316 = vmatprep.subr.mxu0 0.0
  %317 = vmatpush1.xpose.msra.mxu0 0.0
  %318 = vmatprep.subr.mxu0 0.0
  %319 = vmatpush1.xpose.msra.mxu0 0.0
  %320 = vmatprep.subr.mxu0 0.0
  %321 = vmatpush1.xpose.msra.mxu0 0.0
  %322 = vmatprep.subr.mxu0 0.0
  %323 = vmatpush1.xpose.msra.mxu0 0.0
  %324 = vmatprep.subr.mxu0 0.0
  %325 = vmatpush1.xpose.msra.mxu0 0.0
  %326 = vmatprep.subr.mxu0 0.0
  %327 = vmatpush1.xpose.msra.mxu0 0.0
  %328 = vmatprep.subr.mxu0 0.0
  %329 = vmatpush1.xpose.msra.mxu0 0.0
  %330 = vmatprep.subr.mxu0 0.0
  %331 = vmatpush1.xpose.msra.mxu0 0.0
  %332 = vmatprep.mubr.f32.mxu0 0.0
  %333 = vmatmul.mubr.f32.gmra.mrb[0].mxu0 %v260
  %v334 = vpop.f32.mrb[0].mxu0
  %v335 = vadd.f32 0.0, %v334
  %v336 = vpop.f32.mrb[0].mxu0
  %337 = vdwg.mxu0
  %v338 = vlaneseq
  %v339 = vshrl.u32 %v338, 7
  %v340 = vsub.s32 0, %v339
  %v341 = vrot.slane %v335, %v340
  %v342 = vrcp.pop %v341
  %v343 = vmul.f32 %v250, %v342
  %v344 = vmul.f32 %v255, %v342
  %345 = vst.msk [vmem:[%s4] sm:$0xff] %vm258, %v343
  %vm346 = vcmask 93184
  %347 = vst.msk [vmem:[%s4 + $0x8] sm:$0xf] %vm346, %v344
  %v348 = vld [vmem:[%s3] sm:$0xff]
  %v349 = vld [vmem:[%s3 + $0x8] sm:$0xf]
  %351 = vset.pattern.permute.xlu0 0
  %352 = vperm.xlu0 %351, %v348
  %v353 = vpop.permute.xlu0 %352
  %356 = vset.pattern.permute.xlu0 0
  %357 = vperm.xlu0 %356, %v349
  %v358 = vpop.permute.xlu0 %357
  %v360 = vmul.f32 %v94, %v353
  %v361 = vmul.f32 %v95, %v358
  %v362 = vld [vmem:[%s1] sm:$0xff]
  %v363 = vld [vmem:[%s1 + $0x8] sm:$0xff]
  %v365 = vsel %vm29, %v360, 0
  %v368 = vsel %vm29, %v361, 0
  %370 = vmatprep.subr.mxu0 0.0
  %371 = vmatpush1.msra.mxu0 %v362
  %372 = vmatprep.subr.mxu0 0.0
  %373 = vmatpush1.msra.mxu0 %v363
  %374 = vmatprep.subr.mxu0 0.0
  %375 = vmatpush1.msra.mxu0 0.0
  %376 = vmatprep.subr.mxu0 0.0
  %377 = vmatpush1.msra.mxu0 0.0
  %378 = vmatprep.subr.mxu0 0.0
  %379 = vmatpush1.msra.mxu0 0.0
  %380 = vmatprep.subr.mxu0 0.0
  %381 = vmatpush1.msra.mxu0 0.0
  %382 = vmatprep.subr.mxu0 0.0
  %383 = vmatpush1.msra.mxu0 0.0
  %384 = vmatprep.subr.mxu0 0.0
  %385 = vmatpush1.msra.mxu0 0.0
  %386 = vmatprep.subr.mxu0 0.0
  %387 = vmatpush1.msra.mxu0 0.0
  %388 = vmatprep.subr.mxu0 0.0
  %389 = vmatpush1.msra.mxu0 0.0
  %390 = vmatprep.subr.mxu0 0.0
  %391 = vmatpush1.msra.mxu0 0.0
  %392 = vmatprep.subr.mxu0 0.0
  %393 = vmatpush1.msra.mxu0 0.0
  %394 = vmatprep.subr.mxu0 0.0
  %395 = vmatpush1.msra.mxu0 0.0
  %396 = vmatprep.subr.mxu0 0.0
  %397 = vmatpush1.msra.mxu0 0.0
  %398 = vmatprep.subr.mxu0 0.0
  %399 = vmatpush1.msra.mxu0 0.0
  %400 = vmatprep.subr.mxu0 0.0
  %401 = vmatpush1.msra.mxu0 0.0
  %402 = vmatprep.subr.mxu0 0.0
  %403 = vmatpush1.msra.mxu0 0.0
  %404 = vmatprep.subr.mxu0 0.0
  %405 = vmatpush1.msra.mxu0 0.0
  %406 = vmatprep.subr.mxu0 0.0
  %407 = vmatpush1.msra.mxu0 0.0
  %408 = vmatprep.subr.mxu0 0.0
  %409 = vmatpush1.msra.mxu0 0.0
  %410 = vmatprep.subr.mxu0 0.0
  %411 = vmatpush1.msra.mxu0 0.0
  %412 = vmatprep.subr.mxu0 0.0
  %413 = vmatpush1.msra.mxu0 0.0
  %414 = vmatprep.subr.mxu0 0.0
  %415 = vmatpush1.msra.mxu0 0.0
  %416 = vmatprep.subr.mxu0 0.0
  %417 = vmatpush1.msra.mxu0 0.0
  %418 = vmatprep.subr.mxu0 0.0
  %419 = vmatpush1.msra.mxu0 0.0
  %420 = vmatprep.subr.mxu0 0.0
  %421 = vmatpush1.msra.mxu0 0.0
  %422 = vmatprep.subr.mxu0 0.0
  %423 = vmatpush1.msra.mxu0 0.0
  %424 = vmatprep.subr.mxu0 0.0
  %425 = vmatpush1.msra.mxu0 0.0
  %426 = vmatprep.subr.mxu0 0.0
  %427 = vmatpush1.msra.mxu0 0.0
  %428 = vmatprep.subr.mxu0 0.0
  %429 = vmatpush1.msra.mxu0 0.0
  %430 = vmatprep.subr.mxu0 0.0
  %431 = vmatpush1.msra.mxu0 0.0
  %432 = vmatprep.subr.mxu0 0.0
  %433 = vmatpush1.msra.mxu0 0.0
  %434 = vmatprep.mubr.f32.mxu0 0.0
  %435 = vmatmul.mubr.f32.gmra.mrb[0].mxu0 %v365
  %v436 = vpop.f32.mrb[0].mxu0
  %v437 = vadd.f32 0.0, %v436
  %v438 = vpop.f32.mrb[0].mxu0
  %439 = vmatprep.mubr.f32.mxu0 0.0
  %440 = vmatmul.mubr.f32.gmra.mrb[0].mxu0 %v368
  %v441 = vpop.f32.mrb[0].mxu0
  %v442 = vadd.f32 0.0, %v441
  %v443 = vpop.f32.mrb[0].mxu0
  %444 = vdwg.mxu0
  %vm445 = vcmask 261120
  %446 = vst.msk [vmem:[%s5] sm:$0xff] %vm445, %v437
  %vm447 = vcmask 257024
  %448 = vst.msk [vmem:[%s5 + $0x8] sm:$0xf] %vm447, %v442
  // Predicated region
  $region18: #{edmd_pool_forward.8} parent=0 // pred_check
    _
  $region19: #{edmd_pool_forward.8} parent=0 // pred_check_branch
    %450 = sbr.rel (0) target = $region21
  $region20: #{edmd_pool_forward.8} parent=0 // pred_region
    _
  $region21: #{edmd_pool_forward.8} parent=0 // pred_fallthru
    _
  // Predicated region
  $region22: #{edmd_pool_forward.8} parent=0 // pred_check
    _
  $region23: #{edmd_pool_forward.8} parent=0 // pred_check_branch
    %452 = sbr.rel (0) target = $region25
  $region24: #{edmd_pool_forward.8} parent=0 // pred_region
    _
  $region25: #{edmd_pool_forward.8} parent=0 // pred_fallthru
    _
  // Predicated region
  $region26: #{edmd_pool_forward.8} parent=0 // pred_check
    _
  $region27: #{edmd_pool_forward.8} parent=0 // pred_check_branch
    %454 = sbr.rel (0) target = $region29
  $region28: #{edmd_pool_forward.8} parent=0 // pred_region
    _
  $region29: #{edmd_pool_forward.8} parent=0 // pred_fallthru
    _
  // Predicated region
  $region30: #{edmd_pool_forward.8} parent=0 // pred_check
    _
  $region31: #{edmd_pool_forward.8} parent=0 // pred_check_branch
    %456 = sbr.rel (0) target = $region33
  $region32: #{edmd_pool_forward.8} parent=0 // pred_region
    _
  $region33: #{edmd_pool_forward.8} parent=0 // pred_fallthru
    _

// kernel: edmd_pool_forward.7
$region0: #{edmd_pool_forward.7}
  #allocation0 [shape = 'u32[]', space=smem, size = 0x4, offset = 0x4, fixed_abs, tag = 'smem constant byte address 0x4 - core index']
  #allocation1 [shape = 'u32[144,128]{1,0:T(1,128)}', space=vmem, size = 0x12000, scoped, tag = 'internal scratch']
  #allocation2 [shape = 'f32[1,1]{1,0:T(1,128)S(1)}', space=vmem, size = 0x200, scoped, tag = 'scoped memory for edmd_pool_forward.7']
  %s0 = inlined_call_operand.vmem [shape: f32[16,16], index: 0, kind: input, shape index: {}]
  %s1 = inlined_call_operand.vmem [shape: f32[16,32], index: 1, kind: input, shape index: {}]
  %s2 = inlined_call_operand.vmem [shape: f32[32,32], index: 2, kind: input, shape index: {}]
  %s3 = inlined_call_operand.vmem [shape: f32[1,32], index: 3, kind: input, shape index: {}]
  %s4 = inlined_call_operand.vmem [shape: f32[32,128], index: 4, kind: input, shape index: {}]
  %s5 = inlined_call_operand.vmem [shape: f32[1,128], index: 5, kind: input, shape index: {}]
  %s6 = inlined_call_operand.vmem [shape: f32[32,128], index: 6, kind: input, shape index: {}]
  %s7 = inlined_call_operand.vmem [shape: f32[1,128], index: 7, kind: input, shape index: {}]
  %s8 = inlined_call_operand.vmem [shape: f32[32,128], index: 8, kind: input, shape index: {}]
  %s9 = inlined_call_operand.vmem [shape: f32[1,128], index: 9, kind: input, shape index: {}]
  %s10 = inlined_call_operand.vmem [shape: f32[128,1], index: 10, kind: input, shape index: {}]
  %s11 = inlined_call_operand.<no memory space> [shape: f32[1,1], index: 11, kind: input, shape index: {}]
  %s12 = inlined_call_operand.vmem [shape: f32[2,2], index: 12, kind: input, shape index: {}]
  %s13 = inlined_call_operand.vmem [shape: f32[2], index: 13, kind: input, shape index: {}]
  %s14 = inlined_call_operand.vmem [shape: f32[16,32], index: 14, kind: output, shape index: {0}]
  %s15 = inlined_call_operand.vmem [shape: f32[16,16], index: 15, kind: output, shape index: {1}]
  %s16 = inlined_call_operand.vmem [shape: f32[1,16], index: 16, kind: output, shape index: {2}]
  %17 = xla_tuple %s14, %s15, %s16
  %s18 = sld [smem:[#allocation0]]
  $region90: #{edmd_pool_forward.7} parent=0
    _
  %s20 = ssub.s32 1, %s18
  %s21 = scalar_select 0, %s20, %s18
  %v22 = vstv %s11
  %23 = vst [vmem:[#allocation2] sm:$0x1] %v22
  $region1: #{edmd_pool_forward.7} parent=0
    #allocation3 [shape = 'u8[1024]{0}', space=smem, size = 0x400, scoped, tag = 'input window, operand 12, single buffered']
    #allocation4 [shape = 's32[1]{0}', space=sflag, size = 0x4, scoped, tag = 'scoped memory for edmd_pool_forward.7']
    #allocation5 [shape = 'u8[512]{0}', space=smem, size = 0x200, scoped, tag = 'input window, operand 13, single buffered']
    #allocation6 [shape = 's32[1]{0}', space=sflag, size = 0x4, scoped, tag = 'scoped memory for edmd_pool_forward.7']
    %24 = vsyncpa [#allocation4], 0
    %25 = vsyncpa [#allocation6], 0
    // Predicated region
    $region2: #{edmd_pool_forward.7} parent=1 // pred_check
      _
    $region3: #{edmd_pool_forward.7} parent=1 // pred_check_branch
      %27 = sbr.rel (0) target = $region5
    $region4: #{edmd_pool_forward.7} parent=1 // pred_region
      _
    $region5: #{edmd_pool_forward.7} parent=1 // pred_fallthru
      _
    // Predicated region
    $region6: #{edmd_pool_forward.7} parent=1 // pred_check
      _
    $region7: #{edmd_pool_forward.7} parent=1 // pred_check_branch
      %29 = sbr.rel (0) target = $region9
    $region8: #{edmd_pool_forward.7} parent=1 // pred_region
      _
    $region9: #{edmd_pool_forward.7} parent=1 // pred_fallthru
      _
    // Predicated region
    $region10: #{edmd_pool_forward.7} parent=1 // pred_check
      _
    $region11: #{edmd_pool_forward.7} parent=1 // pred_check_branch
      %31 = sbr.rel (0) target = $region13
    $region12: #{edmd_pool_forward.7} parent=1 // pred_region
      _
    $region13: #{edmd_pool_forward.7} parent=1 // pred_fallthru
      _
    // Predicated region
    $region14: #{edmd_pool_forward.7} parent=1 // pred_check
      _
    $region15: #{edmd_pool_forward.7} parent=1 // pred_check_branch
      %33 = sbr.rel (0) target = $region17
    $region16: #{edmd_pool_forward.7} parent=1 // pred_region
      _
    $region17: #{edmd_pool_forward.7} parent=1 // pred_fallthru
      _
    // Predicated region
    $region18: #{edmd_pool_forward.7} parent=1 // pred_check
      _
    $region19: #{edmd_pool_forward.7} parent=1 // pred_check_branch
      %35 = sbr.rel (0) target = $region21
    $region20: #{edmd_pool_forward.7} parent=1 // pred_region
      _
    $region21: #{edmd_pool_forward.7} parent=1 // pred_fallthru
      _
    // Predicated region
    $region22: #{edmd_pool_forward.7} parent=1 // pred_check
      _
    $region23: #{edmd_pool_forward.7} parent=1 // pred_check_branch
      %37 = sbr.rel (0) target = $region25
    $region24: #{edmd_pool_forward.7} parent=1 // pred_region
      _
    $region25: #{edmd_pool_forward.7} parent=1 // pred_fallthru
      _
    // Predicated region
    $region26: #{edmd_pool_forward.7} parent=1 // pred_check
      _
    $region27: #{edmd_pool_forward.7} parent=1 // pred_check_branch
      %39 = sbr.rel (0) target = $region29
    $region28: #{edmd_pool_forward.7} parent=1 // pred_region
      _
    $region29: #{edmd_pool_forward.7} parent=1 // pred_fallthru
      _
    // Predicated region
    $region30: #{edmd_pool_forward.7} parent=1 // pred_check
      _
    $region31: #{edmd_pool_forward.7} parent=1 // pred_check_branch
      %41 = sbr.rel (0) target = $region33
    $region32: #{edmd_pool_forward.7} parent=1 // pred_region
      _
    $region33: #{edmd_pool_forward.7} parent=1 // pred_fallthru
      _
    // Predicated region
    $region34: #{edmd_pool_forward.7} parent=1 // pred_check
      _
    $region35: #{edmd_pool_forward.7} parent=1 // pred_check_branch
      %43 = sbr.rel (0) target = $region37
    $region36: #{edmd_pool_forward.7} parent=1 // pred_region
      _
    $region37: #{edmd_pool_forward.7} parent=1 // pred_fallthru
      _
    // Predicated region
    $region38: #{edmd_pool_forward.7} parent=1 // pred_check
      _
    $region39: #{edmd_pool_forward.7} parent=1 // pred_check_branch
      %45 = sbr.rel (0) target = $region41
    $region40: #{edmd_pool_forward.7} parent=1 // pred_region
      _
    $region41: #{edmd_pool_forward.7} parent=1 // pred_fallthru
      _
    // Predicated region
    $region42: #{edmd_pool_forward.7} parent=1 // pred_check
      _
    $region43: #{edmd_pool_forward.7} parent=1 // pred_check_branch
      %47 = sbr.rel (0) target = $region45
    $region44: #{edmd_pool_forward.7} parent=1 // pred_region
      _
    $region45: #{edmd_pool_forward.7} parent=1 // pred_fallthru
      _
    // Predicated region
    $region46: #{edmd_pool_forward.7} parent=1 // pred_check
      _
    $region47: #{edmd_pool_forward.7} parent=1 // pred_check_branch
      %49 = sbr.rel (0) target = $region49
    $region48: #{edmd_pool_forward.7} parent=1 // pred_region
      _
    $region49: #{edmd_pool_forward.7} parent=1 // pred_fallthru
      _
    // Predicated region
    $region50: #{edmd_pool_forward.7} parent=1 // pred_check
      _
    $region51: #{edmd_pool_forward.7} parent=1 // pred_check_branch
      %51 = sbr.rel (0) target = $region53
    $region52: #{edmd_pool_forward.7} parent=1 // pred_region
      %s53 = ssub.s32 32, 32
      %54 = vsyncadd [#allocation4], %s53
      %s56 = sshll.u32 %s12, 4
      %s57 = int_to_ptr.vmem [resolvable:$true] %s56
      %59 = dma.vmem_to_smem %s57, 32, [#allocation3], [#allocation4]
    $region53: #{edmd_pool_forward.7} parent=1 // pred_fallthru
      _
    // Predicated region
    $region54: #{edmd_pool_forward.7} parent=1 // pred_check
      _
    $region55: #{edmd_pool_forward.7} parent=1 // pred_check_branch
      %61 = sbr.rel (0) target = $region57
    $region56: #{edmd_pool_forward.7} parent=1 // pred_region
      %s63 = ssub.s32 16, 16
      %64 = vsyncadd [#allocation6], %s63
      %s66 = sshll.u32 %s13, 4
      %s67 = int_to_ptr.vmem [resolvable:$true] %s66
      %69 = dma.vmem_to_smem %s67, 16, [#allocation5], [#allocation6]
    $region57: #{edmd_pool_forward.7} parent=1 // pred_fallthru
      _
    // Predicated region
    $region58: #{edmd_pool_forward.7} parent=1 // pred_check
      _
    $region59: #{edmd_pool_forward.7} parent=1 // pred_check_branch
      %71 = sbr.rel (0) target = $region61
    $region60: #{edmd_pool_forward.7} parent=1 // pred_region
      %72 = dma.done [#allocation4], 32
    $region61: #{edmd_pool_forward.7} parent=1 // pred_fallthru
      _
    // Predicated region
    $region62: #{edmd_pool_forward.7} parent=1 // pred_check
      _
    $region63: #{edmd_pool_forward.7} parent=1 // pred_check_branch
      %74 = sbr.rel (0) target = $region65
    $region64: #{edmd_pool_forward.7} parent=1 // pred_region
      %75 = dma.done [#allocation6], 16
    $region65: #{edmd_pool_forward.7} parent=1 // pred_fallthru
      _
    %76 = sfence
    %v77 = vld [vmem:[%s0] sm:$0xff]
    %v78 = vld [vmem:[%s0 + $0x8] sm:$0xff]
    %v79 = vlaneseq
    %v80 = vshrl.u32 %v79, 7
    %v81 = vadd.s32 %v80, 8
    %v82 = vlaneseq
    %v83 = vand.u32 %v82, 127
    %vm84 = vcmp.eq.s32.totalorder %v80, %v83
    %vm85 = vcmp.eq.s32.totalorder %v81, %v83
    %v86 = vsel %vm84, 1, 0
    %v87 = vsel %vm85, 1, 0
    %v88 = vcvt.s32.f32 %v86
    %v89 = vcvt.s32.f32 %v87
    %vm90 = vcmp.ne.f32.partialorder %v77, 0.0
    %vm91 = vcmp.ne.f32.partialorder %v78, 0.0
    %v92 = vsel %vm90, 1, 0
    %v93 = vsel %vm91, 1, 0
    %v94 = vcvt.s32.f32 %v92
    %v95 = vcvt.s32.f32 %v93
    %v96 = vmax.f32 %v94, %v88
    %v97 = vmax.f32 %v95, %v89
    %vm98 = vcmask 130048
    %v99 = vsel %vm98, %v96, 0.0
    %100 = vadd.xlane.f32.xlu0 %v99
    %v101 = vpop.xlane.xlu0 %100
    %v102 = vsel %vm98, %v97, 0.0
    %103 = vadd.xlane.f32.xlu0 %v102
    %v104 = vpop.xlane.xlu0 %103
    %v106 = vsel %vm98, 1.0, 0
    %v109 = vsel %vm98, %v96, 0
    %v112 = vsel %vm98, %v97, 0
    %114 = vmatprep.subr.mxu0 0.0
    %115 = vmatpush1.xpose.msra.mxu0 %v109
    %116 = vmatprep.subr.mxu0 0.0
    %117 = vmatpush1.xpose.msra.mxu0 %v112
    %118 = vmatprep.subr.mxu0 0.0
    %119 = vmatpush1.xpose.msra.mxu0 0.0
    %120 = vmatprep.subr.mxu0 0.0
    %121 = vmatpush1.xpose.msra.mxu0 0.0
    %122 = vmatprep.subr.mxu0 0.0
    %123 = vmatpush1.xpose.msra.mxu0 0.0
    %124 = vmatprep.subr.mxu0 0.0
    %125 = vmatpush1.xpose.msra.mxu0 0.0
    %126 = vmatprep.subr.mxu0 0.0
    %127 = vmatpush1.xpose.msra.mxu0 0.0
    %128 = vmatprep.subr.mxu0 0.0
    %129 = vmatpush1.xpose.msra.mxu0 0.0
    %130 = vmatprep.subr.mxu0 0.0
    %131 = vmatpush1.xpose.msra.mxu0 0.0
    %132 = vmatprep.subr.mxu0 0.0
    %133 = vmatpush1.xpose.msra.mxu0 0.0
    %134 = vmatprep.subr.mxu0 0.0
    %135 = vmatpush1.xpose.msra.mxu0 0.0
    %136 = vmatprep.subr.mxu0 0.0
    %137 = vmatpush1.xpose.msra.mxu0 0.0
    %138 = vmatprep.subr.mxu0 0.0
    %139 = vmatpush1.xpose.msra.mxu0 0.0
    %140 = vmatprep.subr.mxu0 0.0
    %141 = vmatpush1.xpose.msra.mxu0 0.0
    %142 = vmatprep.subr.mxu0 0.0
    %143 = vmatpush1.xpose.msra.mxu0 0.0
    %144 = vmatprep.subr.mxu0 0.0
    %145 = vmatpush1.xpose.msra.mxu0 0.0
    %146 = vmatprep.subr.mxu0 0.0
    %147 = vmatpush1.xpose.msra.mxu0 0.0
    %148 = vmatprep.subr.mxu0 0.0
    %149 = vmatpush1.xpose.msra.mxu0 0.0
    %150 = vmatprep.subr.mxu0 0.0
    %151 = vmatpush1.xpose.msra.mxu0 0.0
    %152 = vmatprep.subr.mxu0 0.0
    %153 = vmatpush1.xpose.msra.mxu0 0.0
    %154 = vmatprep.subr.mxu0 0.0
    %155 = vmatpush1.xpose.msra.mxu0 0.0
    %156 = vmatprep.subr.mxu0 0.0
    %157 = vmatpush1.xpose.msra.mxu0 0.0
    %158 = vmatprep.subr.mxu0 0.0
    %159 = vmatpush1.xpose.msra.mxu0 0.0
    %160 = vmatprep.subr.mxu0 0.0
    %161 = vmatpush1.xpose.msra.mxu0 0.0
    %162 = vmatprep.subr.mxu0 0.0
    %163 = vmatpush1.xpose.msra.mxu0 0.0
    %164 = vmatprep.subr.mxu0 0.0
    %165 = vmatpush1.xpose.msra.mxu0 0.0
    %166 = vmatprep.subr.mxu0 0.0
    %167 = vmatpush1.xpose.msra.mxu0 0.0
    %168 = vmatprep.subr.mxu0 0.0
    %169 = vmatpush1.xpose.msra.mxu0 0.0
    %170 = vmatprep.subr.mxu0 0.0
    %171 = vmatpush1.xpose.msra.mxu0 0.0
    %172 = vmatprep.subr.mxu0 0.0
    %173 = vmatpush1.xpose.msra.mxu0 0.0
    %174 = vmatprep.subr.mxu0 0.0
    %175 = vmatpush1.xpose.msra.mxu0 0.0
    %176 = vmatprep.subr.mxu0 0.0
    %177 = vmatpush1.xpose.msra.mxu0 0.0
    %178 = vmatprep.mubr.f32.mxu0 0.0
    %179 = vmatmul.mubr.f32.gmra.mrb[0].mxu0 %v106
    %v180 = vpop.f32.mrb[0].mxu0
    %v181 = vadd.f32 0.0, %v180
    %v182 = vpop.f32.mrb[0].mxu0
    %183 = vdwg.mxu0
    %v184 = vrsqrt.pop %v101
    %v185 = vrsqrt.pop %v104
    %v186 = vmul.f32 %v96, %v184
    %v187 = vmul.f32 %v97, %v185
    %v188 = vrsqrt.pop %v181
    %v189 = vlaneseq
    %v190 = vshrl.u32 %v189, 7
    %v191 = vsub.s32 0, %v190
    %v192 = vrot.slane %v188, %v191
    %v193 = vmul.f32 %v186, %v192
    %v194 = vmul.f32 %v187, %v192
    %195 = vst.msk [vmem:[%s15] sm:$0xff] %vm98, %v193
    %196 = vst.msk [vmem:[%s15 + $0x8] sm:$0xff] %vm98, %v194
    %v197 = vld [vmem:[%s1] sm:$0xff]
    %v198 = vld [vmem:[%s1 + $0x8] sm:$0xff]
    %v199 = vld [vmem:[%s2] sm:$0xff]
    %v200 = vld [vmem:[%s2 + $0x8] sm:$0xff]
    %v201 = vld [vmem:[%s2 + $0x10] sm:$0xff]
    %v202 = vld [vmem:[%s2 + $0x18] sm:$0xff]
    %vm203 = vcmask 261120
    %v205 = vsel %vm203, %v197, 0
    %v208 = vsel %vm203, %v198, 0
    %210 = vmatprep.subr.mxu0 0.0
    %211 = vmatpush1.msra.mxu0 %v199
    %212 = vmatprep.subr.mxu0 0.0
    %213 = vmatpush1.msra.mxu0 %v200
    %214 = vmatprep.subr.mxu0 0.0
    %215 = vmatpush1.msra.mxu0 %v201
    %216 = vmatprep.subr.mxu0 0.0
    %217 = vmatpush1.msra.mxu0 %v202
    %218 = vmatprep.subr.mxu0 0.0
    %219 = vmatpush1.msra.mxu0 0.0
    %220 = vmatprep.subr.mxu0 0.0
    %221 = vmatpush1.msra.mxu0 0.0
    %222 = vmatprep.subr.mxu0 0.0
    %223 = vmatpush1.msra.mxu0 0.0
    %224 = vmatprep.subr.mxu0 0.0
    %225 = vmatpush1.msra.mxu0 0.0
    %226 = vmatprep.subr.mxu0 0.0
    %227 = vmatpush1.msra.mxu0 0.0
    %228 = vmatprep.subr.mxu0 0.0
    %229 = vmatpush1.msra.mxu0 0.0
    %230 = vmatprep.subr.mxu0 0.0
    %231 = vmatpush1.msra.mxu0 0.0
    %232 = vmatprep.subr.mxu0 0.0
    %233 = vmatpush1.msra.mxu0 0.0
    %234 = vmatprep.subr.mxu0 0.0
    %235 = vmatpush1.msra.mxu0 0.0
    %236 = vmatprep.subr.mxu0 0.0
    %237 = vmatpush1.msra.mxu0 0.0
    %238 = vmatprep.subr.mxu0 0.0
    %239 = vmatpush1.msra.mxu0 0.0
    %240 = vmatprep.subr.mxu0 0.0
    %241 = vmatpush1.msra.mxu0 0.0
    %242 = vmatprep.subr.mxu0 0.0
    %243 = vmatpush1.msra.mxu0 0.0
    %244 = vmatprep.subr.mxu0 0.0
    %245 = vmatpush1.msra.mxu0 0.0
    %246 = vmatprep.subr.mxu0 0.0
    %247 = vmatpush1.msra.mxu0 0.0
    %248 = vmatprep.subr.mxu0 0.0
    %249 = vmatpush1.msra.mxu0 0.0
    %250 = vmatprep.subr.mxu0 0.0
    %251 = vmatpush1.msra.mxu0 0.0
    %252 = vmatprep.subr.mxu0 0.0
    %253 = vmatpush1.msra.mxu0 0.0
    %254 = vmatprep.subr.mxu0 0.0
    %255 = vmatpush1.msra.mxu0 0.0
    %256 = vmatprep.subr.mxu0 0.0
    %257 = vmatpush1.msra.mxu0 0.0
    %258 = vmatprep.subr.mxu0 0.0
    %259 = vmatpush1.msra.mxu0 0.0
    %260 = vmatprep.subr.mxu0 0.0
    %261 = vmatpush1.msra.mxu0 0.0
    %262 = vmatprep.subr.mxu0 0.0
    %263 = vmatpush1.msra.mxu0 0.0
    %264 = vmatprep.subr.mxu0 0.0
    %265 = vmatpush1.msra.mxu0 0.0
    %266 = vmatprep.subr.mxu0 0.0
    %267 = vmatpush1.msra.mxu0 0.0
    %268 = vmatprep.subr.mxu0 0.0
    %269 = vmatpush1.msra.mxu0 0.0
    %270 = vmatprep.subr.mxu0 0.0
    %271 = vmatpush1.msra.mxu0 0.0
    %272 = vmatprep.subr.mxu0 0.0
    %273 = vmatpush1.msra.mxu0 0.0
    %274 = vmatprep.mubr.f32.mxu0 0.0
    %275 = vmatmul.mubr.f32.gmra.mrb[0].mxu0 %v205
    %v276 = vpop.f32.mrb[0].mxu0
    %v277 = vadd.f32 0.0, %v276
    %v278 = vpop.f32.mrb[0].mxu0
    %279 = vmatprep.mubr.f32.mxu0 0.0
    %280 = vmatmul.mubr.f32.gmra.mrb[0].mxu0 %v208
    %v281 = vpop.f32.mrb[0].mxu0
    %v282 = vadd.f32 0.0, %v281
    %v283 = vpop.f32.mrb[0].mxu0
    %284 = vdwg.mxu0
    %v285 = vld [vmem:[%s3] sm:$0x1]
    %v287 = vlaneseq
    %v288 = vshrl.u32 %v287, 7
    %v289 = vsub.s32 0, %v288
    %v290 = vrot.slane %v285, %v289
    %v293 = vsel %vm98, %v193, 0
    %v296 = vsel %vm98, %v194, 0
    %298 = vmatprep.subr.mxu0 0.0
    %299 = vmatpush1.msra.mxu0 %v277
    %300 = vmatprep.subr.mxu0 0.0
    %301 = vmatpush1.msra.mxu0 %v282
    %302 = vmatprep.subr.mxu0 0.0
    %303 = vmatpush1.msra.mxu0 0.0
    %304 = vmatprep.subr.mxu0 0.0
    %305 = vmatpush1.msra.mxu0 0.0
    %306 = vmatprep.subr.mxu0 0.0
    %307 = vmatpush1.msra.mxu0 0.0
    %308 = vmatprep.subr.mxu0 0.0
    %309 = vmatpush1.msra.mxu0 0.0
    %310 = vmatprep.subr.mxu0 0.0
    %311 = vmatpush1.msra.mxu0 0.0
    %312 = vmatprep.subr.mxu0 0.0
    %313 = vmatpush1.msra.mxu0 0.0
    %314 = vmatprep.subr.mxu0 0.0
    %315 = vmatpush1.msra.mxu0 0.0
    %316 = vmatprep.subr.mxu0 0.0
    %317 = vmatpush1.msra.mxu0 0.0
    %318 = vmatprep.subr.mxu0 0.0
    %319 = vmatpush1.msra.mxu0 0.0
    %320 = vmatprep.subr.mxu0 0.0
    %321 = vmatpush1.msra.mxu0 0.0
    %322 = vmatprep.subr.mxu0 0.0
    %323 = vmatpush1.msra.mxu0 0.0
    %324 = vmatprep.subr.mxu0 0.0
    %325 = vmatpush1.msra.mxu0 0.0
    %326 = vmatprep.subr.mxu0 0.0
    %327 = vmatpush1.msra.mxu0 0.0
    %328 = vmatprep.subr.mxu0 0.0
    %329 = vmatpush1.msra.mxu0 0.0
    %330 = vmatprep.subr.mxu0 0.0
    %331 = vmatpush1.msra.mxu0 0.0
    %332 = vmatprep.subr.mxu0 0.0
    %333 = vmatpush1.msra.mxu0 0.0
    %334 = vmatprep.subr.mxu0 0.0
    %335 = vmatpush1.msra.mxu0 0.0
    %336 = vmatprep.subr.mxu0 0.0
    %337 = vmatpush1.msra.mxu0 0.0
    %338 = vmatprep.subr.mxu0 0.0
    %339 = vmatpush1.msra.mxu0 0.0
    %340 = vmatprep.subr.mxu0 0.0
    %341 = vmatpush1.msra.mxu0 0.0
    %342 = vmatprep.subr.mxu0 0.0
    %343 = vmatpush1.msra.mxu0 0.0
    %344 = vmatprep.subr.mxu0 0.0
    %345 = vmatpush1.msra.mxu0 0.0
    %346 = vmatprep.subr.mxu0 0.0
    %347 = vmatpush1.msra.mxu0 0.0
    %348 = vmatprep.subr.mxu0 0.0
    %349 = vmatpush1.msra.mxu0 0.0
    %350 = vmatprep.subr.mxu0 0.0
    %351 = vmatpush1.msra.mxu0 0.0
    %352 = vmatprep.subr.mxu0 0.0
    %353 = vmatpush1.msra.mxu0 0.0
    %354 = vmatprep.subr.mxu0 0.0
    %355 = vmatpush1.msra.mxu0 0.0
    %356 = vmatprep.subr.mxu0 0.0
    %357 = vmatpush1.msra.mxu0 0.0
    %358 = vmatprep.subr.mxu0 0.0
    %359 = vmatpush1.msra.mxu0 0.0
    %360 = vmatprep.subr.mxu0 0.0
    %361 = vmatpush1.msra.mxu0 0.0
    %362 = vmatprep.mubr.f32.mxu0 0.0
    %363 = vmatmul.mubr.f32.gmra.mrb[0].mxu0 %v293
    %v364 = vpop.f32.mrb[0].mxu0
    %v365 = vadd.f32 %v290, %v364
    %v366 = vpop.f32.mrb[0].mxu0
    %367 = vmatprep.mubr.f32.mxu0 0.0
    %368 = vmatmul.mubr.f32.gmra.mrb[0].mxu0 %v296
    %v369 = vpop.f32.mrb[0].mxu0
    %v370 = vadd.f32 %v290, %v369
    %v371 = vpop.f32.mrb[0].mxu0
    %372 = vdwg.mxu0
    %v373 = vmax.f32 %v365, 0.0
    %v374 = vmax.f32 %v370, 0.0
    %375 = vst.msk [vmem:[%s14] sm:$0xff] %vm203, %v373
    %376 = vst.msk [vmem:[%s14 + $0x8] sm:$0xff] %vm203, %v374
    %v377 = vld [vmem:[%s4] sm:$0xff]
    %v378 = vld [vmem:[%s4 + $0x8] sm:$0xff]
    %v379 = vld [vmem:[%s4 + $0x10] sm:$0xff]
    %v380 = vld [vmem:[%s4 + $0x18] sm:$0xff]
    %v381 = vld [vmem:[%s5] sm:$0x1]
    %v383 = vlaneseq
    %v384 = vshrl.u32 %v383, 7
    %v385 = vsub.s32 0, %v384
    %v386 = vrot.slane %v381, %v385
    %v389 = vsel %vm203, %v373, 0
    %v392 = vsel %vm203, %v374, 0
    %394 = vmatprep.subr.mxu0 0.0
    %395 = vmatpush1.msra.mxu0 %v377
    %396 = vmatprep.subr.mxu0 0.0
    %397 = vmatpush1.msra.mxu0 %v378
    %398 = vmatprep.subr.mxu0 0.0
    %399 = vmatpush1.msra.mxu0 %v379
    %400 = vmatprep.subr.mxu0 0.0
    %401 = vmatpush1.msra.mxu0 %v380
    %402 = vmatprep.subr.mxu0 0.0
    %403 = vmatpush1.msra.mxu0 0.0
    %404 = vmatprep.subr.mxu0 0.0
    %405 = vmatpush1.msra.mxu0 0.0
    %406 = vmatprep.subr.mxu0 0.0
    %407 = vmatpush1.msra.mxu0 0.0
    %408 = vmatprep.subr.mxu0 0.0
    %409 = vmatpush1.msra.mxu0 0.0
    %410 = vmatprep.subr.mxu0 0.0
    %411 = vmatpush1.msra.mxu0 0.0
    %412 = vmatprep.subr.mxu0 0.0
    %413 = vmatpush1.msra.mxu0 0.0
    %414 = vmatprep.subr.mxu0 0.0
    %415 = vmatpush1.msra.mxu0 0.0
    %416 = vmatprep.subr.mxu0 0.0
    %417 = vmatpush1.msra.mxu0 0.0
    %418 = vmatprep.subr.mxu0 0.0
    %419 = vmatpush1.msra.mxu0 0.0
    %420 = vmatprep.subr.mxu0 0.0
    %421 = vmatpush1.msra.mxu0 0.0
    %422 = vmatprep.subr.mxu0 0.0
    %423 = vmatpush1.msra.mxu0 0.0
    %424 = vmatprep.subr.mxu0 0.0
    %425 = vmatpush1.msra.mxu0 0.0
    %426 = vmatprep.subr.mxu0 0.0
    %427 = vmatpush1.msra.mxu0 0.0
    %428 = vmatprep.subr.mxu0 0.0
    %429 = vmatpush1.msra.mxu0 0.0
    %430 = vmatprep.subr.mxu0 0.0
    %431 = vmatpush1.msra.mxu0 0.0
    %432 = vmatprep.subr.mxu0 0.0
    %433 = vmatpush1.msra.mxu0 0.0
    %434 = vmatprep.subr.mxu0 0.0
    %435 = vmatpush1.msra.mxu0 0.0
    %436 = vmatprep.subr.mxu0 0.0
    %437 = vmatpush1.msra.mxu0 0.0
    %438 = vmatprep.subr.mxu0 0.0
    %439 = vmatpush1.msra.mxu0 0.0
    %440 = vmatprep.subr.mxu0 0.0
    %441 = vmatpush1.msra.mxu0 0.0
    %442 = vmatprep.subr.mxu0 0.0
    %443 = vmatpush1.msra.mxu0 0.0
    %444 = vmatprep.subr.mxu0 0.0
    %445 = vmatpush1.msra.mxu0 0.0
    %446 = vmatprep.subr.mxu0 0.0
    %447 = vmatpush1.msra.mxu0 0.0
    %448 = vmatprep.subr.mxu0 0.0
    %449 = vmatpush1.msra.mxu0 0.0
    %450 = vmatprep.subr.mxu0 0.0
    %451 = vmatpush1.msra.mxu0 0.0
    %452 = vmatprep.subr.mxu0 0.0
    %453 = vmatpush1.msra.mxu0 0.0
    %454 = vmatprep.subr.mxu0 0.0
    %455 = vmatpush1.msra.mxu0 0.0
    %456 = vmatprep.subr.mxu0 0.0
    %457 = vmatpush1.msra.mxu0 0.0
    %458 = vmatprep.mubr.f32.mxu0 0.0
    %459 = vmatmul.mubr.f32.gmra.mrb[0].mxu0 %v389
    %v460 = vpop.f32.mrb[0].mxu0
    %v461 = vadd.f32 %v386, %v460
    %v462 = vpop.f32.mrb[0].mxu0
    %463 = vmatprep.mubr.f32.mxu0 0.0
    %464 = vmatmul.mubr.f32.gmra.mrb[0].mxu0 %v392
    %v465 = vpop.f32.mrb[0].mxu0
    %v466 = vadd.f32 %v386, %v465
    %v467 = vpop.f32.mrb[0].mxu0
    %468 = vdwg.mxu0
    %v469 = vld [vmem:[%s6] sm:$0xff]
    %v470 = vld [vmem:[%s6 + $0x8] sm:$0xff]
    %v471 = vld [vmem:[%s6 + $0x10] sm:$0xff]
    %v472 = vld [vmem:[%s6 + $0x18] sm:$0xff]
    %v473 = vld [vmem:[%s7] sm:$0x1]
    %v475 = vlaneseq
    %v476 = vshrl.u32 %v475, 7
    %v477 = vsub.s32 0, %v476
    %v478 = vrot.slane %v473, %v477
    %480 = vmatprep.subr.mxu0 0.0
    %481 = vmatpush1.msra.mxu0 %v469
    %482 = vmatprep.subr.mxu0 0.0
    %483 = vmatpush1.msra.mxu0 %v470
    %484 = vmatprep.subr.mxu0 0.0
    %485 = vmatpush1.msra.mxu0 %v471
    %486 = vmatprep.subr.mxu0 0.0
    %487 = vmatpush1.msra.mxu0 %v472
    %488 = vmatprep.subr.mxu0 0.0
    %489 = vmatpush1.msra.mxu0 0.0
    %490 = vmatprep.subr.mxu0 0.0
    %491 = vmatpush1.msra.mxu0 0.0
    %492 = vmatprep.subr.mxu0 0.0
    %493 = vmatpush1.msra.mxu0 0.0
    %494 = vmatprep.subr.mxu0 0.0
    %495 = vmatpush1.msra.mxu0 0.0
    %496 = vmatprep.subr.mxu0 0.0
    %497 = vmatpush1.msra.mxu0 0.0
    %498 = vmatprep.subr.mxu0 0.0
    %499 = vmatpush1.msra.mxu0 0.0
    %500 = vmatprep.subr.mxu0 0.0
    %501 = vmatpush1.msra.mxu0 0.0
    %502 = vmatprep.subr.mxu0 0.0
    %503 = vmatpush1.msra.mxu0 0.0
    %504 = vmatprep.subr.mxu0 0.0
    %505 = vmatpush1.msra.mxu0 0.0
    %506 = vmatprep.subr.mxu0 0.0
    %507 = vmatpush1.msra.mxu0 0.0
    %508 = vmatprep.subr.mxu0 0.0
    %509 = vmatpush1.msra.mxu0 0.0
    %510 = vmatprep.subr.mxu0 0.0
    %511 = vmatpush1.msra.mxu0 0.0
    %512 = vmatprep.subr.mxu0 0.0
    %513 = vmatpush1.msra.mxu0 0.0
    %514 = vmatprep.subr.mxu0 0.0
    %515 = vmatpush1.msra.mxu0 0.0
    %516 = vmatprep.subr.mxu0 0.0
    %517 = vmatpush1.msra.mxu0 0.0
    %518 = vmatprep.subr.mxu0 0.0
    %519 = vmatpush1.msra.mxu0 0.0
    %520 = vmatprep.subr.mxu0 0.0
    %521 = vmatpush1.msra.mxu0 0.0
    %522 = vmatprep.subr.mxu0 0.0
    %523 = vmatpush1.msra.mxu0 0.0
    %524 = vmatprep.subr.mxu0 0.0
    %525 = vmatpush1.msra.mxu0 0.0
    %526 = vmatprep.subr.mxu0 0.0
    %527 = vmatpush1.msra.mxu0 0.0
    %528 = vmatprep.subr.mxu0 0.0
    %529 = vmatpush1.msra.mxu0 0.0
    %530 = vmatprep.subr.mxu0 0.0
    %531 = vmatpush1.msra.mxu0 0.0
    %532 = vmatprep.subr.mxu0 0.0
    %533 = vmatpush1.msra.mxu0 0.0
    %534 = vmatprep.subr.mxu0 0.0
    %535 = vmatpush1.msra.mxu0 0.0
    %536 = vmatprep.subr.mxu0 0.0
    %537 = vmatpush1.msra.mxu0 0.0
    %538 = vmatprep.subr.mxu0 0.0
    %539 = vmatpush1.msra.mxu0 0.0
    %540 = vmatprep.subr.mxu0 0.0
    %541 = vmatpush1.msra.mxu0 0.0
    %542 = vmatprep.subr.mxu0 0.0
    %543 = vmatpush1.msra.mxu0 0.0
    %544 = vmatprep.mubr.f32.mxu0 0.0
    %545 = vmatmul.mubr.f32.gmra.mrb[0].mxu0 %v389
    %v546 = vpop.f32.mrb[0].mxu0
    %v547 = vadd.f32 %v478, %v546
    %v548 = vpop.f32.mrb[0].mxu0
    %549 = vmatprep.mubr.f32.mxu0 0.0
    %550 = vmatmul.mubr.f32.gmra.mrb[0].mxu0 %v392
    %v551 = vpop.f32.mrb[0].mxu0
    %v552 = vadd.f32 %v478, %v551
    %v553 = vpop.f32.mrb[0].mxu0
    %554 = vdwg.mxu0
    %v555 = vld [vmem:[%s8] sm:$0xff]
    %v556 = vld [vmem:[%s8 + $0x8] sm:$0xff]
    %v557 = vld [vmem:[%s8 + $0x10] sm:$0xff]
    %v558 = vld [vmem:[%s8 + $0x18] sm:$0xff]
    %v559 = vld [vmem:[%s9] sm:$0x1]
    %v561 = vlaneseq
    %v562 = vshrl.u32 %v561, 7
    %v563 = vsub.s32 0, %v562
    %v564 = vrot.slane %v559, %v563
    %566 = vmatprep.subr.mxu0 0.0
    %567 = vmatpush1.msra.mxu0 %v555
    %568 = vmatprep.subr.mxu0 0.0
    %569 = vmatpush1.msra.mxu0 %v556
    %570 = vmatprep.subr.mxu0 0.0
    %571 = vmatpush1.msra.mxu0 %v557
    %572 = vmatprep.subr.mxu0 0.0
    %573 = vmatpush1.msra.mxu0 %v558
    %574 = vmatprep.subr.mxu0 0.0
    %575 = vmatpush1.msra.mxu0 0.0
    %576 = vmatprep.subr.mxu0 0.0
    %577 = vmatpush1.msra.mxu0 0.0
    %578 = vmatprep.subr.mxu0 0.0
    %579 = vmatpush1.msra.mxu0 0.0
    %580 = vmatprep.subr.mxu0 0.0
    %581 = vmatpush1.msra.mxu0 0.0
    %582 = vmatprep.subr.mxu0 0.0
    %583 = vmatpush1.msra.mxu0 0.0
    %584 = vmatprep.subr.mxu0 0.0
    %585 = vmatpush1.msra.mxu0 0.0
    %586 = vmatprep.subr.mxu0 0.0
    %587 = vmatpush1.msra.mxu0 0.0
    %588 = vmatprep.subr.mxu0 0.0
    %589 = vmatpush1.msra.mxu0 0.0
    %590 = vmatprep.subr.mxu0 0.0
    %591 = vmatpush1.msra.mxu0 0.0
    %592 = vmatprep.subr.mxu0 0.0
    %593 = vmatpush1.msra.mxu0 0.0
    %594 = vmatprep.subr.mxu0 0.0
    %595 = vmatpush1.msra.mxu0 0.0
    %596 = vmatprep.subr.mxu0 0.0
    %597 = vmatpush1.msra.mxu0 0.0
    %598 = vmatprep.subr.mxu0 0.0
    %599 = vmatpush1.msra.mxu0 0.0
    %600 = vmatprep.subr.mxu0 0.0
    %601 = vmatpush1.msra.mxu0 0.0
    %602 = vmatprep.subr.mxu0 0.0
    %603 = vmatpush1.msra.mxu0 0.0
    %604 = vmatprep.subr.mxu0 0.0
    %605 = vmatpush1.msra.mxu0 0.0
    %606 = vmatprep.subr.mxu0 0.0
    %607 = vmatpush1.msra.mxu0 0.0
    %608 = vmatprep.subr.mxu0 0.0
    %609 = vmatpush1.msra.mxu0 0.0
    %610 = vmatprep.subr.mxu0 0.0
    %611 = vmatpush1.msra.mxu0 0.0
    %612 = vmatprep.subr.mxu0 0.0
    %613 = vmatpush1.msra.mxu0 0.0
    %614 = vmatprep.subr.mxu0 0.0
    %615 = vmatpush1.msra.mxu0 0.0
    %616 = vmatprep.subr.mxu0 0.0
    %617 = vmatpush1.msra.mxu0 0.0
    %618 = vmatprep.subr.mxu0 0.0
    %619 = vmatpush1.msra.mxu0 0.0
    %620 = vmatprep.subr.mxu0 0.0
    %621 = vmatpush1.msra.mxu0 0.0
    %622 = vmatprep.subr.mxu0 0.0
    %623 = vmatpush1.msra.mxu0 0.0
    %624 = vmatprep.subr.mxu0 0.0
    %625 = vmatpush1.msra.mxu0 0.0
    %626 = vmatprep.subr.mxu0 0.0
    %627 = vmatpush1.msra.mxu0 0.0
    %628 = vmatprep.subr.mxu0 0.0
    %629 = vmatpush1.msra.mxu0 0.0
    %630 = vmatprep.mubr.f32.mxu0 0.0
    %631 = vmatmul.mubr.f32.gmra.mrb[0].mxu0 %v389
    %v632 = vpop.f32.mrb[0].mxu0
    %v633 = vadd.f32 %v564, %v632
    %v634 = vpop.f32.mrb[0].mxu0
    %635 = vmatprep.mubr.f32.mxu0 0.0
    %636 = vmatmul.mubr.f32.gmra.mrb[0].mxu0 %v392
    %v637 = vpop.f32.mrb[0].mxu0
    %v638 = vadd.f32 %v564, %v637
    %v639 = vpop.f32.mrb[0].mxu0
    %640 = vdwg.mxu0
    %v641 = vld [vmem:[%s10] sm:$0xff]
    %v642 = vld [vmem:[%s10 + $0x8] sm:$0xff]
    %v643 = vld [vmem:[%s10 + $0x10] sm:$0xff]
    %v644 = vld [vmem:[%s10 + $0x18] sm:$0xff]
    %v645 = vld [vmem:[%s10 + $0x20] sm:$0xff]
    %v646 = vld [vmem:[%s10 + $0x28] sm:$0xff]
    %v647 = vld [vmem:[%s10 + $0x30] sm:$0xff]
    %v648 = vld [vmem:[%s10 + $0x38] sm:$0xff]
    %v649 = vld [vmem:[%s10 + $0x40] sm:$0xff]
    %v650 = vld [vmem:[%s10 + $0x48] sm:$0xff]
    %v651 = vld [vmem:[%s10 + $0x50] sm:$0xff]
    %v652 = vld [vmem:[%s10 + $0x58] sm:$0xff]
    %v653 = vld [vmem:[%s10 + $0x60] sm:$0xff]
    %v654 = vld [vmem:[%s10 + $0x68] sm:$0xff]
    %v655 = vld [vmem:[%s10 + $0x70] sm:$0xff]
    %v656 = vld [vmem:[%s10 + $0x78] sm:$0xff]
    %vm657 = vcmask 523264
    %v659 = vsel %vm657, %v461, 0
    %v662 = vsel %vm657, %v466, 0
    %v665 = vsel %vm657, %v547, 0
    %v668 = vsel %vm657, %v552, 0
    %670 = vmatprep.subr.mxu0 0.0
    %671 = vmatpush1.xpose.msra.mxu0 %v665
    %672 = vmatprep.subr.mxu0 0.0
    %673 = vmatpush1.xpose.msra.mxu0 %v668
    %674 = vmatprep.subr.mxu0 0.0
    %675 = vmatpush1.xpose.msra.mxu0 0.0
    %676 = vmatprep.subr.mxu0 0.0
    %677 = vmatpush1.xpose.msra.mxu0 0.0
    %678 = vmatprep.subr.mxu0 0.0
    %679 = vmatpush1.xpose.msra.mxu0 0.0
    %680 = vmatprep.subr.mxu0 0.0
    %681 = vmatpush1.xpose.msra.mxu0 0.0
    %682 = vmatprep.subr.mxu0 0.0
    %683 = vmatpush1.xpose.msra.mxu0 0.0
    %684 = vmatprep.subr.mxu0 0.0
    %685 = vmatpush1.xpose.msra.mxu0 0.0
    %686 = vmatprep.subr.mxu0 0.0
    %687 = vmatpush1.xpose.msra.mxu0 0.0
    %688 = vmatprep.subr.mxu0 0.0
    %689 = vmatpush1.xpose.msra.mxu0 0.0
    %690 = vmatprep.subr.mxu0 0.0
    %691 = vmatpush1.xpose.msra.mxu0 0.0
    %692 = vmatprep.subr.mxu0 0.0
    %693 = vmatpush1.xpose.msra.mxu0 0.0
    %694 = vmatprep.subr.mxu0 0.0
    %695 = vmatpush1.xpose.msra.mxu0 0.0
    %696 = vmatprep.subr.mxu0 0.0
    %697 = vmatpush1.xpose.msra.mxu0 0.0
    %698 = vmatprep.subr.mxu0 0.0
    %699 = vmatpush1.xpose.msra.mxu0 0.0
    %700 = vmatprep.subr.mxu0 0.0
    %701 = vmatpush1.xpose.msra.mxu0 0.0
    %702 = vmatprep.subr.mxu0 0.0
    %703 = vmatpush1.xpose.msra.mxu0 0.0
    %704 = vmatprep.subr.mxu0 0.0
    %705 = vmatpush1.xpose.msra.mxu0 0.0
    %706 = vmatprep.subr.mxu0 0.0
    %707 = vmatpush1.xpose.msra.mxu0 0.0
    %708 = vmatprep.subr.mxu0 0.0
    %709 = vmatpush1.xpose.msra.mxu0 0.0
    %710 = vmatprep.subr.mxu0 0.0
    %711 = vmatpush1.xpose.msra.mxu0 0.0
    %712 = vmatprep.subr.mxu0 0.0
    %713 = vmatpush1.xpose.msra.mxu0 0.0
    %714 = vmatprep.subr.mxu0 0.0
    %715 = vmatpush1.xpose.msra.mxu0 0.0
    %716 = vmatprep.subr.mxu0 0.0
    %717 = vmatpush1.xpose.msra.mxu0 0.0
    %718 = vmatprep.subr.mxu0 0.0
    %719 = vmatpush1.xpose.msra.mxu0 0.0
    %720 = vmatprep.subr.mxu0 0.0
    %721 = vmatpush1.xpose.msra.mxu0 0.0
    %722 = vmatprep.subr.mxu0 0.0
    %723 = vmatpush1.xpose.msra.mxu0 0.0
    %724 = vmatprep.subr.mxu0 0.0
    %725 = vmatpush1.xpose.msra.mxu0 0.0
    %726 = vmatprep.subr.mxu0 0.0
    %727 = vmatpush1.xpose.msra.mxu0 0.0
    %728 = vmatprep.subr.mxu0 0.0
    %729 = vmatpush1.xpose.msra.mxu0 0.0
    %730 = vmatprep.subr.mxu0 0.0
    %731 = vmatpush1.xpose.msra.mxu0 0.0
    %732 = vmatprep.subr.mxu0 0.0
    %733 = vmatpush1.xpose.msra.mxu0 0.0
    %734 = vmatprep.mubr.f32.mxu0 0.0
    %735 = vmatmul.mubr.f32.gmra.mrb[0].mxu0 %v659
    %v736 = vpop.f32.mrb[0].mxu0
    %v737 = vadd.f32 0.0, %v736
    %v738 = vpop.f32.mrb[0].mxu0
    %739 = vmatprep.mubr.f32.mxu0 0.0
    %740 = vmatmul.mubr.f32.gmra.mrb[0].mxu0 %v662
    %v741 = vpop.f32.mrb[0].mxu0
    %v742 = vadd.f32 0.0, %v741
    %v743 = vpop.f32.mrb[0].mxu0
    %744 = vdwg.mxu0
    %v745 = vmul.f32 %v737, 0.125
    %v746 = vmul.f32 %v742, 0.125
    %v747 = vsel %vm98, %v745, -inf
    %748 = vmax.xlane.f32.xlu0 %v747
    %v749 = vpop.xlane.xlu0 %748
    %v750 = vsel %vm98, %v746, -inf
    %751 = vmax.xlane.f32.xlu0 %v750
    %v752 = vpop.xlane.xlu0 %751
    %v753 = vsub.f32 %v745, %v749
    %v754 = vsub.f32 %v746, %v752
    %v755 = vmul.f32 %v753, 1.442695
    %v756 = vpow.pop %v755
    %v757 = vmul.f32 %v754, 1.442695
    %v758 = vpow.pop %v757
    %v759 = vsel %vm98, %v756, 0.0
    %760 = vadd.xlane.f32.xlu0 %v759
    %v761 = vpop.xlane.xlu0 %760
    %v762 = vsel %vm98, %v758, 0.0
    %763 = vadd.xlane.f32.xlu0 %v762
    %v764 = vpop.xlane.xlu0 %763
    %v765 = vrcp.pop %v761
    %v766 = vmul.f32 %v756, %v765
    %v767 = vrcp.pop %v764
    %v768 = vmul.f32 %v758, %v767
    %v770 = vsel %vm657, %v633, 0
    %v773 = vsel %vm657, %v638, 0
    %775 = vmatprep.subr.mxu0 0.0
    %776 = vmatpush1.msra.mxu0 %v641
    %777 = vmatprep.subr.mxu0 0.0
    %778 = vmatpush1.msra.mxu0 %v642
    %779 = vmatprep.subr.mxu0 0.0
    %780 = vmatpush1.msra.mxu0 %v643
    %781 = vmatprep.subr.mxu0 0.0
    %782 = vmatpush1.msra.mxu0 %v644
    %783 = vmatprep.subr.mxu0 0.0
    %784 = vmatpush1.msra.mxu0 %v645
    %785 = vmatprep.subr.mxu0 0.0
    %786 = vmatpush1.msra.mxu0 %v646
    %787 = vmatprep.subr.mxu0 0.0
    %788 = vmatpush1.msra.mxu0 %v647
    %789 = vmatprep.subr.mxu0 0.0
    %790 = vmatpush1.msra.mxu0 %v648
    %791 = vmatprep.subr.mxu0 0.0
    %792 = vmatpush1.msra.mxu0 0.0
    %793 = vmatprep.subr.mxu0 0.0
    %794 = vmatpush1.msra.mxu0 0.0
    %795 = vmatprep.subr.mxu0 0.0
    %796 = vmatpush1.msra.mxu0 0.0
    %797 = vmatprep.subr.mxu0 0.0
    %798 = vmatpush1.msra.mxu0 0.0
    %799 = vmatprep.subr.mxu0 0.0
    %800 = vmatpush1.msra.mxu0 0.0
    %801 = vmatprep.subr.mxu0 0.0
    %802 = vmatpush1.msra.mxu0 0.0
    %803 = vmatprep.subr.mxu0 0.0
    %804 = vmatpush1.msra.mxu0 0.0
    %805 = vmatprep.subr.mxu0 0.0
    %806 = vmatpush1.msra.mxu0 0.0
    %807 = vmatprep.subr.mxu0 0.0
    %808 = vmatpush1.msra.mxu0 0.0
    %809 = vmatprep.subr.mxu0 0.0
    %810 = vmatpush1.msra.mxu0 0.0
    %811 = vmatprep.subr.mxu0 0.0
    %812 = vmatpush1.msra.mxu0 0.0
    %813 = vmatprep.subr.mxu0 0.0
    %814 = vmatpush1.msra.mxu0 0.0
    %815 = vmatprep.subr.mxu0 0.0
    %816 = vmatpush1.msra.mxu0 0.0
    %817 = vmatprep.subr.mxu0 0.0
    %818 = vmatpush1.msra.mxu0 0.0
    %819 = vmatprep.subr.mxu0 0.0
    %820 = vmatpush1.msra.mxu0 0.0
    %821 = vmatprep.subr.mxu0 0.0
    %822 = vmatpush1.msra.mxu0 0.0
    %823 = vmatprep.subr.mxu0 0.0
    %824 = vmatpush1.msra.mxu0 0.0
    %825 = vmatprep.subr.mxu0 0.0
    %826 = vmatpush1.msra.mxu0 0.0
    %827 = vmatprep.subr.mxu0 0.0
    %828 = vmatpush1.msra.mxu0 0.0
    %829 = vmatprep.subr.mxu0 0.0
    %830 = vmatpush1.msra.mxu0 0.0
    %831 = vmatprep.subr.mxu0 0.0
    %832 = vmatpush1.msra.mxu0 0.0
    %833 = vmatprep.subr.mxu0 0.0
    %834 = vmatpush1.msra.mxu0 0.0
    %835 = vmatprep.subr.mxu0 0.0
    %836 = vmatpush1.msra.mxu0 0.0
    %837 = vmatprep.subr.mxu0 0.0
    %838 = vmatpush1.msra.mxu0 0.0
    %839 = vmatprep.mubr.f32.mxu0 0.0
    %840 = vmatmul.mubr.f32.gmra.mrb[0].mxu0 %v770
    %v841 = vpop.f32.mrb[0].mxu0
    %v842 = vadd.f32 0.0, %v841
    %v843 = vpop.f32.mrb[0].mxu0
    %844 = vmatprep.mubr.f32.mxu0 0.0
    %845 = vmatmul.mubr.f32.gmra.mrb[0].mxu0 %v773
    %v846 = vpop.f32.mrb[0].mxu0
    %v847 = vadd.f32 0.0, %v846
    %v848 = vpop.f32.mrb[0].mxu0
    %849 = vdwg.mxu0
    %850 = vrot.lane.b32.xlu0 %v461, 64
    %v851 = vpop.permute.xlu0 %850
    %852 = vrot.lane.b32.xlu0 %v466, 64
    %v853 = vpop.permute.xlu0 %852
    %854 = vrot.lane.b32.xlu0 %v547, 64
    %v855 = vpop.permute.xlu0 %854
    %856 = vrot.lane.b32.xlu0 %v552, 64
    %v857 = vpop.permute.xlu0 %856
    %v858 = vsel %vm657, %v851, 0
    %v860 = vsel %vm657, %v853, 0
    %v862 = vsel %vm657, %v855, 0
    %v864 = vsel %vm657, %v857, 0
    %866 = vmatprep.subr.mxu0 0.0
    %867 = vmatpush1.xpose.msra.mxu0 %v862
    %868 = vmatprep.subr.mxu0 0.0
    %869 = vmatpush1.xpose.msra.mxu0 %v864
    %870 = vmatprep.subr.mxu0 0.0
    %871 = vmatpush1.xpose.msra.mxu0 0.0
    %872 = vmatprep.subr.mxu0 0.0
    %873 = vmatpush1.xpose.msra.mxu0 0.0
    %874 = vmatprep.subr.mxu0 0.0
    %875 = vmatpush1.xpose.msra.mxu0 0.0
    %876 = vmatprep.subr.mxu0 0.0
    %877 = vmatpush1.xpose.msra.mxu0 0.0
    %878 = vmatprep.subr.mxu0 0.0
    %879 = vmatpush1.xpose.msra.mxu0 0.0
    %880 = vmatprep.subr.mxu0 0.0
    %881 = vmatpush1.xpose.msra.mxu0 0.0
    %882 = vmatprep.subr.mxu0 0.0
    %883 = vmatpush1.xpose.msra.mxu0 0.0
    %884 = vmatprep.subr.mxu0 0.0
    %885 = vmatpush1.xpose.msra.mxu0 0.0
    %886 = vmatprep.subr.mxu0 0.0
    %887 = vmatpush1.xpose.msra.mxu0 0.0
    %888 = vmatprep.subr.mxu0 0.0
    %889 = vmatpush1.xpose.msra.mxu0 0.0
    %890 = vmatprep.subr.mxu0 0.0
    %891 = vmatpush1.xpose.msra.mxu0 0.0
    %892 = vmatprep.subr.mxu0 0.0
    %893 = vmatpush1.xpose.msra.mxu0 0.0
    %894 = vmatprep.subr.mxu0 0.0
    %895 = vmatpush1.xpose.msra.mxu0 0.0
    %896 = vmatprep.subr.mxu0 0.0
    %897 = vmatpush1.xpose.msra.mxu0 0.0
    %898 = vmatprep.subr.mxu0 0.0
    %899 = vmatpush1.xpose.msra.mxu0 0.0
    %900 = vmatprep.subr.mxu0 0.0
    %901 = vmatpush1.xpose.msra.mxu0 0.0
    %902 = vmatprep.subr.mxu0 0.0
    %903 = vmatpush1.xpose.msra.mxu0 0.0
    %904 = vmatprep.subr.mxu0 0.0
    %905 = vmatpush1.xpose.msra.mxu0 0.0
    %906 = vmatprep.subr.mxu0 0.0
    %907 = vmatpush1.xpose.msra.mxu0 0.0
    %908 = vmatprep.subr.mxu0 0.0
    %909 = vmatpush1.xpose.msra.mxu0 0.0
    %910 = vmatprep.subr.mxu0 0.0
    %911 = vmatpush1.xpose.msra.mxu0 0.0
    %912 = vmatprep.subr.mxu0 0.0
    %913 = vmatpush1.xpose.msra.mxu0 0.0
    %914 = vmatprep.subr.mxu0 0.0
    %915 = vmatpush1.xpose.msra.mxu0 0.0
    %916 = vmatprep.subr.mxu0 0.0
    %917 = vmatpush1.xpose.msra.mxu0 0.0
    %918 = vmatprep.subr.mxu0 0.0
    %919 = vmatpush1.xpose.msra.mxu0 0.0
    %920 = vmatprep.subr.mxu0 0.0
    %921 = vmatpush1.xpose.msra.mxu0 0.0
    %922 = vmatprep.subr.mxu0 0.0
    %923 = vmatpush1.xpose.msra.mxu0 0.0
    %924 = vmatprep.subr.mxu0 0.0
    %925 = vmatpush1.xpose.msra.mxu0 0.0
    %926 = vmatprep.subr.mxu0 0.0
    %927 = vmatpush1.xpose.msra.mxu0 0.0
    %928 = vmatprep.subr.mxu0 0.0
    %929 = vmatpush1.xpose.msra.mxu0 0.0
    %930 = vmatprep.mubr.f32.mxu0 0.0
    %931 = vmatmul.mubr.f32.gmra.mrb[0].mxu0 %v858
    %v932 = vpop.f32.mrb[0].mxu0
    %v933 = vadd.f32 0.0, %v932
    %v934 = vpop.f32.mrb[0].mxu0
    %935 = vmatprep.mubr.f32.mxu0 0.0
    %936 = vmatmul.mubr.f32.gmra.mrb[0].mxu0 %v860
    %v937 = vpop.f32.mrb[0].mxu0
    %v938 = vadd.f32 0.0, %v937
    %v939 = vpop.f32.mrb[0].mxu0
    %940 = vdwg.mxu0
    %v941 = vmul.f32 %v933, 0.125
    %v942 = vmul.f32 %v938, 0.125
    %v943 = vsel %vm98, %v941, -inf
    %944 = vmax.xlane.f32.xlu0 %v943
    %v945 = vpop.xlane.xlu0 %944
    %v946 = vsel %vm98, %v942, -inf
    %947 = vmax.xlane.f32.xlu0 %v946
    %v948 = vpop.xlane.xlu0 %947
    %v949 = vsub.f32 %v941, %v945
    %v950 = vsub.f32 %v942, %v948
    %v951 = vmul.f32 %v949, 1.442695
    %v952 = vpow.pop %v951
    %v953 = vmul.f32 %v950, 1.442695
    %v954 = vpow.pop %v953
    %v955 = vsel %vm98, %v952, 0.0
    %956 = vadd.xlane.f32.xlu0 %v955
    %v957 = vpop.xlane.xlu0 %956
    %v958 = vsel %vm98, %v954, 0.0
    %959 = vadd.xlane.f32.xlu0 %v958
    %v960 = vpop.xlane.xlu0 %959
    %v961 = vrcp.pop %v957
    %v962 = vmul.f32 %v952, %v961
    %v963 = vrcp.pop %v960
    %v964 = vmul.f32 %v954, %v963
    %965 = vrot.lane.b32.xlu0 %v633, 64
    %v966 = vpop.permute.xlu0 %965
    %967 = vrot.lane.b32.xlu0 %v638, 64
    %v968 = vpop.permute.xlu0 %967
    %v969 = vsel %vm657, %v966, 0
    %v971 = vsel %vm657, %v968, 0
    %973 = vmatprep.subr.mxu0 0.0
    %974 = vmatpush1.msra.mxu0 %v649
    %975 = vmatprep.subr.mxu0 0.0
    %976 = vmatpush1.msra.mxu0 %v650
    %977 = vmatprep.subr.mxu0 0.0
    %978 = vmatpush1.msra.mxu0 %v651
    %979 = vmatprep.subr.mxu0 0.0
    %980 = vmatpush1.msra.mxu0 %v652
    %981 = vmatprep.subr.mxu0 0.0
    %982 = vmatpush1.msra.mxu0 %v653
    %983 = vmatprep.subr.mxu0 0.0
    %984 = vmatpush1.msra.mxu0 %v654
    %985 = vmatprep.subr.mxu0 0.0
    %986 = vmatpush1.msra.mxu0 %v655
    %987 = vmatprep.subr.mxu0 0.0
    %988 = vmatpush1.msra.mxu0 %v656
    %989 = vmatprep.subr.mxu0 0.0
    %990 = vmatpush1.msra.mxu0 0.0
    %991 = vmatprep.subr.mxu0 0.0
    %992 = vmatpush1.msra.mxu0 0.0
    %993 = vmatprep.subr.mxu0 0.0
    %994 = vmatpush1.msra.mxu0 0.0
    %995 = vmatprep.subr.mxu0 0.0
    %996 = vmatpush1.msra.mxu0 0.0
    %997 = vmatprep.subr.mxu0 0.0
    %998 = vmatpush1.msra.mxu0 0.0
    %999 = vmatprep.subr.mxu0 0.0
    %1000 = vmatpush1.msra.mxu0 0.0
    %1001 = vmatprep.subr.mxu0 0.0
    %1002 = vmatpush1.msra.mxu0 0.0
    %1003 = vmatprep.subr.mxu0 0.0
    %1004 = vmatpush1.msra.mxu0 0.0
    %1005 = vmatprep.subr.mxu0 0.0
    %1006 = vmatpush1.msra.mxu0 0.0
    %1007 = vmatprep.subr.mxu0 0.0
    %1008 = vmatpush1.msra.mxu0 0.0
    %1009 = vmatprep.subr.mxu0 0.0
    %1010 = vmatpush1.msra.mxu0 0.0
    %1011 = vmatprep.subr.mxu0 0.0
    %1012 = vmatpush1.msra.mxu0 0.0
    %1013 = vmatprep.subr.mxu0 0.0
    %1014 = vmatpush1.msra.mxu0 0.0
    %1015 = vmatprep.subr.mxu0 0.0
    %1016 = vmatpush1.msra.mxu0 0.0
    %1017 = vmatprep.subr.mxu0 0.0
    %1018 = vmatpush1.msra.mxu0 0.0
    %1019 = vmatprep.subr.mxu0 0.0
    %1020 = vmatpush1.msra.mxu0 0.0
    %1021 = vmatprep.subr.mxu0 0.0
    %1022 = vmatpush1.msra.mxu0 0.0
    %1023 = vmatprep.subr.mxu0 0.0
    %1024 = vmatpush1.msra.mxu0 0.0
    %1025 = vmatprep.subr.mxu0 0.0
    %1026 = vmatpush1.msra.mxu0 0.0
    %1027 = vmatprep.subr.mxu0 0.0
    %1028 = vmatpush1.msra.mxu0 0.0
    %1029 = vmatprep.subr.mxu0 0.0
    %1030 = vmatpush1.msra.mxu0 0.0
    %1031 = vmatprep.subr.mxu0 0.0
    %1032 = vmatpush1.msra.mxu0 0.0
    %1033 = vmatprep.subr.mxu0 0.0
    %1034 = vmatpush1.msra.mxu0 0.0
    %1035 = vmatprep.subr.mxu0 0.0
    %1036 = vmatpush1.msra.mxu0 0.0
    %1037 = vmatprep.mubr.f32.mxu0 0.0
    %1038 = vmatmul.mubr.f32.gmra.mrb[0].mxu0 %v969
    %v1039 = vpop.f32.mrb[0].mxu0
    %v1040 = vadd.f32 0.0, %v1039
    %v1041 = vpop.f32.mrb[0].mxu0
    %1042 = vmatprep.mubr.f32.mxu0 0.0
    %1043 = vmatmul.mubr.f32.gmra.mrb[0].mxu0 %v971
    %v1044 = vpop.f32.mrb[0].mxu0
    %v1045 = vadd.f32 0.0, %v1044
    %v1046 = vpop.f32.mrb[0].mxu0
    %1047 = vdwg.mxu0
    %v1049 = vsel %vm98, %v962, 0
    %v1052 = vsel %vm98, %v964, 0
    %1054 = vmatprep.subr.mxu0 0.0
    %1055 = vmatpush1.msra.mxu0 %v1040
    %1056 = vmatprep.subr.mxu0 0.0
    %1057 = vmatpush1.msra.mxu0 %v1045
    %1058 = vmatprep.subr.mxu0 0.0
    %1059 = vmatpush1.msra.mxu0 0.0
    %1060 = vmatprep.subr.mxu0 0.0
    %1061 = vmatpush1.msra.mxu0 0.0
    %1062 = vmatprep.subr.mxu0 0.0
    %1063 = vmatpush1.msra.mxu0 0.0
    %1064 = vmatprep.subr.mxu0 0.0
    %1065 = vmatpush1.msra.mxu0 0.0
    %1066 = vmatprep.subr.mxu0 0.0
    %1067 = vmatpush1.msra.mxu0 0.0
    %1068 = vmatprep.subr.mxu0 0.0
    %1069 = vmatpush1.msra.mxu0 0.0
    %1070 = vmatprep.subr.mxu0 0.0
    %1071 = vmatpush1.msra.mxu0 0.0
    %1072 = vmatprep.subr.mxu0 0.0
    %1073 = vmatpush1.msra.mxu0 0.0
    %1074 = vmatprep.subr.mxu0 0.0
    %1075 = vmatpush1.msra.mxu0 0.0
    %1076 = vmatprep.subr.mxu0 0.0
    %1077 = vmatpush1.msra.mxu0 0.0
    %1078 = vmatprep.subr.mxu0 0.0
    %1079 = vmatpush1.msra.mxu0 0.0
    %1080 = vmatprep.subr.mxu0 0.0
    %1081 = vmatpush1.msra.mxu0 0.0
    %1082 = vmatprep.subr.mxu0 0.0
    %1083 = vmatpush1.msra.mxu0 0.0
    %1084 = vmatprep.subr.mxu0 0.0
    %1085 = vmatpush1.msra.mxu0 0.0
    %1086 = vmatprep.subr.mxu0 0.0
    %1087 = vmatpush1.msra.mxu0 0.0
    %1088 = vmatprep.subr.mxu0 0.0
    %1089 = vmatpush1.msra.mxu0 0.0
    %1090 = vmatprep.subr.mxu0 0.0
    %1091 = vmatpush1.msra.mxu0 0.0
    %1092 = vmatprep.subr.mxu0 0.0
    %1093 = vmatpush1.msra.mxu0 0.0
    %1094 = vmatprep.subr.mxu0 0.0
    %1095 = vmatpush1.msra.mxu0 0.0
    %1096 = vmatprep.subr.mxu0 0.0
    %1097 = vmatpush1.msra.mxu0 0.0
    %1098 = vmatprep.subr.mxu0 0.0
    %1099 = vmatpush1.msra.mxu0 0.0
    %1100 = vmatprep.subr.mxu0 0.0
    %1101 = vmatpush1.msra.mxu0 0.0
    %1102 = vmatprep.subr.mxu0 0.0
    %1103 = vmatpush1.msra.mxu0 0.0
    %1104 = vmatprep.subr.mxu0 0.0
    %1105 = vmatpush1.msra.mxu0 0.0
    %1106 = vmatprep.subr.mxu0 0.0
    %1107 = vmatpush1.msra.mxu0 0.0
    %1108 = vmatprep.subr.mxu0 0.0
    %1109 = vmatpush1.msra.mxu0 0.0
    %1110 = vmatprep.subr.mxu0 0.0
    %1111 = vmatpush1.msra.mxu0 0.0
    %1112 = vmatprep.subr.mxu0 0.0
    %1113 = vmatpush1.msra.mxu0 0.0
    %1114 = vmatprep.subr.mxu0 0.0
    %1115 = vmatpush1.msra.mxu0 0.0
    %1116 = vmatprep.subr.mxu0 0.0
    %1117 = vmatpush1.msra.mxu0 0.0
    %1118 = vmatprep.mubr.f32.mxu0 0.0
    %1119 = vmatmul.mubr.f32.gmra.mrb[0].mxu0 %v1049
    %v1120 = vpop.f32.mrb[0].mxu0
    %v1121 = vadd.f32 0.0, %v1120
    %v1122 = vpop.f32.mrb[0].mxu0
    %1123 = vmatprep.mubr.f32.mxu0 0.0
    %1124 = vmatmul.mubr.f32.gmra.mrb[0].mxu0 %v1052
    %v1125 = vpop.f32.mrb[0].mxu0
    %v1126 = vadd.f32 0.0, %v1125
    %v1127 = vpop.f32.mrb[0].mxu0
    %1128 = vdwg.mxu0
    %v1130 = vsel %vm98, %v766, 0
    %v1133 = vsel %vm98, %v768, 0
    %1135 = vmatprep.subr.mxu0 0.0
    %1136 = vmatpush1.msra.mxu0 %v842
    %1137 = vmatprep.subr.mxu0 0.0
    %1138 = vmatpush1.msra.mxu0 %v847
    %1139 = vmatprep.subr.mxu0 0.0
    %1140 = vmatpush1.msra.mxu0 0.0
    %1141 = vmatprep.subr.mxu0 0.0
    %1142 = vmatpush1.msra.mxu0 0.0
    %1143 = vmatprep.subr.mxu0 0.0
    %1144 = vmatpush1.msra.mxu0 0.0
    %1145 = vmatprep.subr.mxu0 0.0
    %1146 = vmatpush1.msra.mxu0 0.0
    %1147 = vmatprep.subr.mxu0 0.0
    %1148 = vmatpush1.msra.mxu0 0.0
    %1149 = vmatprep.subr.mxu0 0.0
    %1150 = vmatpush1.msra.mxu0 0.0
    %1151 = vmatprep.subr.mxu0 0.0
    %1152 = vmatpush1.msra.mxu0 0.0
    %1153 = vmatprep.subr.mxu0 0.0
    %1154 = vmatpush1.msra.mxu0 0.0
    %1155 = vmatprep.subr.mxu0 0.0
    %1156 = vmatpush1.msra.mxu0 0.0
    %1157 = vmatprep.subr.mxu0 0.0
    %1158 = vmatpush1.msra.mxu0 0.0
    %1159 = vmatprep.subr.mxu0 0.0
    %1160 = vmatpush1.msra.mxu0 0.0
    %1161 = vmatprep.subr.mxu0 0.0
    %1162 = vmatpush1.msra.mxu0 0.0
    %1163 = vmatprep.subr.mxu0 0.0
    %1164 = vmatpush1.msra.mxu0 0.0
    %1165 = vmatprep.subr.mxu0 0.0
    %1166 = vmatpush1.msra.mxu0 0.0
    %1167 = vmatprep.subr.mxu0 0.0
    %1168 = vmatpush1.msra.mxu0 0.0
    %1169 = vmatprep.subr.mxu0 0.0
    %1170 = vmatpush1.msra.mxu0 0.0
    %1171 = vmatprep.subr.mxu0 0.0
    %1172 = vmatpush1.msra.mxu0 0.0
    %1173 = vmatprep.subr.mxu0 0.0
    %1174 = vmatpush1.msra.mxu0 0.0
    %1175 = vmatprep.subr.mxu0 0.0
    %1176 = vmatpush1.msra.mxu0 0.0
    %1177 = vmatprep.subr.mxu0 0.0
    %1178 = vmatpush1.msra.mxu0 0.0
    %1179 = vmatprep.subr.mxu0 0.0
    %1180 = vmatpush1.msra.mxu0 0.0
    %1181 = vmatprep.subr.mxu0 0.0
    %1182 = vmatpush1.msra.mxu0 0.0
    %1183 = vmatprep.subr.mxu0 0.0
    %1184 = vmatpush1.msra.mxu0 0.0
    %1185 = vmatprep.subr.mxu0 0.0
    %1186 = vmatpush1.msra.mxu0 0.0
    %1187 = vmatprep.subr.mxu0 0.0
    %1188 = vmatpush1.msra.mxu0 0.0
    %1189 = vmatprep.subr.mxu0 0.0
    %1190 = vmatpush1.msra.mxu0 0.0
    %1191 = vmatprep.subr.mxu0 0.0
    %1192 = vmatpush1.msra.mxu0 0.0
    %1193 = vmatprep.subr.mxu0 0.0
    %1194 = vmatpush1.msra.mxu0 0.0
    %1195 = vmatprep.subr.mxu0 0.0
    %1196 = vmatpush1.msra.mxu0 0.0
    %1197 = vmatprep.subr.mxu0 0.0
    %1198 = vmatpush1.msra.mxu0 0.0
    %1199 = vmatprep.mubr.f32.mxu0 0.0
    %1200 = vmatmul.mubr.f32.gmra.mrb[0].mxu0 %v1130
    %v1201 = vpop.f32.mrb[0].mxu0
    %v1202 = vadd.f32 %v1121, %v1201
    %v1203 = vpop.f32.mrb[0].mxu0
    %1204 = vmatprep.mubr.f32.mxu0 0.0
    %1205 = vmatmul.mubr.f32.gmra.mrb[0].mxu0 %v1133
    %v1206 = vpop.f32.mrb[0].mxu0
    %v1207 = vadd.f32 %v1126, %v1206
    %v1208 = vpop.f32.mrb[0].mxu0
    %1209 = vdwg.mxu0
    %v1210 = vld [vmem:[#allocation2] sm:$0x1]
    %v1212 = vlaneseq
    %v1213 = vshrl.u32 %v1212, 7
    %v1214 = vsub.s32 0, %v1213
    %v1215 = vrot.slane %v1210, %v1214
    %v1217 = vadd.f32 %v1202, %v1215
    %v1218 = vadd.f32 %v1207, %v1215
    %v1220 = vsel %vm98, %v88, 0
    %v1223 = vsel %vm98, %v89, 0
    %v1226 = vsel %vm98, %v94, 0
    %v1229 = vsel %vm98, %v95, 0
    %1231 = vmatprep.subr.mxu0 0.0
    %1232 = vmatpush1.xpose.msra.mxu0 %v1226
    %1233 = vmatprep.subr.mxu0 0.0
    %1234 = vmatpush1.xpose.msra.mxu0 %v1229
    %1235 = vmatprep.subr.mxu0 0.0
    %1236 = vmatpush1.xpose.msra.mxu0 0.0
    %1237 = vmatprep.subr.mxu0 0.0
    %1238 = vmatpush1.xpose.msra.mxu0 0.0
    %1239 = vmatprep.subr.mxu0 0.0
    %1240 = vmatpush1.xpose.msra.mxu0 0.0
    %1241 = vmatprep.subr.mxu0 0.0
    %1242 = vmatpush1.xpose.msra.mxu0 0.0
    %1243 = vmatprep.subr.mxu0 0.0
    %1244 = vmatpush1.xpose.msra.mxu0 0.0
    %1245 = vmatprep.subr.mxu0 0.0
    %1246 = vmatpush1.xpose.msra.mxu0 0.0
    %1247 = vmatprep.subr.mxu0 0.0
    %1248 = vmatpush1.xpose.msra.mxu0 0.0
    %1249 = vmatprep.subr.mxu0 0.0
    %1250 = vmatpush1.xpose.msra.mxu0 0.0
    %1251 = vmatprep.subr.mxu0 0.0
    %1252 = vmatpush1.xpose.msra.mxu0 0.0
    %1253 = vmatprep.subr.mxu0 0.0
    %1254 = vmatpush1.xpose.msra.mxu0 0.0
    %1255 = vmatprep.subr.mxu0 0.0
    %1256 = vmatpush1.xpose.msra.mxu0 0.0
    %1257 = vmatprep.subr.mxu0 0.0
    %1258 = vmatpush1.xpose.msra.mxu0 0.0
    %1259 = vmatprep.subr.mxu0 0.0
    %1260 = vmatpush1.xpose.msra.mxu0 0.0
    %1261 = vmatprep.subr.mxu0 0.0
    %1262 = vmatpush1.xpose.msra.mxu0 0.0
    %1263 = vmatprep.subr.mxu0 0.0
    %1264 = vmatpush1.xpose.msra.mxu0 0.0
    %1265 = vmatprep.subr.mxu0 0.0
    %1266 = vmatpush1.xpose.msra.mxu0 0.0
    %1267 = vmatprep.subr.mxu0 0.0
    %1268 = vmatpush1.xpose.msra.mxu0 0.0
    %1269 = vmatprep.subr.mxu0 0.0
    %1270 = vmatpush1.xpose.msra.mxu0 0.0
    %1271 = vmatprep.subr.mxu0 0.0
    %1272 = vmatpush1.xpose.msra.mxu0 0.0
    %1273 = vmatprep.subr.mxu0 0.0
    %1274 = vmatpush1.xpose.msra.mxu0 0.0
    %1275 = vmatprep.subr.mxu0 0.0
    %1276 = vmatpush1.xpose.msra.mxu0 0.0
    %1277 = vmatprep.subr.mxu0 0.0
    %1278 = vmatpush1.xpose.msra.mxu0 0.0
    %1279 = vmatprep.subr.mxu0 0.0
    %1280 = vmatpush1.xpose.msra.mxu0 0.0
    %1281 = vmatprep.subr.mxu0 0.0
    %1282 = vmatpush1.xpose.msra.mxu0 0.0
    %1283 = vmatprep.subr.mxu0 0.0
    %1284 = vmatpush1.xpose.msra.mxu0 0.0
    %1285 = vmatprep.subr.mxu0 0.0
    %1286 = vmatpush1.xpose.msra.mxu0 0.0
    %1287 = vmatprep.subr.mxu0 0.0
    %1288 = vmatpush1.xpose.msra.mxu0 0.0
    %1289 = vmatprep.subr.mxu0 0.0
    %1290 = vmatpush1.xpose.msra.mxu0 0.0
    %1291 = vmatprep.subr.mxu0 0.0
    %1292 = vmatpush1.xpose.msra.mxu0 0.0
    %1293 = vmatprep.subr.mxu0 0.0
    %1294 = vmatpush1.xpose.msra.mxu0 0.0
    %1295 = vmatprep.mubr.f32.mxu0 0.0
    %1296 = vmatmul.mubr.f32.gmra.mrb[0].mxu0 %v1220
    %v1297 = vpop.f32.mrb[0].mxu0
    %v1298 = vadd.f32 0.0, %v1297
    %v1299 = vpop.f32.mrb[0].mxu0
    %1300 = vmatprep.mubr.f32.mxu0 0.0
    %1301 = vmatmul.mubr.f32.gmra.mrb[0].mxu0 %v1223
    %v1302 = vpop.f32.mrb[0].mxu0
    %v1303 = vadd.f32 0.0, %v1302
    %v1304 = vpop.f32.mrb[0].mxu0
    %1305 = vdwg.mxu0
    %v1306 = vmax.f32 %v94, %v1298
    %v1307 = vmax.f32 %v95, %v1303
    %v1308 = vsel %vm98, %v1306, 0.0
    %1309 = vadd.xlane.f32.xlu0 %v1308
    %v1310 = vpop.xlane.xlu0 %1309
    %v1311 = vsel %vm98, %v1307, 0.0
    %1312 = vadd.xlane.f32.xlu0 %v1311
    %v1313 = vpop.xlane.xlu0 %1312
    %v1314 = vrcp.pop 15.0
    %v1315 = vmul.f32 %v1310, %v1314
    %v1316 = vmul.f32 %v1313, %v1314
    %v1317 = vxor.u32 %v1217, 2147483648
    %v1318 = vxor.u32 %v1218, 2147483648
    %v1319 = vmul.f32 %v1317, 1.442695
    %v1320 = vpow.pop %v1319
    %v1321 = vmul.f32 %v1318, 1.442695
    %v1322 = vpow.pop %v1321
    %v1323 = vadd.f32 %v1320, 1.0
    %v1324 = vadd.f32 %v1322, 1.0
    %v1325 = vrcp.pop %v1323
    %v1326 = vmul.f32 1.0, %v1325
    %v1327 = vrcp.pop %v1324
    %v1328 = vmul.f32 1.0, %v1327
    %v1329 = vxor.u32 %v1315, 2147483648
    %v1330 = vxor.u32 %v1316, 2147483648
    %v1331 = vmul.f32 %v1329, 1.442695
    %v1332 = vpow.pop %v1331
    %v1333 = vmul.f32 %v1330, 1.442695
    %v1334 = vpow.pop %v1333
    %v1335 = vadd.f32 %v1332, 1.0
    %v1336 = vadd.f32 %v1334, 1.0
    %v1337 = vrcp.pop %v1335
    %v1338 = vmul.f32 1.0, %v1337
    %v1339 = vrcp.pop %v1336
    %v1340 = vmul.f32 1.0, %v1339
    %v1341 = vand.u32 2147483647, %v1326
    %v1342 = vand.u32 2147483647, %v1328
    %vm1343 = vcmask 7168
    %v1344 = vsel %vm1343, %v1341, -inf
    %v1345 = vsel %vm1343, %v1342, -inf
    %v1346 = vmax.f32 %v1344, %v1345
    %v1347 = vrot.slane %v1346, 4
    %v1348 = vmax.f32 %v1346, %v1347
    %v1349 = vrot.slane %v1348, 2
    %v1350 = vmax.f32 %v1348, %v1349
    %v1351 = vrot.slane %v1350, 1
    %v1352 = vmax.f32 %v1350, %v1351
    %v1353 = vrcp.pop %v1352
    %v1354 = vmul.f32 %v1326, %v1353
    %v1355 = vmul.f32 %v1328, %v1353
    %v1356 = vand.u32 2147483647, %v1338
    %v1357 = vand.u32 2147483647, %v1340
    %v1358 = vmax.f32 %v1356, %v1357
    %v1359 = vrot.slane %v1358, 4
    %v1360 = vmax.f32 %v1358, %v1359
    %v1361 = vrot.slane %v1360, 2
    %v1362 = vmax.f32 %v1360, %v1361
    %v1363 = vrot.slane %v1362, 1
    %v1364 = vmax.f32 %v1362, %v1363
    %v1365 = vrcp.pop %v1364
    %v1366 = vmul.f32 %v1338, %v1365
    %v1367 = vmul.f32 %v1340, %v1365
    %s1368 = sld [smem:[#allocation3]]
    %v1369 = vstv %s1368
    %v1370 = vmul.f32 %v1354, %v1369
    %v1371 = vmul.f32 %v1355, %v1369
    %s1372 = sld [smem:[#allocation3 + $0x80]]
    %v1373 = vstv %s1372
    %v1374 = vmul.f32 %v1366, %v1373
    %v1375 = vmul.f32 %v1367, %v1373
    %v1376 = vadd.f32 %v1370, %v1374
    %v1377 = vadd.f32 %v1371, %v1375
    %s1378 = sld [smem:[#allocation5]]
    %v1379 = vstv %s1378
    %v1380 = vadd.f32 %v1376, %v1379
    %v1381 = vadd.f32 %v1377, %v1379
    %v1382 = vxor.u32 %v1380, 2147483648
    %v1383 = vxor.u32 %v1381, 2147483648
    %v1384 = vmul.f32 %v1382, 1.442695
    %v1385 = vpow.pop %v1384
    %v1386 = vmul.f32 %v1383, 1.442695
    %v1387 = vpow.pop %v1386
    %v1388 = vadd.f32 %v1385, 1.0
    %v1389 = vadd.f32 %v1387, 1.0
    %v1390 = vrcp.pop %v1388
    %v1391 = vmul.f32 1.0, %v1390
    %v1392 = vrcp.pop %v1389
    %v1393 = vmul.f32 1.0, %v1392
    %s1394 = sld [smem:[#allocation3 + $0x1]]
    %v1395 = vstv %s1394
    %v1396 = vmul.f32 %v1354, %v1395
    %v1397 = vmul.f32 %v1355, %v1395
    %s1398 = sld [smem:[#allocation3 + $0x81]]
    %v1399 = vstv %s1398
    %v1400 = vmul.f32 %v1366, %v1399
    %v1401 = vmul.f32 %v1367, %v1399
    %v1402 = vadd.f32 %v1396, %v1400
    %v1403 = vadd.f32 %v1397, %v1401
    %s1404 = sld [smem:[#allocation5 + $0x1]]
    %v1405 = vstv %s1404
    %v1406 = vadd.f32 %v1402, %v1405
    %v1407 = vadd.f32 %v1403, %v1405
    %v1408 = vxor.u32 %v1406, 2147483648
    %v1409 = vxor.u32 %v1407, 2147483648
    %v1410 = vmul.f32 %v1408, 1.442695
    %v1411 = vpow.pop %v1410
    %v1412 = vmul.f32 %v1409, 1.442695
    %v1413 = vpow.pop %v1412
    %v1414 = vadd.f32 %v1411, 1.0
    %v1415 = vadd.f32 %v1413, 1.0
    %v1416 = vrcp.pop %v1414
    %v1417 = vmul.f32 1.0, %v1416
    %v1418 = vrcp.pop %v1415
    %v1419 = vmul.f32 1.0, %v1418
    %v1420 = vmax.f32 %v1391, %v1417
    %v1421 = vmax.f32 %v1393, %v1419
    %v1422 = vsub.f32 %v1391, %v1420
    %v1423 = vsub.f32 %v1393, %v1421
    %v1424 = vmul.f32 %v1422, 1.442695
    %v1425 = vpow.pop %v1424
    %v1426 = vmul.f32 %v1423, 1.442695
    %v1427 = vpow.pop %v1426
    %v1428 = vsub.f32 %v1417, %v1420
    %v1429 = vsub.f32 %v1419, %v1421
    %v1430 = vmul.f32 %v1428, 1.442695
    %v1431 = vpow.pop %v1430
    %v1432 = vmul.f32 %v1429, 1.442695
    %v1433 = vpow.pop %v1432
    %v1434 = vadd.f32 %v1425, %v1431
    %v1435 = vadd.f32 %v1427, %v1433
    %v1436 = vrcp.pop %v1434
    %v1437 = vmul.f32 %v1425, %v1436
    %v1438 = vrcp.pop %v1435
    %v1439 = vmul.f32 %v1427, %v1438
    %v1440 = vmul.f32 %v1354, %v1437
    %v1441 = vmul.f32 %v1355, %v1439
    %v1442 = vmul.f32 %v1431, %v1436
    %v1443 = vmul.f32 %v1433, %v1438
    %v1444 = vmul.f32 %v1366, %v1442
    %v1445 = vmul.f32 %v1367, %v1443
    %v1446 = vadd.f32 %v1440, %v1444
    %v1447 = vadd.f32 %v1441, %v1445
    %v1448 = vxor.u32 %v1446, 2147483648
    %v1449 = vxor.u32 %v1447, 2147483648
    %v1450 = vmul.f32 %v1448, 1.442695
    %v1451 = vpow.pop %v1450
    %v1452 = vmul.f32 %v1449, 1.442695
    %v1453 = vpow.pop %v1452
    %v1454 = vadd.f32 %v1451, 1.0
    %v1455 = vadd.f32 %v1453, 1.0
    %v1456 = vrcp.pop %v1454
    %v1457 = vmul.f32 1.0, %v1456
    %v1458 = vrcp.pop %v1455
    %v1459 = vmul.f32 1.0, %v1458
    %v1460 = vsel %vm1343, 1.0, 0
    %v1463 = vsel %vm1343, %v1457, 0
    %v1466 = vsel %vm1343, %v1459, 0
    %1468 = vmatprep.subr.mxu0 0.0
    %1469 = vmatpush1.xpose.msra.mxu0 %v1463
    %1470 = vmatprep.subr.mxu0 0.0
    %1471 = vmatpush1.xpose.msra.mxu0 %v1466
    %1472 = vmatprep.subr.mxu0 0.0
    %1473 = vmatpush1.xpose.msra.mxu0 0.0
    %1474 = vmatprep.subr.mxu0 0.0
    %1475 = vmatpush1.xpose.msra.mxu0 0.0
    %1476 = vmatprep.subr.mxu0 0.0
    %1477 = vmatpush1.xpose.msra.mxu0 0.0
    %1478 = vmatprep.subr.mxu0 0.0
    %1479 = vmatpush1.xpose.msra.mxu0 0.0
    %1480 = vmatprep.subr.mxu0 0.0
    %1481 = vmatpush1.xpose.msra.mxu0 0.0
    %1482 = vmatprep.subr.mxu0 0.0
    %1483 = vmatpush1.xpose.msra.mxu0 0.0
    %1484 = vmatprep.subr.mxu0 0.0
    %1485 = vmatpush1.xpose.msra.mxu0 0.0
    %1486 = vmatprep.subr.mxu0 0.0
    %1487 = vmatpush1.xpose.msra.mxu0 0.0
    %1488 = vmatprep.subr.mxu0 0.0
    %1489 = vmatpush1.xpose.msra.mxu0 0.0
    %1490 = vmatprep.subr.mxu0 0.0
    %1491 = vmatpush1.xpose.msra.mxu0 0.0
    %1492 = vmatprep.subr.mxu0 0.0
    %1493 = vmatpush1.xpose.msra.mxu0 0.0
    %1494 = vmatprep.subr.mxu0 0.0
    %1495 = vmatpush1.xpose.msra.mxu0 0.0
    %1496 = vmatprep.subr.mxu0 0.0
    %1497 = vmatpush1.xpose.msra.mxu0 0.0
    %1498 = vmatprep.subr.mxu0 0.0
    %1499 = vmatpush1.xpose.msra.mxu0 0.0
    %1500 = vmatprep.subr.mxu0 0.0
    %1501 = vmatpush1.xpose.msra.mxu0 0.0
    %1502 = vmatprep.subr.mxu0 0.0
    %1503 = vmatpush1.xpose.msra.mxu0 0.0
    %1504 = vmatprep.subr.mxu0 0.0
    %1505 = vmatpush1.xpose.msra.mxu0 0.0
    %1506 = vmatprep.subr.mxu0 0.0
    %1507 = vmatpush1.xpose.msra.mxu0 0.0
    %1508 = vmatprep.subr.mxu0 0.0
    %1509 = vmatpush1.xpose.msra.mxu0 0.0
    %1510 = vmatprep.subr.mxu0 0.0
    %1511 = vmatpush1.xpose.msra.mxu0 0.0
    %1512 = vmatprep.subr.mxu0 0.0
    %1513 = vmatpush1.xpose.msra.mxu0 0.0
    %1514 = vmatprep.subr.mxu0 0.0
    %1515 = vmatpush1.xpose.msra.mxu0 0.0
    %1516 = vmatprep.subr.mxu0 0.0
    %1517 = vmatpush1.xpose.msra.mxu0 0.0
    %1518 = vmatprep.subr.mxu0 0.0
    %1519 = vmatpush1.xpose.msra.mxu0 0.0
    %1520 = vmatprep.subr.mxu0 0.0
    %1521 = vmatpush1.xpose.msra.mxu0 0.0
    %1522 = vmatprep.subr.mxu0 0.0
    %1523 = vmatpush1.xpose.msra.mxu0 0.0
    %1524 = vmatprep.subr.mxu0 0.0
    %1525 = vmatpush1.xpose.msra.mxu0 0.0
    %1526 = vmatprep.subr.mxu0 0.0
    %1527 = vmatpush1.xpose.msra.mxu0 0.0
    %1528 = vmatprep.subr.mxu0 0.0
    %1529 = vmatpush1.xpose.msra.mxu0 0.0
    %1530 = vmatprep.subr.mxu0 0.0
    %1531 = vmatpush1.xpose.msra.mxu0 0.0
    %1532 = vmatprep.mubr.f32.mxu0 0.0
    %1533 = vmatmul.mubr.f32.gmra.mrb[0].mxu0 %v1460
    %v1534 = vpop.f32.mrb[0].mxu0
    %v1535 = vadd.f32 0.0, %v1534
    %v1536 = vpop.f32.mrb[0].mxu0
    %1537 = vdwg.mxu0
    %vm1538 = vcmask 122880
    %1539 = vst.msk [vmem:[%s16] sm:$0x1] %vm1538, %v1535
    // Predicated region
    $region66: #{edmd_pool_forward.7} parent=1 // pred_check
      _
    $region67: #{edmd_pool_forward.7} parent=1 // pred_check_branch
      %1541 = sbr.rel (0) target = $region69
    $region68: #{edmd_pool_forward.7} parent=1 // pred_region
      _
    $region69: #{edmd_pool_forward.7} parent=1 // pred_fallthru
      _
    // Predicated region
    $region70: #{edmd_pool_forward.7} parent=1 // pred_check
      _
    $region71: #{edmd_pool_forward.7} parent=1 // pred_check_branch
      %1543 = sbr.rel (0) target = $region73
    $region72: #{edmd_pool_forward.7} parent=1 // pred_region
      _
    $region73: #{edmd_pool_forward.7} parent=1 // pred_fallthru
      _
    // Predicated region
    $region74: #{edmd_pool_forward.7} parent=1 // pred_check
      _
    $region75: #{edmd_pool_forward.7} parent=1 // pred_check_branch
      %1545 = sbr.rel (0) target = $region77
    $region76: #{edmd_pool_forward.7} parent=1 // pred_region
      _
    $region77: #{edmd_pool_forward.7} parent=1 // pred_fallthru
      _
    // Predicated region
    $region78: #{edmd_pool_forward.7} parent=1 // pred_check
      _
    $region79: #{edmd_pool_forward.7} parent=1 // pred_check_branch
      %1547 = sbr.rel (0) target = $region81
    $region80: #{edmd_pool_forward.7} parent=1 // pred_region
      _
    $region81: #{edmd_pool_forward.7} parent=1 // pred_fallthru
      _
    // Predicated region
    $region82: #{edmd_pool_forward.7} parent=1 // pred_check
      _
    $region83: #{edmd_pool_forward.7} parent=1 // pred_check_branch
      %1549 = sbr.rel (0) target = $region85
    $region84: #{edmd_pool_forward.7} parent=1 // pred_region
      _
    $region85: #{edmd_pool_forward.7} parent=1 // pred_fallthru
      _
    // Predicated region
    $region86: #{edmd_pool_forward.7} parent=1 // pred_check
      _
    $region87: #{edmd_pool_forward.7} parent=1 // pred_check_branch
      %1551 = sbr.rel (0) target = $region89
    $region88: #{edmd_pool_forward.7} parent=1 // pred_region
      _
    $region89: #{edmd_pool_forward.7} parent=1 // pred_fallthru
      _
    %1552 = vsyncpa [#allocation4], 1
    %1553 = vsyncpa [#allocation6], 1

// kernel: edmd_pool_forward.9
$region0: #{edmd_pool_forward.9}
  #allocation0 [shape = 'u32[]', space=smem, size = 0x4, offset = 0x4, fixed_abs, tag = 'smem constant byte address 0x4 - core index']
  #allocation1 [shape = 'u32[144,128]{1,0:T(1,128)}', space=vmem, size = 0x12000, scoped, tag = 'internal scratch']
  #allocation2 [shape = 'f32[1,1]{1,0:T(1,128)S(1)}', space=vmem, size = 0x200, scoped, tag = 'scoped memory for edmd_pool_forward.9']
  %s0 = inlined_call_operand.vmem [shape: f32[12,12], index: 0, kind: input, shape index: {}]
  %s1 = inlined_call_operand.vmem [shape: f32[12,32], index: 1, kind: input, shape index: {}]
  %s2 = inlined_call_operand.vmem [shape: f32[32,32], index: 2, kind: input, shape index: {}]
  %s3 = inlined_call_operand.vmem [shape: f32[1,32], index: 3, kind: input, shape index: {}]
  %s4 = inlined_call_operand.vmem [shape: f32[32,128], index: 4, kind: input, shape index: {}]
  %s5 = inlined_call_operand.vmem [shape: f32[1,128], index: 5, kind: input, shape index: {}]
  %s6 = inlined_call_operand.vmem [shape: f32[32,128], index: 6, kind: input, shape index: {}]
  %s7 = inlined_call_operand.vmem [shape: f32[1,128], index: 7, kind: input, shape index: {}]
  %s8 = inlined_call_operand.vmem [shape: f32[32,128], index: 8, kind: input, shape index: {}]
  %s9 = inlined_call_operand.vmem [shape: f32[1,128], index: 9, kind: input, shape index: {}]
  %s10 = inlined_call_operand.vmem [shape: f32[128,1], index: 10, kind: input, shape index: {}]
  %s11 = inlined_call_operand.<no memory space> [shape: f32[1,1], index: 11, kind: input, shape index: {}]
  %s12 = inlined_call_operand.vmem [shape: f32[2,2], index: 12, kind: input, shape index: {}]
  %s13 = inlined_call_operand.vmem [shape: f32[2], index: 13, kind: input, shape index: {}]
  %s14 = inlined_call_operand.vmem [shape: f32[12,32], index: 14, kind: output, shape index: {0}]
  %s15 = inlined_call_operand.vmem [shape: f32[12,12], index: 15, kind: output, shape index: {1}]
  %s16 = inlined_call_operand.vmem [shape: f32[1,12], index: 16, kind: output, shape index: {2}]
  %17 = xla_tuple %s14, %s15, %s16
  %s18 = sld [smem:[#allocation0]]
  $region90: #{edmd_pool_forward.9} parent=0
    _
  %s20 = ssub.s32 1, %s18
  %s21 = scalar_select 0, %s20, %s18
  %v22 = vstv %s11
  %23 = vst [vmem:[#allocation2] sm:$0x1] %v22
  $region1: #{edmd_pool_forward.9} parent=0
    #allocation3 [shape = 'u8[1024]{0}', space=smem, size = 0x400, scoped, tag = 'input window, operand 12, single buffered']
    #allocation4 [shape = 's32[1]{0}', space=sflag, size = 0x4, scoped, tag = 'scoped memory for edmd_pool_forward.9']
    #allocation5 [shape = 'u8[512]{0}', space=smem, size = 0x200, scoped, tag = 'input window, operand 13, single buffered']
    #allocation6 [shape = 's32[1]{0}', space=sflag, size = 0x4, scoped, tag = 'scoped memory for edmd_pool_forward.9']
    %24 = vsyncpa [#allocation4], 0
    %25 = vsyncpa [#allocation6], 0
    // Predicated region
    $region2: #{edmd_pool_forward.9} parent=1 // pred_check
      _
    $region3: #{edmd_pool_forward.9} parent=1 // pred_check_branch
      %27 = sbr.rel (0) target = $region5
    $region4: #{edmd_pool_forward.9} parent=1 // pred_region
      _
    $region5: #{edmd_pool_forward.9} parent=1 // pred_fallthru
      _
    // Predicated region
    $region6: #{edmd_pool_forward.9} parent=1 // pred_check
      _
    $region7: #{edmd_pool_forward.9} parent=1 // pred_check_branch
      %29 = sbr.rel (0) target = $region9
    $region8: #{edmd_pool_forward.9} parent=1 // pred_region
      _
    $region9: #{edmd_pool_forward.9} parent=1 // pred_fallthru
      _
    // Predicated region
    $region10: #{edmd_pool_forward.9} parent=1 // pred_check
      _
    $region11: #{edmd_pool_forward.9} parent=1 // pred_check_branch
      %31 = sbr.rel (0) target = $region13
    $region12: #{edmd_pool_forward.9} parent=1 // pred_region
      _
    $region13: #{edmd_pool_forward.9} parent=1 // pred_fallthru
      _
    // Predicated region
    $region14: #{edmd_pool_forward.9} parent=1 // pred_check
      _
    $region15: #{edmd_pool_forward.9} parent=1 // pred_check_branch
      %33 = sbr.rel (0) target = $region17
    $region16: #{edmd_pool_forward.9} parent=1 // pred_region
      _
    $region17: #{edmd_pool_forward.9} parent=1 // pred_fallthru
      _
    // Predicated region
    $region18: #{edmd_pool_forward.9} parent=1 // pred_check
      _
    $region19: #{edmd_pool_forward.9} parent=1 // pred_check_branch
      %35 = sbr.rel (0) target = $region21
    $region20: #{edmd_pool_forward.9} parent=1 // pred_region
      _
    $region21: #{edmd_pool_forward.9} parent=1 // pred_fallthru
      _
    // Predicated region
    $region22: #{edmd_pool_forward.9} parent=1 // pred_check
      _
    $region23: #{edmd_pool_forward.9} parent=1 // pred_check_branch
      %37 = sbr.rel (0) target = $region25
    $region24: #{edmd_pool_forward.9} parent=1 // pred_region
      _
    $region25: #{edmd_pool_forward.9} parent=1 // pred_fallthru
      _
    // Predicated region
    $region26: #{edmd_pool_forward.9} parent=1 // pred_check
      _
    $region27: #{edmd_pool_forward.9} parent=1 // pred_check_branch
      %39 = sbr.rel (0) target = $region29
    $region28: #{edmd_pool_forward.9} parent=1 // pred_region
      _
    $region29: #{edmd_pool_forward.9} parent=1 // pred_fallthru
      _
    // Predicated region
    $region30: #{edmd_pool_forward.9} parent=1 // pred_check
      _
    $region31: #{edmd_pool_forward.9} parent=1 // pred_check_branch
      %41 = sbr.rel (0) target = $region33
    $region32: #{edmd_pool_forward.9} parent=1 // pred_region
      _
    $region33: #{edmd_pool_forward.9} parent=1 // pred_fallthru
      _
    // Predicated region
    $region34: #{edmd_pool_forward.9} parent=1 // pred_check
      _
    $region35: #{edmd_pool_forward.9} parent=1 // pred_check_branch
      %43 = sbr.rel (0) target = $region37
    $region36: #{edmd_pool_forward.9} parent=1 // pred_region
      _
    $region37: #{edmd_pool_forward.9} parent=1 // pred_fallthru
      _
    // Predicated region
    $region38: #{edmd_pool_forward.9} parent=1 // pred_check
      _
    $region39: #{edmd_pool_forward.9} parent=1 // pred_check_branch
      %45 = sbr.rel (0) target = $region41
    $region40: #{edmd_pool_forward.9} parent=1 // pred_region
      _
    $region41: #{edmd_pool_forward.9} parent=1 // pred_fallthru
      _
    // Predicated region
    $region42: #{edmd_pool_forward.9} parent=1 // pred_check
      _
    $region43: #{edmd_pool_forward.9} parent=1 // pred_check_branch
      %47 = sbr.rel (0) target = $region45
    $region44: #{edmd_pool_forward.9} parent=1 // pred_region
      _
    $region45: #{edmd_pool_forward.9} parent=1 // pred_fallthru
      _
    // Predicated region
    $region46: #{edmd_pool_forward.9} parent=1 // pred_check
      _
    $region47: #{edmd_pool_forward.9} parent=1 // pred_check_branch
      %49 = sbr.rel (0) target = $region49
    $region48: #{edmd_pool_forward.9} parent=1 // pred_region
      _
    $region49: #{edmd_pool_forward.9} parent=1 // pred_fallthru
      _
    // Predicated region
    $region50: #{edmd_pool_forward.9} parent=1 // pred_check
      _
    $region51: #{edmd_pool_forward.9} parent=1 // pred_check_branch
      %51 = sbr.rel (0) target = $region53
    $region52: #{edmd_pool_forward.9} parent=1 // pred_region
      %s53 = ssub.s32 32, 32
      %54 = vsyncadd [#allocation4], %s53
      %s56 = sshll.u32 %s12, 4
      %s57 = int_to_ptr.vmem [resolvable:$true] %s56
      %59 = dma.vmem_to_smem %s57, 32, [#allocation3], [#allocation4]
    $region53: #{edmd_pool_forward.9} parent=1 // pred_fallthru
      _
    // Predicated region
    $region54: #{edmd_pool_forward.9} parent=1 // pred_check
      _
    $region55: #{edmd_pool_forward.9} parent=1 // pred_check_branch
      %61 = sbr.rel (0) target = $region57
    $region56: #{edmd_pool_forward.9} parent=1 // pred_region
      %s63 = ssub.s32 16, 16
      %64 = vsyncadd [#allocation6], %s63
      %s66 = sshll.u32 %s13, 4
      %s67 = int_to_ptr.vmem [resolvable:$true] %s66
      %69 = dma.vmem_to_smem %s67, 16, [#allocation5], [#allocation6]
    $region57: #{edmd_pool_forward.9} parent=1 // pred_fallthru
      _
    // Predicated region
    $region58: #{edmd_pool_forward.9} parent=1 // pred_check
      _
    $region59: #{edmd_pool_forward.9} parent=1 // pred_check_branch
      %71 = sbr.rel (0) target = $region61
    $region60: #{edmd_pool_forward.9} parent=1 // pred_region
      %72 = dma.done [#allocation4], 32
    $region61: #{edmd_pool_forward.9} parent=1 // pred_fallthru
      _
    // Predicated region
    $region62: #{edmd_pool_forward.9} parent=1 // pred_check
      _
    $region63: #{edmd_pool_forward.9} parent=1 // pred_check_branch
      %74 = sbr.rel (0) target = $region65
    $region64: #{edmd_pool_forward.9} parent=1 // pred_region
      %75 = dma.done [#allocation6], 16
    $region65: #{edmd_pool_forward.9} parent=1 // pred_fallthru
      _
    %76 = sfence
    %v77 = vld [vmem:[%s0] sm:$0xff]
    %v78 = vld [vmem:[%s0 + $0x8] sm:$0xf]
    %v79 = vlaneseq
    %v80 = vshrl.u32 %v79, 7
    %v81 = vadd.s32 %v80, 8
    %v82 = vlaneseq
    %v83 = vand.u32 %v82, 127
    %vm84 = vcmp.eq.s32.totalorder %v80, %v83
    %vm85 = vcmp.eq.s32.totalorder %v81, %v83
    %v86 = vsel %vm84, 1, 0
    %v87 = vsel %vm85, 1, 0
    %v88 = vcvt.s32.f32 %v86
    %v89 = vcvt.s32.f32 %v87
    %vm90 = vcmp.ne.f32.partialorder %v77, 0.0
    %vm91 = vcmp.ne.f32.partialorder %v78, 0.0
    %v92 = vsel %vm90, 1, 0
    %v93 = vsel %vm91, 1, 0
    %v94 = vcvt.s32.f32 %v92
    %v95 = vcvt.s32.f32 %v93
    %v96 = vmax.f32 %v94, %v88
    %v97 = vmax.f32 %v95, %v89
    %vm98 = vcmask 97280
    %v99 = vsel %vm98, %v96, 0.0
    %100 = vadd.xlane.f32.xlu0 %v99
    %v101 = vpop.xlane.xlu0 %100
    %vm102 = vcmask 93184
    %v103 = vsel %vm102, %v97, 0.0
    %104 = vadd.xlane.f32.xlu0 %v103
    %v105 = vpop.xlane.xlu0 %104
    %v107 = vsel %vm98, 1.0, 0
    %v110 = vsel %vm98, %v96, 0
    %v113 = vsel %vm98, %v97, 0
    %115 = vmatprep.subr.mxu0 0.0
    %116 = vmatpush1.xpose.msra.mxu0 %v110
    %117 = vmatprep.subr.mxu0 0.0
    %118 = vmatpush1.xpose.msra.mxu0 %v113
    %119 = vmatprep.subr.mxu0 0.0
    %120 = vmatpush1.xpose.msra.mxu0 0.0
    %121 = vmatprep.subr.mxu0 0.0
    %122 = vmatpush1.xpose.msra.mxu0 0.0
    %123 = vmatprep.subr.mxu0 0.0
    %124 = vmatpush1.xpose.msra.mxu0 0.0
    %125 = vmatprep.subr.mxu0 0.0
    %126 = vmatpush1.xpose.msra.mxu0 0.0
    %127 = vmatprep.subr.mxu0 0.0
    %128 = vmatpush1.xpose.msra.mxu0 0.0
    %129 = vmatprep.subr.mxu0 0.0
    %130 = vmatpush1.xpose.msra.mxu0 0.0
    %131 = vmatprep.subr.mxu0 0.0
    %132 = vmatpush1.xpose.msra.mxu0 0.0
    %133 = vmatprep.subr.mxu0 0.0
    %134 = vmatpush1.xpose.msra.mxu0 0.0
    %135 = vmatprep.subr.mxu0 0.0
    %136 = vmatpush1.xpose.msra.mxu0 0.0
    %137 = vmatprep.subr.mxu0 0.0
    %138 = vmatpush1.xpose.msra.mxu0 0.0
    %139 = vmatprep.subr.mxu0 0.0
    %140 = vmatpush1.xpose.msra.mxu0 0.0
    %141 = vmatprep.subr.mxu0 0.0
    %142 = vmatpush1.xpose.msra.mxu0 0.0
    %143 = vmatprep.subr.mxu0 0.0
    %144 = vmatpush1.xpose.msra.mxu0 0.0
    %145 = vmatprep.subr.mxu0 0.0
    %146 = vmatpush1.xpose.msra.mxu0 0.0
    %147 = vmatprep.subr.mxu0 0.0
    %148 = vmatpush1.xpose.msra.mxu0 0.0
    %149 = vmatprep.subr.mxu0 0.0
    %150 = vmatpush1.xpose.msra.mxu0 0.0
    %151 = vmatprep.subr.mxu0 0.0
    %152 = vmatpush1.xpose.msra.mxu0 0.0
    %153 = vmatprep.subr.mxu0 0.0
    %154 = vmatpush1.xpose.msra.mxu0 0.0
    %155 = vmatprep.subr.mxu0 0.0
    %156 = vmatpush1.xpose.msra.mxu0 0.0
    %157 = vmatprep.subr.mxu0 0.0
    %158 = vmatpush1.xpose.msra.mxu0 0.0
    %159 = vmatprep.subr.mxu0 0.0
    %160 = vmatpush1.xpose.msra.mxu0 0.0
    %161 = vmatprep.subr.mxu0 0.0
    %162 = vmatpush1.xpose.msra.mxu0 0.0
    %163 = vmatprep.subr.mxu0 0.0
    %164 = vmatpush1.xpose.msra.mxu0 0.0
    %165 = vmatprep.subr.mxu0 0.0
    %166 = vmatpush1.xpose.msra.mxu0 0.0
    %167 = vmatprep.subr.mxu0 0.0
    %168 = vmatpush1.xpose.msra.mxu0 0.0
    %169 = vmatprep.subr.mxu0 0.0
    %170 = vmatpush1.xpose.msra.mxu0 0.0
    %171 = vmatprep.subr.mxu0 0.0
    %172 = vmatpush1.xpose.msra.mxu0 0.0
    %173 = vmatprep.subr.mxu0 0.0
    %174 = vmatpush1.xpose.msra.mxu0 0.0
    %175 = vmatprep.subr.mxu0 0.0
    %176 = vmatpush1.xpose.msra.mxu0 0.0
    %177 = vmatprep.subr.mxu0 0.0
    %178 = vmatpush1.xpose.msra.mxu0 0.0
    %179 = vmatprep.mubr.f32.mxu0 0.0
    %180 = vmatmul.mubr.f32.gmra.mrb[0].mxu0 %v107
    %v181 = vpop.f32.mrb[0].mxu0
    %v182 = vadd.f32 0.0, %v181
    %v183 = vpop.f32.mrb[0].mxu0
    %184 = vdwg.mxu0
    %v185 = vrsqrt.pop %v101
    %v186 = vrsqrt.pop %v105
    %v187 = vmul.f32 %v96, %v185
    %v188 = vmul.f32 %v97, %v186
    %v189 = vrsqrt.pop %v182
    %v190 = vlaneseq
    %v191 = vshrl.u32 %v190, 7
    %v192 = vsub.s32 0, %v191
    %v193 = vrot.slane %v189, %v192
    %v194 = vmul.f32 %v187, %v193
    %v195 = vmul.f32 %v188, %v193
    %196 = vst.msk [vmem:[%s15] sm:$0xff] %vm98, %v194
    %197 = vst.msk [vmem:[%s15 + $0x8] sm:$0xf] %vm102, %v195
    %v198 = vld [vmem:[%s1] sm:$0xff]
    %v199 = vld [vmem:[%s1 + $0x8] sm:$0xf]
    %v200 = vld [vmem:[%s2] sm:$0xff]
    %v201 = vld [vmem:[%s2 + $0x8] sm:$0xff]
    %v202 = vld [vmem:[%s2 + $0x10] sm:$0xff]
    %v203 = vld [vmem:[%s2 + $0x18] sm:$0xff]
    %vm204 = vcmask 261120
    %v206 = vsel %vm204, %v198, 0
    %v209 = vsel %vm204, %v199, 0
    %211 = vmatprep.subr.mxu0 0.0
    %212 = vmatpush1.msra.mxu0 %v200
    %213 = vmatprep.subr.mxu0 0.0
    %214 = vmatpush1.msra.mxu0 %v201
    %215 = vmatprep.subr.mxu0 0.0
    %216 = vmatpush1.msra.mxu0 %v202
    %217 = vmatprep.subr.mxu0 0.0
    %218 = vmatpush1.msra.mxu0 %v203
    %219 = vmatprep.subr.mxu0 0.0
    %220 = vmatpush1.msra.mxu0 0.0
    %221 = vmatprep.subr.mxu0 0.0
    %222 = vmatpush1.msra.mxu0 0.0
    %223 = vmatprep.subr.mxu0 0.0
    %224 = vmatpush1.msra.mxu0 0.0
    %225 = vmatprep.subr.mxu0 0.0
    %226 = vmatpush1.msra.mxu0 0.0
    %227 = vmatprep.subr.mxu0 0.0
    %228 = vmatpush1.msra.mxu0 0.0
    %229 = vmatprep.subr.mxu0 0.0
    %230 = vmatpush1.msra.mxu0 0.0
    %231 = vmatprep.subr.mxu0 0.0
    %232 = vmatpush1.msra.mxu0 0.0
    %233 = vmatprep.subr.mxu0 0.0
    %234 = vmatpush1.msra.mxu0 0.0
    %235 = vmatprep.subr.mxu0 0.0
    %236 = vmatpush1.msra.mxu0 0.0
    %237 = vmatprep.subr.mxu0 0.0
    %238 = vmatpush1.msra.mxu0 0.0
    %239 = vmatprep.subr.mxu0 0.0
    %240 = vmatpush1.msra.mxu0 0.0
    %241 = vmatprep.subr.mxu0 0.0
    %242 = vmatpush1.msra.mxu0 0.0
    %243 = vmatprep.subr.mxu0 0.0
    %244 = vmatpush1.msra.mxu0 0.0
    %245 = vmatprep.subr.mxu0 0.0
    %246 = vmatpush1.msra.mxu0 0.0
    %247 = vmatprep.subr.mxu0 0.0
    %248 = vmatpush1.msra.mxu0 0.0
    %249 = vmatprep.subr.mxu0 0.0
    %250 = vmatpush1.msra.mxu0 0.0
    %251 = vmatprep.subr.mxu0 0.0
    %252 = vmatpush1.msra.mxu0 0.0
    %253 = vmatprep.subr.mxu0 0.0
    %254 = vmatpush1.msra.mxu0 0.0
    %255 = vmatprep.subr.mxu0 0.0
    %256 = vmatpush1.msra.mxu0 0.0
    %257 = vmatprep.subr.mxu0 0.0
    %258 = vmatpush1.msra.mxu0 0.0
    %259 = vmatprep.subr.mxu0 0.0
    %260 = vmatpush1.msra.mxu0 0.0
    %261 = vmatprep.subr.mxu0 0.0
    %262 = vmatpush1.msra.mxu0 0.0
    %263 = vmatprep.subr.mxu0 0.0
    %264 = vmatpush1.msra.mxu0 0.0
    %265 = vmatprep.subr.mxu0 0.0
    %266 = vmatpush1.msra.mxu0 0.0
    %267 = vmatprep.subr.mxu0 0.0
    %268 = vmatpush1.msra.mxu0 0.0
    %269 = vmatprep.subr.mxu0 0.0
    %270 = vmatpush1.msra.mxu0 0.0
    %271 = vmatprep.subr.mxu0 0.0
    %272 = vmatpush1.msra.mxu0 0.0
    %273 = vmatprep.subr.mxu0 0.0
    %274 = vmatpush1.msra.mxu0 0.0
    %275 = vmatprep.mubr.f32.mxu0 0.0
    %276 = vmatmul.mubr.f32.gmra.mrb[0].mxu0 %v206
    %v277 = vpop.f32.mrb[0].mxu0
    %v278 = vadd.f32 0.0, %v277
    %v279 = vpop.f32.mrb[0].mxu0
    %280 = vmatprep.mubr.f32.mxu0 0.0
    %281 = vmatmul.mubr.f32.gmra.mrb[0].mxu0 %v209
    %v282 = vpop.f32.mrb[0].mxu0
    %v283 = vadd.f32 0.0, %v282
    %v284 = vpop.f32.mrb[0].mxu0
    %285 = vdwg.mxu0
    %v286 = vld [vmem:[%s3] sm:$0x1]
    %v288 = vlaneseq
    %v289 = vshrl.u32 %v288, 7
    %v290 = vsub.s32 0, %v289
    %v291 = vrot.slane %v286, %v290
    %v294 = vsel %vm98, %v194, 0
    %v297 = vsel %vm98, %v195, 0
    %vm299 = vcmask 1043456
    %v301 = vsel %vm299, %v283, 0
    %303 = vmatprep.subr.mxu0 0.0
    %304 = vmatpush1.msra.mxu0 %v278
    %305 = vmatprep.subr.mxu0 0.0
    %306 = vmatpush1.msra.mxu0 %v301
    %307 = vmatprep.subr.mxu0 0.0
    %308 = vmatpush1.msra.mxu0 0.0
    %309 = vmatprep.subr.mxu0 0.0
    %310 = vmatpush1.msra.mxu0 0.0
    %311 = vmatprep.subr.mxu0 0.0
    %312 = vmatpush1.msra.mxu0 0.0
    %313 = vmatprep.subr.mxu0 0.0
    %314 = vmatpush1.msra.mxu0 0.0
    %315 = vmatprep.subr.mxu0 0.0
    %316 = vmatpush1.msra.mxu0 0.0
    %317 = vmatprep.subr.mxu0 0.0
    %318 = vmatpush1.msra.mxu0 0.0
    %319 = vmatprep.subr.mxu0 0.0
    %320 = vmatpush1.msra.mxu0 0.0
    %321 = vmatprep.subr.mxu0 0.0
    %322 = vmatpush1.msra.mxu0 0.0
    %323 = vmatprep.subr.mxu0 0.0
    %324 = vmatpush1.msra.mxu0 0.0
    %325 = vmatprep.subr.mxu0 0.0
    %326 = vmatpush1.msra.mxu0 0.0
    %327 = vmatprep.subr.mxu0 0.0
    %328 = vmatpush1.msra.mxu0 0.0
    %329 = vmatprep.subr.mxu0 0.0
    %330 = vmatpush1.msra.mxu0 0.0
    %331 = vmatprep.subr.mxu0 0.0
    %332 = vmatpush1.msra.mxu0 0.0
    %333 = vmatprep.subr.mxu0 0.0
    %334 = vmatpush1.msra.mxu0 0.0
    %335 = vmatprep.subr.mxu0 0.0
    %336 = vmatpush1.msra.mxu0 0.0
    %337 = vmatprep.subr.mxu0 0.0
    %338 = vmatpush1.msra.mxu0 0.0
    %339 = vmatprep.subr.mxu0 0.0
    %340 = vmatpush1.msra.mxu0 0.0
    %341 = vmatprep.subr.mxu0 0.0
    %342 = vmatpush1.msra.mxu0 0.0
    %343 = vmatprep.subr.mxu0 0.0
    %344 = vmatpush1.msra.mxu0 0.0
    %345 = vmatprep.subr.mxu0 0.0
    %346 = vmatpush1.msra.mxu0 0.0
    %347 = vmatprep.subr.mxu0 0.0
    %348 = vmatpush1.msra.mxu0 0.0
    %349 = vmatprep.subr.mxu0 0.0
    %350 = vmatpush1.msra.mxu0 0.0
    %351 = vmatprep.subr.mxu0 0.0
    %352 = vmatpush1.msra.mxu0 0.0
    %353 = vmatprep.subr.mxu0 0.0
    %354 = vmatpush1.msra.mxu0 0.0
    %355 = vmatprep.subr.mxu0 0.0
    %356 = vmatpush1.msra.mxu0 0.0
    %357 = vmatprep.subr.mxu0 0.0
    %358 = vmatpush1.msra.mxu0 0.0
    %359 = vmatprep.subr.mxu0 0.0
    %360 = vmatpush1.msra.mxu0 0.0
    %361 = vmatprep.subr.mxu0 0.0
    %362 = vmatpush1.msra.mxu0 0.0
    %363 = vmatprep.subr.mxu0 0.0
    %364 = vmatpush1.msra.mxu0 0.0
    %365 = vmatprep.subr.mxu0 0.0
    %366 = vmatpush1.msra.mxu0 0.0
    %367 = vmatprep.mubr.f32.mxu0 0.0
    %368 = vmatmul.mubr.f32.gmra.mrb[0].mxu0 %v294
    %v369 = vpop.f32.mrb[0].mxu0
    %v370 = vadd.f32 %v291, %v369
    %v371 = vpop.f32.mrb[0].mxu0
    %372 = vmatprep.mubr.f32.mxu0 0.0
    %373 = vmatmul.mubr.f32.gmra.mrb[0].mxu0 %v297
    %v374 = vpop.f32.mrb[0].mxu0
    %v375 = vadd.f32 %v291, %v374
    %v376 = vpop.f32.mrb[0].mxu0
    %377 = vdwg.mxu0
    %v378 = vmax.f32 %v370, 0.0
    %v379 = vmax.f32 %v375, 0.0
    %380 = vst.msk [vmem:[%s14] sm:$0xff] %vm204, %v378
    %vm381 = vcmask 257024
    %382 = vst.msk [vmem:[%s14 + $0x8] sm:$0xf] %vm381, %v379
    %v383 = vld [vmem:[%s4] sm:$0xff]
    %v384 = vld [vmem:[%s4 + $0x8] sm:$0xff]
    %v385 = vld [vmem:[%s4 + $0x10] sm:$0xff]
    %v386 = vld [vmem:[%s4 + $0x18] sm:$0xff]
    %v387 = vld [vmem:[%s5] sm:$0x1]
    %v389 = vlaneseq
    %v390 = vshrl.u32 %v389, 7
    %v391 = vsub.s32 0, %v390
    %v392 = vrot.slane %v387, %v391
    %v395 = vsel %vm204, %v378, 0
    %v398 = vsel %vm204, %v379, 0
    %400 = vmatprep.subr.mxu0 0.0
    %401 = vmatpush1.msra.mxu0 %v383
    %402 = vmatprep.subr.mxu0 0.0
    %403 = vmatpush1.msra.mxu0 %v384
    %404 = vmatprep.subr.mxu0 0.0
    %405 = vmatpush1.msra.mxu0 %v385
    %406 = vmatprep.subr.mxu0 0.0
    %407 = vmatpush1.msra.mxu0 %v386
    %408 = vmatprep.subr.mxu0 0.0
    %409 = vmatpush1.msra.mxu0 0.0
    %410 = vmatprep.subr.mxu0 0.0
    %411 = vmatpush1.msra.mxu0 0.0
    %412 = vmatprep.subr.mxu0 0.0
    %413 = vmatpush1.msra.mxu0 0.0
    %414 = vmatprep.subr.mxu0 0.0
    %415 = vmatpush1.msra.mxu0 0.0
    %416 = vmatprep.subr.mxu0 0.0
    %417 = vmatpush1.msra.mxu0 0.0
    %418 = vmatprep.subr.mxu0 0.0
    %419 = vmatpush1.msra.mxu0 0.0
    %420 = vmatprep.subr.mxu0 0.0
    %421 = vmatpush1.msra.mxu0 0.0
    %422 = vmatprep.subr.mxu0 0.0
    %423 = vmatpush1.msra.mxu0 0.0
    %424 = vmatprep.subr.mxu0 0.0
    %425 = vmatpush1.msra.mxu0 0.0
    %426 = vmatprep.subr.mxu0 0.0
    %427 = vmatpush1.msra.mxu0 0.0
    %428 = vmatprep.subr.mxu0 0.0
    %429 = vmatpush1.msra.mxu0 0.0
    %430 = vmatprep.subr.mxu0 0.0
    %431 = vmatpush1.msra.mxu0 0.0
    %432 = vmatprep.subr.mxu0 0.0
    %433 = vmatpush1.msra.mxu0 0.0
    %434 = vmatprep.subr.mxu0 0.0
    %435 = vmatpush1.msra.mxu0 0.0
    %436 = vmatprep.subr.mxu0 0.0
    %437 = vmatpush1.msra.mxu0 0.0
    %438 = vmatprep.subr.mxu0 0.0
    %439 = vmatpush1.msra.mxu0 0.0
    %440 = vmatprep.subr.mxu0 0.0
    %441 = vmatpush1.msra.mxu0 0.0
    %442 = vmatprep.subr.mxu0 0.0
    %443 = vmatpush1.msra.mxu0 0.0
    %444 = vmatprep.subr.mxu0 0.0
    %445 = vmatpush1.msra.mxu0 0.0
    %446 = vmatprep.subr.mxu0 0.0
    %447 = vmatpush1.msra.mxu0 0.0
    %448 = vmatprep.subr.mxu0 0.0
    %449 = vmatpush1.msra.mxu0 0.0
    %450 = vmatprep.subr.mxu0 0.0
    %451 = vmatpush1.msra.mxu0 0.0
    %452 = vmatprep.subr.mxu0 0.0
    %453 = vmatpush1.msra.mxu0 0.0
    %454 = vmatprep.subr.mxu0 0.0
    %455 = vmatpush1.msra.mxu0 0.0
    %456 = vmatprep.subr.mxu0 0.0
    %457 = vmatpush1.msra.mxu0 0.0
    %458 = vmatprep.subr.mxu0 0.0
    %459 = vmatpush1.msra.mxu0 0.0
    %460 = vmatprep.subr.mxu0 0.0
    %461 = vmatpush1.msra.mxu0 0.0
    %462 = vmatprep.subr.mxu0 0.0
    %463 = vmatpush1.msra.mxu0 0.0
    %464 = vmatprep.mubr.f32.mxu0 0.0
    %465 = vmatmul.mubr.f32.gmra.mrb[0].mxu0 %v395
    %v466 = vpop.f32.mrb[0].mxu0
    %v467 = vadd.f32 %v392, %v466
    %v468 = vpop.f32.mrb[0].mxu0
    %469 = vmatprep.mubr.f32.mxu0 0.0
    %470 = vmatmul.mubr.f32.gmra.mrb[0].mxu0 %v398
    %v471 = vpop.f32.mrb[0].mxu0
    %v472 = vadd.f32 %v392, %v471
    %v473 = vpop.f32.mrb[0].mxu0
    %474 = vdwg.mxu0
    %v475 = vld [vmem:[%s6] sm:$0xff]
    %v476 = vld [vmem:[%s6 + $0x8] sm:$0xff]
    %v477 = vld [vmem:[%s6 + $0x10] sm:$0xff]
    %v478 = vld [vmem:[%s6 + $0x18] sm:$0xff]
    %v479 = vld [vmem:[%s7] sm:$0x1]
    %v481 = vlaneseq
    %v482 = vshrl.u32 %v481, 7
    %v483 = vsub.s32 0, %v482
    %v484 = vrot.slane %v479, %v483
    %486 = vmatprep.subr.mxu0 0.0
    %487 = vmatpush1.msra.mxu0 %v475
    %488 = vmatprep.subr.mxu0 0.0
    %489 = vmatpush1.msra.mxu0 %v476
    %490 = vmatprep.subr.mxu0 0.0
    %491 = vmatpush1.msra.mxu0 %v477
    %492 = vmatprep.subr.mxu0 0.0
    %493 = vmatpush1.msra.mxu0 %v478
    %494 = vmatprep.subr.mxu0 0.0
    %495 = vmatpush1.msra.mxu0 0.0
    %496 = vmatprep.subr.mxu0 0.0
    %497 = vmatpush1.msra.mxu0 0.0
    %498 = vmatprep.subr.mxu0 0.0
    %499 = vmatpush1.msra.mxu0 0.0
    %500 = vmatprep.subr.mxu0 0.0
    %501 = vmatpush1.msra.mxu0 0.0
    %502 = vmatprep.subr.mxu0 0.0
    %503 = vmatpush1.msra.mxu0 0.0
    %504 = vmatprep.subr.mxu0 0.0
    %505 = vmatpush1.msra.mxu0 0.0
    %506 = vmatprep.subr.mxu0 0.0
    %507 = vmatpush1.msra.mxu0 0.0
    %508 = vmatprep.subr.mxu0 0.0
    %509 = vmatpush1.msra.mxu0 0.0
    %510 = vmatprep.subr.mxu0 0.0
    %511 = vmatpush1.msra.mxu0 0.0
    %512 = vmatprep.subr.mxu0 0.0
    %513 = vmatpush1.msra.mxu0 0.0
    %514 = vmatprep.subr.mxu0 0.0
    %515 = vmatpush1.msra.mxu0 0.0
    %516 = vmatprep.subr.mxu0 0.0
    %517 = vmatpush1.msra.mxu0 0.0
    %518 = vmatprep.subr.mxu0 0.0
    %519 = vmatpush1.msra.mxu0 0.0
    %520 = vmatprep.subr.mxu0 0.0
    %521 = vmatpush1.msra.mxu0 0.0
    %522 = vmatprep.subr.mxu0 0.0
    %523 = vmatpush1.msra.mxu0 0.0
    %524 = vmatprep.subr.mxu0 0.0
    %525 = vmatpush1.msra.mxu0 0.0
    %526 = vmatprep.subr.mxu0 0.0
    %527 = vmatpush1.msra.mxu0 0.0
    %528 = vmatprep.subr.mxu0 0.0
    %529 = vmatpush1.msra.mxu0 0.0
    %530 = vmatprep.subr.mxu0 0.0
    %531 = vmatpush1.msra.mxu0 0.0
    %532 = vmatprep.subr.mxu0 0.0
    %533 = vmatpush1.msra.mxu0 0.0
    %534 = vmatprep.subr.mxu0 0.0
    %535 = vmatpush1.msra.mxu0 0.0
    %536 = vmatprep.subr.mxu0 0.0
    %537 = vmatpush1.msra.mxu0 0.0
    %538 = vmatprep.subr.mxu0 0.0
    %539 = vmatpush1.msra.mxu0 0.0
    %540 = vmatprep.subr.mxu0 0.0
    %541 = vmatpush1.msra.mxu0 0.0
    %542 = vmatprep.subr.mxu0 0.0
    %543 = vmatpush1.msra.mxu0 0.0
    %544 = vmatprep.subr.mxu0 0.0
    %545 = vmatpush1.msra.mxu0 0.0
    %546 = vmatprep.subr.mxu0 0.0
    %547 = vmatpush1.msra.mxu0 0.0
    %548 = vmatprep.subr.mxu0 0.0
    %549 = vmatpush1.msra.mxu0 0.0
    %550 = vmatprep.mubr.f32.mxu0 0.0
    %551 = vmatmul.mubr.f32.gmra.mrb[0].mxu0 %v395
    %v552 = vpop.f32.mrb[0].mxu0
    %v553 = vadd.f32 %v484, %v552
    %v554 = vpop.f32.mrb[0].mxu0
    %555 = vmatprep.mubr.f32.mxu0 0.0
    %556 = vmatmul.mubr.f32.gmra.mrb[0].mxu0 %v398
    %v557 = vpop.f32.mrb[0].mxu0
    %v558 = vadd.f32 %v484, %v557
    %v559 = vpop.f32.mrb[0].mxu0
    %560 = vdwg.mxu0
    %v561 = vld [vmem:[%s8] sm:$0xff]
    %v562 = vld [vmem:[%s8 + $0x8] sm:$0xff]
    %v563 = vld [vmem:[%s8 + $0x10] sm:$0xff]
    %v564 = vld [vmem:[%s8 + $0x18] sm:$0xff]
    %v565 = vld [vmem:[%s9] sm:$0x1]
    %v567 = vlaneseq
    %v568 = vshrl.u32 %v567, 7
    %v569 = vsub.s32 0, %v568
    %v570 = vrot.slane %v565, %v569
    %572 = vmatprep.subr.mxu0 0.0
    %573 = vmatpush1.msra.mxu0 %v561
    %574 = vmatprep.subr.mxu0 0.0
    %575 = vmatpush1.msra.mxu0 %v562
    %576 = vmatprep.subr.mxu0 0.0
    %577 = vmatpush1.msra.mxu0 %v563
    %578 = vmatprep.subr.mxu0 0.0
    %579 = vmatpush1.msra.mxu0 %v564
    %580 = vmatprep.subr.mxu0 0.0
    %581 = vmatpush1.msra.mxu0 0.0
    %582 = vmatprep.subr.mxu0 0.0
    %583 = vmatpush1.msra.mxu0 0.0
    %584 = vmatprep.subr.mxu0 0.0
    %585 = vmatpush1.msra.mxu0 0.0
    %586 = vmatprep.subr.mxu0 0.0
    %587 = vmatpush1.msra.mxu0 0.0
    %588 = vmatprep.subr.mxu0 0.0
    %589 = vmatpush1.msra.mxu0 0.0
    %590 = vmatprep.subr.mxu0 0.0
    %591 = vmatpush1.msra.mxu0 0.0
    %592 = vmatprep.subr.mxu0 0.0
    %593 = vmatpush1.msra.mxu0 0.0
    %594 = vmatprep.subr.mxu0 0.0
    %595 = vmatpush1.msra.mxu0 0.0
    %596 = vmatprep.subr.mxu0 0.0
    %597 = vmatpush1.msra.mxu0 0.0
    %598 = vmatprep.subr.mxu0 0.0
    %599 = vmatpush1.msra.mxu0 0.0
    %600 = vmatprep.subr.mxu0 0.0
    %601 = vmatpush1.msra.mxu0 0.0
    %602 = vmatprep.subr.mxu0 0.0
    %603 = vmatpush1.msra.mxu0 0.0
    %604 = vmatprep.subr.mxu0 0.0
    %605 = vmatpush1.msra.mxu0 0.0
    %606 = vmatprep.subr.mxu0 0.0
    %607 = vmatpush1.msra.mxu0 0.0
    %608 = vmatprep.subr.mxu0 0.0
    %609 = vmatpush1.msra.mxu0 0.0
    %610 = vmatprep.subr.mxu0 0.0
    %611 = vmatpush1.msra.mxu0 0.0
    %612 = vmatprep.subr.mxu0 0.0
    %613 = vmatpush1.msra.mxu0 0.0
    %614 = vmatprep.subr.mxu0 0.0
    %615 = vmatpush1.msra.mxu0 0.0
    %616 = vmatprep.subr.mxu0 0.0
    %617 = vmatpush1.msra.mxu0 0.0
    %618 = vmatprep.subr.mxu0 0.0
    %619 = vmatpush1.msra.mxu0 0.0
    %620 = vmatprep.subr.mxu0 0.0
    %621 = vmatpush1.msra.mxu0 0.0
    %622 = vmatprep.subr.mxu0 0.0
    %623 = vmatpush1.msra.mxu0 0.0
    %624 = vmatprep.subr.mxu0 0.0
    %625 = vmatpush1.msra.mxu0 0.0
    %626 = vmatprep.subr.mxu0 0.0
    %627 = vmatpush1.msra.mxu0 0.0
    %628 = vmatprep.subr.mxu0 0.0
    %629 = vmatpush1.msra.mxu0 0.0
    %630 = vmatprep.subr.mxu0 0.0
    %631 = vmatpush1.msra.mxu0 0.0
    %632 = vmatprep.subr.mxu0 0.0
    %633 = vmatpush1.msra.mxu0 0.0
    %634 = vmatprep.subr.mxu0 0.0
    %635 = vmatpush1.msra.mxu0 0.0
    %636 = vmatprep.mubr.f32.mxu0 0.0
    %637 = vmatmul.mubr.f32.gmra.mrb[0].mxu0 %v395
    %v638 = vpop.f32.mrb[0].mxu0
    %v639 = vadd.f32 %v570, %v638
    %v640 = vpop.f32.mrb[0].mxu0
    %641 = vmatprep.mubr.f32.mxu0 0.0
    %642 = vmatmul.mubr.f32.gmra.mrb[0].mxu0 %v398
    %v643 = vpop.f32.mrb[0].mxu0
    %v644 = vadd.f32 %v570, %v643
    %v645 = vpop.f32.mrb[0].mxu0
    %646 = vdwg.mxu0
    %v647 = vld [vmem:[%s10] sm:$0xff]
    %v648 = vld [vmem:[%s10 + $0x8] sm:$0xff]
    %v649 = vld [vmem:[%s10 + $0x10] sm:$0xff]
    %v650 = vld [vmem:[%s10 + $0x18] sm:$0xff]
    %v651 = vld [vmem:[%s10 + $0x20] sm:$0xff]
    %v652 = vld [vmem:[%s10 + $0x28] sm:$0xff]
    %v653 = vld [vmem:[%s10 + $0x30] sm:$0xff]
    %v654 = vld [vmem:[%s10 + $0x38] sm:$0xff]
    %v655 = vld [vmem:[%s10 + $0x40] sm:$0xff]
    %v656 = vld [vmem:[%s10 + $0x48] sm:$0xff]
    %v657 = vld [vmem:[%s10 + $0x50] sm:$0xff]
    %v658 = vld [vmem:[%s10 + $0x58] sm:$0xff]
    %v659 = vld [vmem:[%s10 + $0x60] sm:$0xff]
    %v660 = vld [vmem:[%s10 + $0x68] sm:$0xff]
    %v661 = vld [vmem:[%s10 + $0x70] sm:$0xff]
    %v662 = vld [vmem:[%s10 + $0x78] sm:$0xff]
    %vm663 = vcmask 523264
    %v665 = vsel %vm663, %v467, 0
    %v668 = vsel %vm663, %v472, 0
    %v671 = vsel %vm663, %v553, 0
    %v674 = vsel %vm663, %v558, 0
    %676 = vmatprep.subr.mxu0 0.0
    %677 = vmatpush1.xpose.msra.mxu0 %v671
    %678 = vmatprep.subr.mxu0 0.0
    %679 = vmatpush1.xpose.msra.mxu0 %v674
    %680 = vmatprep.subr.mxu0 0.0
    %681 = vmatpush1.xpose.msra.mxu0 0.0
    %682 = vmatprep.subr.mxu0 0.0
    %683 = vmatpush1.xpose.msra.mxu0 0.0
    %684 = vmatprep.subr.mxu0 0.0
    %685 = vmatpush1.xpose.msra.mxu0 0.0
    %686 = vmatprep.subr.mxu0 0.0
    %687 = vmatpush1.xpose.msra.mxu0 0.0
    %688 = vmatprep.subr.mxu0 0.0
    %689 = vmatpush1.xpose.msra.mxu0 0.0
    %690 = vmatprep.subr.mxu0 0.0
    %691 = vmatpush1.xpose.msra.mxu0 0.0
    %692 = vmatprep.subr.mxu0 0.0
    %693 = vmatpush1.xpose.msra.mxu0 0.0
    %694 = vmatprep.subr.mxu0 0.0
    %695 = vmatpush1.xpose.msra.mxu0 0.0
    %696 = vmatprep.subr.mxu0 0.0
    %697 = vmatpush1.xpose.msra.mxu0 0.0
    %698 = vmatprep.subr.mxu0 0.0
    %699 = vmatpush1.xpose.msra.mxu0 0.0
    %700 = vmatprep.subr.mxu0 0.0
    %701 = vmatpush1.xpose.msra.mxu0 0.0
    %702 = vmatprep.subr.mxu0 0.0
    %703 = vmatpush1.xpose.msra.mxu0 0.0
    %704 = vmatprep.subr.mxu0 0.0
    %705 = vmatpush1.xpose.msra.mxu0 0.0
    %706 = vmatprep.subr.mxu0 0.0
    %707 = vmatpush1.xpose.msra.mxu0 0.0
    %708 = vmatprep.subr.mxu0 0.0
    %709 = vmatpush1.xpose.msra.mxu0 0.0
    %710 = vmatprep.subr.mxu0 0.0
    %711 = vmatpush1.xpose.msra.mxu0 0.0
    %712 = vmatprep.subr.mxu0 0.0
    %713 = vmatpush1.xpose.msra.mxu0 0.0
    %714 = vmatprep.subr.mxu0 0.0
    %715 = vmatpush1.xpose.msra.mxu0 0.0
    %716 = vmatprep.subr.mxu0 0.0
    %717 = vmatpush1.xpose.msra.mxu0 0.0
    %718 = vmatprep.subr.mxu0 0.0
    %719 = vmatpush1.xpose.msra.mxu0 0.0
    %720 = vmatprep.subr.mxu0 0.0
    %721 = vmatpush1.xpose.msra.mxu0 0.0
    %722 = vmatprep.subr.mxu0 0.0
    %723 = vmatpush1.xpose.msra.mxu0 0.0
    %724 = vmatprep.subr.mxu0 0.0
    %725 = vmatpush1.xpose.msra.mxu0 0.0
    %726 = vmatprep.subr.mxu0 0.0
    %727 = vmatpush1.xpose.msra.mxu0 0.0
    %728 = vmatprep.subr.mxu0 0.0
    %729 = vmatpush1.xpose.msra.mxu0 0.0
    %730 = vmatprep.subr.mxu0 0.0
    %731 = vmatpush1.xpose.msra.mxu0 0.0
    %732 = vmatprep.subr.mxu0 0.0
    %733 = vmatpush1.xpose.msra.mxu0 0.0
    %734 = vmatprep.subr.mxu0 0.0
    %735 = vmatpush1.xpose.msra.mxu0 0.0
    %736 = vmatprep.subr.mxu0 0.0
    %737 = vmatpush1.xpose.msra.mxu0 0.0
    %738 = vmatprep.subr.mxu0 0.0
    %739 = vmatpush1.xpose.msra.mxu0 0.0
    %740 = vmatprep.mubr.f32.mxu0 0.0
    %741 = vmatmul.mubr.f32.gmra.mrb[0].mxu0 %v665
    %v742 = vpop.f32.mrb[0].mxu0
    %v743 = vadd.f32 0.0, %v742
    %v744 = vpop.f32.mrb[0].mxu0
    %745 = vmatprep.mubr.f32.mxu0 0.0
    %746 = vmatmul.mubr.f32.gmra.mrb[0].mxu0 %v668
    %v747 = vpop.f32.mrb[0].mxu0
    %v748 = vadd.f32 0.0, %v747
    %v749 = vpop.f32.mrb[0].mxu0
    %750 = vdwg.mxu0
    %v751 = vmul.f32 %v743, 0.125
    %v752 = vmul.f32 %v748, 0.125
    %v753 = vsel %vm98, %v751, -inf
    %754 = vmax.xlane.f32.xlu0 %v753
    %v755 = vpop.xlane.xlu0 %754
    %v756 = vsel %vm102, %v752, -inf
    %757 = vmax.xlane.f32.xlu0 %v756
    %v758 = vpop.xlane.xlu0 %757
    %v759 = vsub.f32 %v751, %v755
    %v760 = vsub.f32 %v752, %v758
    %v761 = vmul.f32 %v759, 1.442695
    %v762 = vpow.pop %v761
    %v763 = vmul.f32 %v760, 1.442695
    %v764 = vpow.pop %v763
    %v765 = vsel %vm98, %v762, 0.0
    %766 = vadd.xlane.f32.xlu0 %v765
    %v767 = vpop.xlane.xlu0 %766
    %v768 = vsel %vm102, %v764, 0.0
    %769 = vadd.xlane.f32.xlu0 %v768
    %v770 = vpop.xlane.xlu0 %769
    %v771 = vrcp.pop %v767
    %v772 = vmul.f32 %v762, %v771
    %v773 = vrcp.pop %v770
    %v774 = vmul.f32 %v764, %v773
    %v776 = vsel %vm663, %v639, 0
    %v779 = vsel %vm663, %v644, 0
    %781 = vmatprep.subr.mxu0 0.0
    %782 = vmatpush1.msra.mxu0 %v647
    %783 = vmatprep.subr.mxu0 0.0
    %784 = vmatpush1.msra.mxu0 %v648
    %785 = vmatprep.subr.mxu0 0.0
    %786 = vmatpush1.msra.mxu0 %v649
    %787 = vmatprep.subr.mxu0 0.0
    %788 = vmatpush1.msra.mxu0 %v650
    %789 = vmatprep.subr.mxu0 0.0
    %790 = vmatpush1.msra.mxu0 %v651
    %791 = vmatprep.subr.mxu0 0.0
    %792 = vmatpush1.msra.mxu0 %v652
    %793 = vmatprep.subr.mxu0 0.0
    %794 = vmatpush1.msra.mxu0 %v653
    %795 = vmatprep.subr.mxu0 0.0
    %796 = vmatpush1.msra.mxu0 %v654
    %797 = vmatprep.subr.mxu0 0.0
    %798 = vmatpush1.msra.mxu0 0.0
    %799 = vmatprep.subr.mxu0 0.0
    %800 = vmatpush1.msra.mxu0 0.0
    %801 = vmatprep.subr.mxu0 0.0
    %802 = vmatpush1.msra.mxu0 0.0
    %803 = vmatprep.subr.mxu0 0.0
    %804 = vmatpush1.msra.mxu0 0.0
    %805 = vmatprep.subr.mxu0 0.0
    %806 = vmatpush1.msra.mxu0 0.0
    %807 = vmatprep.subr.mxu0 0.0
    %808 = vmatpush1.msra.mxu0 0.0
    %809 = vmatprep.subr.mxu0 0.0
    %810 = vmatpush1.msra.mxu0 0.0
    %811 = vmatprep.subr.mxu0 0.0
    %812 = vmatpush1.msra.mxu0 0.0
    %813 = vmatprep.subr.mxu0 0.0
    %814 = vmatpush1.msra.mxu0 0.0
    %815 = vmatprep.subr.mxu0 0.0
    %816 = vmatpush1.msra.mxu0 0.0
    %817 = vmatprep.subr.mxu0 0.0
    %818 = vmatpush1.msra.mxu0 0.0
    %819 = vmatprep.subr.mxu0 0.0
    %820 = vmatpush1.msra.mxu0 0.0
    %821 = vmatprep.subr.mxu0 0.0
    %822 = vmatpush1.msra.mxu0 0.0
    %823 = vmatprep.subr.mxu0 0.0
    %824 = vmatpush1.msra.mxu0 0.0
    %825 = vmatprep.subr.mxu0 0.0
    %826 = vmatpush1.msra.mxu0 0.0
    %827 = vmatprep.subr.mxu0 0.0
    %828 = vmatpush1.msra.mxu0 0.0
    %829 = vmatprep.subr.mxu0 0.0
    %830 = vmatpush1.msra.mxu0 0.0
    %831 = vmatprep.subr.mxu0 0.0
    %832 = vmatpush1.msra.mxu0 0.0
    %833 = vmatprep.subr.mxu0 0.0
    %834 = vmatpush1.msra.mxu0 0.0
    %835 = vmatprep.subr.mxu0 0.0
    %836 = vmatpush1.msra.mxu0 0.0
    %837 = vmatprep.subr.mxu0 0.0
    %838 = vmatpush1.msra.mxu0 0.0
    %839 = vmatprep.subr.mxu0 0.0
    %840 = vmatpush1.msra.mxu0 0.0
    %841 = vmatprep.subr.mxu0 0.0
    %842 = vmatpush1.msra.mxu0 0.0
    %843 = vmatprep.subr.mxu0 0.0
    %844 = vmatpush1.msra.mxu0 0.0
    %845 = vmatprep.mubr.f32.mxu0 0.0
    %846 = vmatmul.mubr.f32.gmra.mrb[0].mxu0 %v776
    %v847 = vpop.f32.mrb[0].mxu0
    %v848 = vadd.f32 0.0, %v847
    %v849 = vpop.f32.mrb[0].mxu0
    %850 = vmatprep.mubr.f32.mxu0 0.0
    %851 = vmatmul.mubr.f32.gmra.mrb[0].mxu0 %v779
    %v852 = vpop.f32.mrb[0].mxu0
    %v853 = vadd.f32 0.0, %v852
    %v854 = vpop.f32.mrb[0].mxu0
    %855 = vdwg.mxu0
    %856 = vrot.lane.b32.xlu0 %v467, 64
    %v857 = vpop.permute.xlu0 %856
    %858 = vrot.lane.b32.xlu0 %v472, 64
    %v859 = vpop.permute.xlu0 %858
    %860 = vrot.lane.b32.xlu0 %v553, 64
    %v861 = vpop.permute.xlu0 %860
    %862 = vrot.lane.b32.xlu0 %v558, 64
    %v863 = vpop.permute.xlu0 %862
    %v864 = vsel %vm663, %v857, 0
    %v866 = vsel %vm663, %v859, 0
    %v868 = vsel %vm663, %v861, 0
    %v870 = vsel %vm663, %v863, 0
    %872 = vmatprep.subr.mxu0 0.0
    %873 = vmatpush1.xpose.msra.mxu0 %v868
    %874 = vmatprep.subr.mxu0 0.0
    %875 = vmatpush1.xpose.msra.mxu0 %v870
    %876 = vmatprep.subr.mxu0 0.0
    %877 = vmatpush1.xpose.msra.mxu0 0.0
    %878 = vmatprep.subr.mxu0 0.0
    %879 = vmatpush1.xpose.msra.mxu0 0.0
    %880 = vmatprep.subr.mxu0 0.0
    %881 = vmatpush1.xpose.msra.mxu0 0.0
    %882 = vmatprep.subr.mxu0 0.0
    %883 = vmatpush1.xpose.msra.mxu0 0.0
    %884 = vmatprep.subr.mxu0 0.0
    %885 = vmatpush1.xpose.msra.mxu0 0.0
    %886 = vmatprep.subr.mxu0 0.0
    %887 = vmatpush1.xpose.msra.mxu0 0.0
    %888 = vmatprep.subr.mxu0 0.0
    %889 = vmatpush1.xpose.msra.mxu0 0.0
    %890 = vmatprep.subr.mxu0 0.0
    %891 = vmatpush1.xpose.msra.mxu0 0.0
    %892 = vmatprep.subr.mxu0 0.0
    %893 = vmatpush1.xpose.msra.mxu0 0.0
    %894 = vmatprep.subr.mxu0 0.0
    %895 = vmatpush1.xpose.msra.mxu0 0.0
    %896 = vmatprep.subr.mxu0 0.0
    %897 = vmatpush1.xpose.msra.mxu0 0.0
    %898 = vmatprep.subr.mxu0 0.0
    %899 = vmatpush1.xpose.msra.mxu0 0.0
    %900 = vmatprep.subr.mxu0 0.0
    %901 = vmatpush1.xpose.msra.mxu0 0.0
    %902 = vmatprep.subr.mxu0 0.0
    %903 = vmatpush1.xpose.msra.mxu0 0.0
    %904 = vmatprep.subr.mxu0 0.0
    %905 = vmatpush1.xpose.msra.mxu0 0.0
    %906 = vmatprep.subr.mxu0 0.0
    %907 = vmatpush1.xpose.msra.mxu0 0.0
    %908 = vmatprep.subr.mxu0 0.0
    %909 = vmatpush1.xpose.msra.mxu0 0.0
    %910 = vmatprep.subr.mxu0 0.0
    %911 = vmatpush1.xpose.msra.mxu0 0.0
    %912 = vmatprep.subr.mxu0 0.0
    %913 = vmatpush1.xpose.msra.mxu0 0.0
    %914 = vmatprep.subr.mxu0 0.0
    %915 = vmatpush1.xpose.msra.mxu0 0.0
    %916 = vmatprep.subr.mxu0 0.0
    %917 = vmatpush1.xpose.msra.mxu0 0.0
    %918 = vmatprep.subr.mxu0 0.0
    %919 = vmatpush1.xpose.msra.mxu0 0.0
    %920 = vmatprep.subr.mxu0 0.0
    %921 = vmatpush1.xpose.msra.mxu0 0.0
    %922 = vmatprep.subr.mxu0 0.0
    %923 = vmatpush1.xpose.msra.mxu0 0.0
    %924 = vmatprep.subr.mxu0 0.0
    %925 = vmatpush1.xpose.msra.mxu0 0.0
    %926 = vmatprep.subr.mxu0 0.0
    %927 = vmatpush1.xpose.msra.mxu0 0.0
    %928 = vmatprep.subr.mxu0 0.0
    %929 = vmatpush1.xpose.msra.mxu0 0.0
    %930 = vmatprep.subr.mxu0 0.0
    %931 = vmatpush1.xpose.msra.mxu0 0.0
    %932 = vmatprep.subr.mxu0 0.0
    %933 = vmatpush1.xpose.msra.mxu0 0.0
    %934 = vmatprep.subr.mxu0 0.0
    %935 = vmatpush1.xpose.msra.mxu0 0.0
    %936 = vmatprep.mubr.f32.mxu0 0.0
    %937 = vmatmul.mubr.f32.gmra.mrb[0].mxu0 %v864
    %v938 = vpop.f32.mrb[0].mxu0
    %v939 = vadd.f32 0.0, %v938
    %v940 = vpop.f32.mrb[0].mxu0
    %941 = vmatprep.mubr.f32.mxu0 0.0
    %942 = vmatmul.mubr.f32.gmra.mrb[0].mxu0 %v866
    %v943 = vpop.f32.mrb[0].mxu0
    %v944 = vadd.f32 0.0, %v943
    %v945 = vpop.f32.mrb[0].mxu0
    %946 = vdwg.mxu0
    %v947 = vmul.f32 %v939, 0.125
    %v948 = vmul.f32 %v944, 0.125
    %v949 = vsel %vm98, %v947, -inf
    %950 = vmax.xlane.f32.xlu0 %v949
    %v951 = vpop.xlane.xlu0 %950
    %v952 = vsel %vm102, %v948, -inf
    %953 = vmax.xlane.f32.xlu0 %v952
    %v954 = vpop.xlane.xlu0 %953
    %v955 = vsub.f32 %v947, %v951
    %v956 = vsub.f32 %v948, %v954
    %v957 = vmul.f32 %v955, 1.442695
    %v958 = vpow.pop %v957
    %v959 = vmul.f32 %v956, 1.442695
    %v960 = vpow.pop %v959
    %v961 = vsel %vm98, %v958, 0.0
    %962 = vadd.xlane.f32.xlu0 %v961
    %v963 = vpop.xlane.xlu0 %962
    %v964 = vsel %vm102, %v960, 0.0
    %965 = vadd.xlane.f32.xlu0 %v964
    %v966 = vpop.xlane.xlu0 %965
    %v967 = vrcp.pop %v963
    %v968 = vmul.f32 %v958, %v967
    %v969 = vrcp.pop %v966
    %v970 = vmul.f32 %v960, %v969
    %971 = vrot.lane.b32.xlu0 %v639, 64
    %v972 = vpop.permute.xlu0 %971
    %973 = vrot.lane.b32.xlu0 %v644, 64
    %v974 = vpop.permute.xlu0 %973
    %v975 = vsel %vm663, %v972, 0
    %v977 = vsel %vm663, %v974, 0
    %979 = vmatprep.subr.mxu0 0.0
    %980 = vmatpush1.msra.mxu0 %v655
    %981 = vmatprep.subr.mxu0 0.0
    %982 = vmatpush1.msra.mxu0 %v656
    %983 = vmatprep.subr.mxu0 0.0
    %984 = vmatpush1.msra.mxu0 %v657
    %985 = vmatprep.subr.mxu0 0.0
    %986 = vmatpush1.msra.mxu0 %v658
    %987 = vmatprep.subr.mxu0 0.0
    %988 = vmatpush1.msra.mxu0 %v659
    %989 = vmatprep.subr.mxu0 0.0
    %990 = vmatpush1.msra.mxu0 %v660
    %991 = vmatprep.subr.mxu0 0.0
    %992 = vmatpush1.msra.mxu0 %v661
    %993 = vmatprep.subr.mxu0 0.0
    %994 = vmatpush1.msra.mxu0 %v662
    %995 = vmatprep.subr.mxu0 0.0
    %996 = vmatpush1.msra.mxu0 0.0
    %997 = vmatprep.subr.mxu0 0.0
    %998 = vmatpush1.msra.mxu0 0.0
    %999 = vmatprep.subr.mxu0 0.0
    %1000 = vmatpush1.msra.mxu0 0.0
    %1001 = vmatprep.subr.mxu0 0.0
    %1002 = vmatpush1.msra.mxu0 0.0
    %1003 = vmatprep.subr.mxu0 0.0
    %1004 = vmatpush1.msra.mxu0 0.0
    %1005 = vmatprep.subr.mxu0 0.0
    %1006 = vmatpush1.msra.mxu0 0.0
    %1007 = vmatprep.subr.mxu0 0.0
    %1008 = vmatpush1.msra.mxu0 0.0
    %1009 = vmatprep.subr.mxu0 0.0
    %1010 = vmatpush1.msra.mxu0 0.0
    %1011 = vmatprep.subr.mxu0 0.0
    %1012 = vmatpush1.msra.mxu0 0.0
    %1013 = vmatprep.subr.mxu0 0.0
    %1014 = vmatpush1.msra.mxu0 0.0
    %1015 = vmatprep.subr.mxu0 0.0
    %1016 = vmatpush1.msra.mxu0 0.0
    %1017 = vmatprep.subr.mxu0 0.0
    %1018 = vmatpush1.msra.mxu0 0.0
    %1019 = vmatprep.subr.mxu0 0.0
    %1020 = vmatpush1.msra.mxu0 0.0
    %1021 = vmatprep.subr.mxu0 0.0
    %1022 = vmatpush1.msra.mxu0 0.0
    %1023 = vmatprep.subr.mxu0 0.0
    %1024 = vmatpush1.msra.mxu0 0.0
    %1025 = vmatprep.subr.mxu0 0.0
    %1026 = vmatpush1.msra.mxu0 0.0
    %1027 = vmatprep.subr.mxu0 0.0
    %1028 = vmatpush1.msra.mxu0 0.0
    %1029 = vmatprep.subr.mxu0 0.0
    %1030 = vmatpush1.msra.mxu0 0.0
    %1031 = vmatprep.subr.mxu0 0.0
    %1032 = vmatpush1.msra.mxu0 0.0
    %1033 = vmatprep.subr.mxu0 0.0
    %1034 = vmatpush1.msra.mxu0 0.0
    %1035 = vmatprep.subr.mxu0 0.0
    %1036 = vmatpush1.msra.mxu0 0.0
    %1037 = vmatprep.subr.mxu0 0.0
    %1038 = vmatpush1.msra.mxu0 0.0
    %1039 = vmatprep.subr.mxu0 0.0
    %1040 = vmatpush1.msra.mxu0 0.0
    %1041 = vmatprep.subr.mxu0 0.0
    %1042 = vmatpush1.msra.mxu0 0.0
    %1043 = vmatprep.mubr.f32.mxu0 0.0
    %1044 = vmatmul.mubr.f32.gmra.mrb[0].mxu0 %v975
    %v1045 = vpop.f32.mrb[0].mxu0
    %v1046 = vadd.f32 0.0, %v1045
    %v1047 = vpop.f32.mrb[0].mxu0
    %1048 = vmatprep.mubr.f32.mxu0 0.0
    %1049 = vmatmul.mubr.f32.gmra.mrb[0].mxu0 %v977
    %v1050 = vpop.f32.mrb[0].mxu0
    %v1051 = vadd.f32 0.0, %v1050
    %v1052 = vpop.f32.mrb[0].mxu0
    %1053 = vdwg.mxu0
    %v1055 = vsel %vm98, %v968, 0
    %v1058 = vsel %vm98, %v970, 0
    %v1061 = vsel %vm299, %v1051, 0
    %1063 = vmatprep.subr.mxu0 0.0
    %1064 = vmatpush1.msra.mxu0 %v1046
    %1065 = vmatprep.subr.mxu0 0.0
    %1066 = vmatpush1.msra.mxu0 %v1061
    %1067 = vmatprep.subr.mxu0 0.0
    %1068 = vmatpush1.msra.mxu0 0.0
    %1069 = vmatprep.subr.mxu0 0.0
    %1070 = vmatpush1.msra.mxu0 0.0
    %1071 = vmatprep.subr.mxu0 0.0
    %1072 = vmatpush1.msra.mxu0 0.0
    %1073 = vmatprep.subr.mxu0 0.0
    %1074 = vmatpush1.msra.mxu0 0.0
    %1075 = vmatprep.subr.mxu0 0.0
    %1076 = vmatpush1.msra.mxu0 0.0
    %1077 = vmatprep.subr.mxu0 0.0
    %1078 = vmatpush1.msra.mxu0 0.0
    %1079 = vmatprep.subr.mxu0 0.0
    %1080 = vmatpush1.msra.mxu0 0.0
    %1081 = vmatprep.subr.mxu0 0.0
    %1082 = vmatpush1.msra.mxu0 0.0
    %1083 = vmatprep.subr.mxu0 0.0
    %1084 = vmatpush1.msra.mxu0 0.0
    %1085 = vmatprep.subr.mxu0 0.0
    %1086 = vmatpush1.msra.mxu0 0.0
    %1087 = vmatprep.subr.mxu0 0.0
    %1088 = vmatpush1.msra.mxu0 0.0
    %1089 = vmatprep.subr.mxu0 0.0
    %1090 = vmatpush1.msra.mxu0 0.0
    %1091 = vmatprep.subr.mxu0 0.0
    %1092 = vmatpush1.msra.mxu0 0.0
    %1093 = vmatprep.subr.mxu0 0.0
    %1094 = vmatpush1.msra.mxu0 0.0
    %1095 = vmatprep.subr.mxu0 0.0
    %1096 = vmatpush1.msra.mxu0 0.0
    %1097 = vmatprep.subr.mxu0 0.0
    %1098 = vmatpush1.msra.mxu0 0.0
    %1099 = vmatprep.subr.mxu0 0.0
    %1100 = vmatpush1.msra.mxu0 0.0
    %1101 = vmatprep.subr.mxu0 0.0
    %1102 = vmatpush1.msra.mxu0 0.0
    %1103 = vmatprep.subr.mxu0 0.0
    %1104 = vmatpush1.msra.mxu0 0.0
    %1105 = vmatprep.subr.mxu0 0.0
    %1106 = vmatpush1.msra.mxu0 0.0
    %1107 = vmatprep.subr.mxu0 0.0
    %1108 = vmatpush1.msra.mxu0 0.0
    %1109 = vmatprep.subr.mxu0 0.0
    %1110 = vmatpush1.msra.mxu0 0.0
    %1111 = vmatprep.subr.mxu0 0.0
    %1112 = vmatpush1.msra.mxu0 0.0
    %1113 = vmatprep.subr.mxu0 0.0
    %1114 = vmatpush1.msra.mxu0 0.0
    %1115 = vmatprep.subr.mxu0 0.0
    %1116 = vmatpush1.msra.mxu0 0.0
    %1117 = vmatprep.subr.mxu0 0.0
    %1118 = vmatpush1.msra.mxu0 0.0
    %1119 = vmatprep.subr.mxu0 0.0
    %1120 = vmatpush1.msra.mxu0 0.0
    %1121 = vmatprep.subr.mxu0 0.0
    %1122 = vmatpush1.msra.mxu0 0.0
    %1123 = vmatprep.subr.mxu0 0.0
    %1124 = vmatpush1.msra.mxu0 0.0
    %1125 = vmatprep.subr.mxu0 0.0
    %1126 = vmatpush1.msra.mxu0 0.0
    %1127 = vmatprep.mubr.f32.mxu0 0.0
    %1128 = vmatmul.mubr.f32.gmra.mrb[0].mxu0 %v1055
    %v1129 = vpop.f32.mrb[0].mxu0
    %v1130 = vadd.f32 0.0, %v1129
    %v1131 = vpop.f32.mrb[0].mxu0
    %1132 = vmatprep.mubr.f32.mxu0 0.0
    %1133 = vmatmul.mubr.f32.gmra.mrb[0].mxu0 %v1058
    %v1134 = vpop.f32.mrb[0].mxu0
    %v1135 = vadd.f32 0.0, %v1134
    %v1136 = vpop.f32.mrb[0].mxu0
    %1137 = vdwg.mxu0
    %v1139 = vsel %vm98, %v772, 0
    %v1142 = vsel %vm98, %v774, 0
    %v1145 = vsel %vm299, %v853, 0
    %1147 = vmatprep.subr.mxu0 0.0
    %1148 = vmatpush1.msra.mxu0 %v848
    %1149 = vmatprep.subr.mxu0 0.0
    %1150 = vmatpush1.msra.mxu0 %v1145
    %1151 = vmatprep.subr.mxu0 0.0
    %1152 = vmatpush1.msra.mxu0 0.0
    %1153 = vmatprep.subr.mxu0 0.0
    %1154 = vmatpush1.msra.mxu0 0.0
    %1155 = vmatprep.subr.mxu0 0.0
    %1156 = vmatpush1.msra.mxu0 0.0
    %1157 = vmatprep.subr.mxu0 0.0
    %1158 = vmatpush1.msra.mxu0 0.0
    %1159 = vmatprep.subr.mxu0 0.0
    %1160 = vmatpush1.msra.mxu0 0.0
    %1161 = vmatprep.subr.mxu0 0.0
    %1162 = vmatpush1.msra.mxu0 0.0
    %1163 = vmatprep.subr.mxu0 0.0
    %1164 = vmatpush1.msra.mxu0 0.0
    %1165 = vmatprep.subr.mxu0 0.0
    %1166 = vmatpush1.msra.mxu0 0.0
    %1167 = vmatprep.subr.mxu0 0.0
    %1168 = vmatpush1.msra.mxu0 0.0
    %1169 = vmatprep.subr.mxu0 0.0
    %1170 = vmatpush1.msra.mxu0 0.0
    %1171 = vmatprep.subr.mxu0 0.0
    %1172 = vmatpush1.msra.mxu0 0.0
    %1173 = vmatprep.subr.mxu0 0.0
    %1174 = vmatpush1.msra.mxu0 0.0
    %1175 = vmatprep.subr.mxu0 0.0
    %1176 = vmatpush1.msra.mxu0 0.0
    %1177 = vmatprep.subr.mxu0 0.0
    %1178 = vmatpush1.msra.mxu0 0.0
    %1179 = vmatprep.subr.mxu0 0.0
    %1180 = vmatpush1.msra.mxu0 0.0
    %1181 = vmatprep.subr.mxu0 0.0
    %1182 = vmatpush1.msra.mxu0 0.0
    %1183 = vmatprep.subr.mxu0 0.0
    %1184 = vmatpush1.msra.mxu0 0.0
    %1185 = vmatprep.subr.mxu0 0.0
    %1186 = vmatpush1.msra.mxu0 0.0
    %1187 = vmatprep.subr.mxu0 0.0
    %1188 = vmatpush1.msra.mxu0 0.0
    %1189 = vmatprep.subr.mxu0 0.0
    %1190 = vmatpush1.msra.mxu0 0.0
    %1191 = vmatprep.subr.mxu0 0.0
    %1192 = vmatpush1.msra.mxu0 0.0
    %1193 = vmatprep.subr.mxu0 0.0
    %1194 = vmatpush1.msra.mxu0 0.0
    %1195 = vmatprep.subr.mxu0 0.0
    %1196 = vmatpush1.msra.mxu0 0.0
    %1197 = vmatprep.subr.mxu0 0.0
    %1198 = vmatpush1.msra.mxu0 0.0
    %1199 = vmatprep.subr.mxu0 0.0
    %1200 = vmatpush1.msra.mxu0 0.0
    %1201 = vmatprep.subr.mxu0 0.0
    %1202 = vmatpush1.msra.mxu0 0.0
    %1203 = vmatprep.subr.mxu0 0.0
    %1204 = vmatpush1.msra.mxu0 0.0
    %1205 = vmatprep.subr.mxu0 0.0
    %1206 = vmatpush1.msra.mxu0 0.0
    %1207 = vmatprep.subr.mxu0 0.0
    %1208 = vmatpush1.msra.mxu0 0.0
    %1209 = vmatprep.subr.mxu0 0.0
    %1210 = vmatpush1.msra.mxu0 0.0
    %1211 = vmatprep.mubr.f32.mxu0 0.0
    %1212 = vmatmul.mubr.f32.gmra.mrb[0].mxu0 %v1139
    %v1213 = vpop.f32.mrb[0].mxu0
    %v1214 = vadd.f32 %v1130, %v1213
    %v1215 = vpop.f32.mrb[0].mxu0
    %1216 = vmatprep.mubr.f32.mxu0 0.0
    %1217 = vmatmul.mubr.f32.gmra.mrb[0].mxu0 %v1142
    %v1218 = vpop.f32.mrb[0].mxu0
    %v1219 = vadd.f32 %v1135, %v1218
    %v1220 = vpop.f32.mrb[0].mxu0
    %1221 = vdwg.mxu0
    %v1222 = vld [vmem:[#allocation2] sm:$0x1]
    %v1224 = vlaneseq
    %v1225 = vshrl.u32 %v1224, 7
    %v1226 = vsub.s32 0, %v1225
    %v1227 = vrot.slane %v1222, %v1226
    %v1229 = vadd.f32 %v1214, %v1227
    %v1230 = vadd.f32 %v1219, %v1227
    %v1232 = vsel %vm98, %v88, 0
    %v1235 = vsel %vm98, %v89, 0
    %v1238 = vsel %vm98, %v94, 0
    %v1241 = vsel %vm98, %v95, 0
    %1243 = vmatprep.subr.mxu0 0.0
    %1244 = vmatpush1.xpose.msra.mxu0 %v1238
    %1245 = vmatprep.subr.mxu0 0.0
    %1246 = vmatpush1.xpose.msra.mxu0 %v1241
    %1247 = vmatprep.subr.mxu0 0.0
    %1248 = vmatpush1.xpose.msra.mxu0 0.0
    %1249 = vmatprep.subr.mxu0 0.0
    %1250 = vmatpush1.xpose.msra.mxu0 0.0
    %1251 = vmatprep.subr.mxu0 0.0
    %1252 = vmatpush1.xpose.msra.mxu0 0.0
    %1253 = vmatprep.subr.mxu0 0.0
    %1254 = vmatpush1.xpose.msra.mxu0 0.0
    %1255 = vmatprep.subr.mxu0 0.0
    %1256 = vmatpush1.xpose.msra.mxu0 0.0
    %1257 = vmatprep.subr.mxu0 0.0
    %1258 = vmatpush1.xpose.msra.mxu0 0.0
    %1259 = vmatprep.subr.mxu0 0.0
    %1260 = vmatpush1.xpose.msra.mxu0 0.0
    %1261 = vmatprep.subr.mxu0 0.0
    %1262 = vmatpush1.xpose.msra.mxu0 0.0
    %1263 = vmatprep.subr.mxu0 0.0
    %1264 = vmatpush1.xpose.msra.mxu0 0.0
    %1265 = vmatprep.subr.mxu0 0.0
    %1266 = vmatpush1.xpose.msra.mxu0 0.0
    %1267 = vmatprep.subr.mxu0 0.0
    %1268 = vmatpush1.xpose.msra.mxu0 0.0
    %1269 = vmatprep.subr.mxu0 0.0
    %1270 = vmatpush1.xpose.msra.mxu0 0.0
    %1271 = vmatprep.subr.mxu0 0.0
    %1272 = vmatpush1.xpose.msra.mxu0 0.0
    %1273 = vmatprep.subr.mxu0 0.0
    %1274 = vmatpush1.xpose.msra.mxu0 0.0
    %1275 = vmatprep.subr.mxu0 0.0
    %1276 = vmatpush1.xpose.msra.mxu0 0.0
    %1277 = vmatprep.subr.mxu0 0.0
    %1278 = vmatpush1.xpose.msra.mxu0 0.0
    %1279 = vmatprep.subr.mxu0 0.0
    %1280 = vmatpush1.xpose.msra.mxu0 0.0
    %1281 = vmatprep.subr.mxu0 0.0
    %1282 = vmatpush1.xpose.msra.mxu0 0.0
    %1283 = vmatprep.subr.mxu0 0.0
    %1284 = vmatpush1.xpose.msra.mxu0 0.0
    %1285 = vmatprep.subr.mxu0 0.0
    %1286 = vmatpush1.xpose.msra.mxu0 0.0
    %1287 = vmatprep.subr.mxu0 0.0
    %1288 = vmatpush1.xpose.msra.mxu0 0.0
    %1289 = vmatprep.subr.mxu0 0.0
    %1290 = vmatpush1.xpose.msra.mxu0 0.0
    %1291 = vmatprep.subr.mxu0 0.0
    %1292 = vmatpush1.xpose.msra.mxu0 0.0
    %1293 = vmatprep.subr.mxu0 0.0
    %1294 = vmatpush1.xpose.msra.mxu0 0.0
    %1295 = vmatprep.subr.mxu0 0.0
    %1296 = vmatpush1.xpose.msra.mxu0 0.0
    %1297 = vmatprep.subr.mxu0 0.0
    %1298 = vmatpush1.xpose.msra.mxu0 0.0
    %1299 = vmatprep.subr.mxu0 0.0
    %1300 = vmatpush1.xpose.msra.mxu0 0.0
    %1301 = vmatprep.subr.mxu0 0.0
    %1302 = vmatpush1.xpose.msra.mxu0 0.0
    %1303 = vmatprep.subr.mxu0 0.0
    %1304 = vmatpush1.xpose.msra.mxu0 0.0
    %1305 = vmatprep.subr.mxu0 0.0
    %1306 = vmatpush1.xpose.msra.mxu0 0.0
    %1307 = vmatprep.mubr.f32.mxu0 0.0
    %1308 = vmatmul.mubr.f32.gmra.mrb[0].mxu0 %v1232
    %v1309 = vpop.f32.mrb[0].mxu0
    %v1310 = vadd.f32 0.0, %v1309
    %v1311 = vpop.f32.mrb[0].mxu0
    %1312 = vmatprep.mubr.f32.mxu0 0.0
    %1313 = vmatmul.mubr.f32.gmra.mrb[0].mxu0 %v1235
    %v1314 = vpop.f32.mrb[0].mxu0
    %v1315 = vadd.f32 0.0, %v1314
    %v1316 = vpop.f32.mrb[0].mxu0
    %1317 = vdwg.mxu0
    %v1318 = vmax.f32 %v94, %v1310
    %v1319 = vmax.f32 %v95, %v1315
    %v1320 = vsel %vm98, %v1318, 0.0
    %1321 = vadd.xlane.f32.xlu0 %v1320
    %v1322 = vpop.xlane.xlu0 %1321
    %v1323 = vsel %vm102, %v1319, 0.0
    %1324 = vadd.xlane.f32.xlu0 %v1323
    %v1325 = vpop.xlane.xlu0 %1324
    %v1326 = vrcp.pop 11.0
    %v1327 = vmul.f32 %v1322, %v1326
    %v1328 = vmul.f32 %v1325, %v1326
    %v1329 = vxor.u32 %v1229, 2147483648
    %v1330 = vxor.u32 %v1230, 2147483648
    %v1331 = vmul.f32 %v1329, 1.442695
    %v1332 = vpow.pop %v1331
    %v1333 = vmul.f32 %v1330, 1.442695
    %v1334 = vpow.pop %v1333
    %v1335 = vadd.f32 %v1332, 1.0
    %v1336 = vadd.f32 %v1334, 1.0
    %v1337 = vrcp.pop %v1335
    %v1338 = vmul.f32 1.0, %v1337
    %v1339 = vrcp.pop %v1336
    %v1340 = vmul.f32 1.0, %v1339
    %v1341 = vxor.u32 %v1327, 2147483648
    %v1342 = vxor.u32 %v1328, 2147483648
    %v1343 = vmul.f32 %v1341, 1.442695
    %v1344 = vpow.pop %v1343
    %v1345 = vmul.f32 %v1342, 1.442695
    %v1346 = vpow.pop %v1345
    %v1347 = vadd.f32 %v1344, 1.0
    %v1348 = vadd.f32 %v1346, 1.0
    %v1349 = vrcp.pop %v1347
    %v1350 = vmul.f32 1.0, %v1349
    %v1351 = vrcp.pop %v1348
    %v1352 = vmul.f32 1.0, %v1351
    %v1353 = vand.u32 2147483647, %v1338
    %v1354 = vand.u32 2147483647, %v1340
    %vm1355 = vcmask 7168
    %v1356 = vsel %vm1355, %v1353, -inf
    %vm1357 = vcmask 3072
    %v1358 = vsel %vm1357, %v1354, -inf
    %v1359 = vmax.f32 %v1356, %v1358
    %v1360 = vrot.slane %v1359, 4
    %v1361 = vmax.f32 %v1359, %v1360
    %v1362 = vrot.slane %v1361, 2
    %v1363 = vmax.f32 %v1361, %v1362
    %v1364 = vrot.slane %v1363, 1
    %v1365 = vmax.f32 %v1363, %v1364
    %v1366 = vrcp.pop %v1365
    %v1367 = vmul.f32 %v1338, %v1366
    %v1368 = vmul.f32 %v1340, %v1366
    %v1369 = vand.u32 2147483647, %v1350
    %v1370 = vand.u32 2147483647, %v1352
    %v1371 = vsel %vm299, %v1370, -inf
    %v1372 = vmax.f32 %v1369, %v1371
    %v1373 = vrot.slane %v1372, 4
    %v1374 = vmax.f32 %v1372, %v1373
    %v1375 = vrot.slane %v1374, 2
    %v1376 = vmax.f32 %v1374, %v1375
    %v1377 = vrot.slane %v1376, 1
    %v1378 = vmax.f32 %v1376, %v1377
    %v1379 = vrcp.pop %v1378
    %v1380 = vmul.f32 %v1350, %v1379
    %v1381 = vmul.f32 %v1352, %v1379
    %s1382 = sld [smem:[#allocation3]]
    %v1383 = vstv %s1382
    %v1384 = vmul.f32 %v1367, %v1383
    %v1385 = vmul.f32 %v1368, %v1383
    %s1386 = sld [smem:[#allocation3 + $0x80]]
    %v1387 = vstv %s1386
    %v1388 = vmul.f32 %v1380, %v1387
    %v1389 = vmul.f32 %v1381, %v1387
    %v1390 = vadd.f32 %v1384, %v1388
    %v1391 = vadd.f32 %v1385, %v1389
    %s1392 = sld [smem:[#allocation5]]
    %v1393 = vstv %s1392
    %v1394 = vadd.f32 %v1390, %v1393
    %v1395 = vadd.f32 %v1391, %v1393
    %v1396 = vxor.u32 %v1394, 2147483648
    %v1397 = vxor.u32 %v1395, 2147483648
    %v1398 = vmul.f32 %v1396, 1.442695
    %v1399 = vpow.pop %v1398
    %v1400 = vmul.f32 %v1397, 1.442695
    %v1401 = vpow.pop %v1400
    %v1402 = vadd.f32 %v1399, 1.0
    %v1403 = vadd.f32 %v1401, 1.0
    %v1404 = vrcp.pop %v1402
    %v1405 = vmul.f32 1.0, %v1404
    %v1406 = vrcp.pop %v1403
    %v1407 = vmul.f32 1.0, %v1406
    %s1408 = sld [smem:[#allocation3 + $0x1]]
    %v1409 = vstv %s1408
    %v1410 = vmul.f32 %v1367, %v1409
    %v1411 = vmul.f32 %v1368, %v1409
    %s1412 = sld [smem:[#allocation3 + $0x81]]
    %v1413 = vstv %s1412
    %v1414 = vmul.f32 %v1380, %v1413
    %v1415 = vmul.f32 %v1381, %v1413
    %v1416 = vadd.f32 %v1410, %v1414
    %v1417 = vadd.f32 %v1411, %v1415
    %s1418 = sld [smem:[#allocation5 + $0x1]]
    %v1419 = vstv %s1418
    %v1420 = vadd.f32 %v1416, %v1419
    %v1421 = vadd.f32 %v1417, %v1419
    %v1422 = vxor.u32 %v1420, 2147483648
    %v1423 = vxor.u32 %v1421, 2147483648
    %v1424 = vmul.f32 %v1422, 1.442695
    %v1425 = vpow.pop %v1424
    %v1426 = vmul.f32 %v1423, 1.442695
    %v1427 = vpow.pop %v1426
    %v1428 = vadd.f32 %v1425, 1.0
    %v1429 = vadd.f32 %v1427, 1.0
    %v1430 = vrcp.pop %v1428
    %v1431 = vmul.f32 1.0, %v1430
    %v1432 = vrcp.pop %v1429
    %v1433 = vmul.f32 1.0, %v1432
    %v1434 = vmax.f32 %v1405, %v1431
    %v1435 = vmax.f32 %v1407, %v1433
    %v1436 = vsub.f32 %v1405, %v1434
    %v1437 = vsub.f32 %v1407, %v1435
    %v1438 = vmul.f32 %v1436, 1.442695
    %v1439 = vpow.pop %v1438
    %v1440 = vmul.f32 %v1437, 1.442695
    %v1441 = vpow.pop %v1440
    %v1442 = vsub.f32 %v1431, %v1434
    %v1443 = vsub.f32 %v1433, %v1435
    %v1444 = vmul.f32 %v1442, 1.442695
    %v1445 = vpow.pop %v1444
    %v1446 = vmul.f32 %v1443, 1.442695
    %v1447 = vpow.pop %v1446
    %v1448 = vadd.f32 %v1439, %v1445
    %v1449 = vadd.f32 %v1441, %v1447
    %v1450 = vrcp.pop %v1448
    %v1451 = vmul.f32 %v1439, %v1450
    %v1452 = vrcp.pop %v1449
    %v1453 = vmul.f32 %v1441, %v1452
    %v1454 = vmul.f32 %v1367, %v1451
    %v1455 = vmul.f32 %v1368, %v1453
    %v1456 = vmul.f32 %v1445, %v1450
    %v1457 = vmul.f32 %v1447, %v1452
    %v1458 = vmul.f32 %v1380, %v1456
    %v1459 = vmul.f32 %v1381, %v1457
    %v1460 = vadd.f32 %v1454, %v1458
    %v1461 = vadd.f32 %v1455, %v1459
    %v1462 = vxor.u32 %v1460, 2147483648
    %v1463 = vxor.u32 %v1461, 2147483648
    %v1464 = vmul.f32 %v1462, 1.442695
    %v1465 = vpow.pop %v1464
    %v1466 = vmul.f32 %v1463, 1.442695
    %v1467 = vpow.pop %v1466
    %v1468 = vadd.f32 %v1465, 1.0
    %v1469 = vadd.f32 %v1467, 1.0
    %v1470 = vrcp.pop %v1468
    %v1471 = vmul.f32 1.0, %v1470
    %v1472 = vrcp.pop %v1469
    %v1473 = vmul.f32 1.0, %v1472
    %v1474 = vsel %vm1355, 1.0, 0
    %v1477 = vsel %vm1355, %v1471, 0
    %v1480 = vsel %vm1355, %v1473, 0
    %1482 = vmatprep.subr.mxu0 0.0
    %1483 = vmatpush1.xpose.msra.mxu0 %v1477
    %1484 = vmatprep.subr.mxu0 0.0
    %1485 = vmatpush1.xpose.msra.mxu0 %v1480
    %1486 = vmatprep.subr.mxu0 0.0
    %1487 = vmatpush1.xpose.msra.mxu0 0.0
    %1488 = vmatprep.subr.mxu0 0.0
    %1489 = vmatpush1.xpose.msra.mxu0 0.0
    %1490 = vmatprep.subr.mxu0 0.0
    %1491 = vmatpush1.xpose.msra.mxu0 0.0
    %1492 = vmatprep.subr.mxu0 0.0
    %1493 = vmatpush1.xpose.msra.mxu0 0.0
    %1494 = vmatprep.subr.mxu0 0.0
    %1495 = vmatpush1.xpose.msra.mxu0 0.0
    %1496 = vmatprep.subr.mxu0 0.0
    %1497 = vmatpush1.xpose.msra.mxu0 0.0
    %1498 = vmatprep.subr.mxu0 0.0
    %1499 = vmatpush1.xpose.msra.mxu0 0.0
    %1500 = vmatprep.subr.mxu0 0.0
    %1501 = vmatpush1.xpose.msra.mxu0 0.0
    %1502 = vmatprep.subr.mxu0 0.0
    %1503 = vmatpush1.xpose.msra.mxu0 0.0
    %1504 = vmatprep.subr.mxu0 0.0
    %1505 = vmatpush1.xpose.msra.mxu0 0.0
    %1506 = vmatprep.subr.mxu0 0.0
    %1507 = vmatpush1.xpose.msra.mxu0 0.0
    %1508 = vmatprep.subr.mxu0 0.0
    %1509 = vmatpush1.xpose.msra.mxu0 0.0
    %1510 = vmatprep.subr.mxu0 0.0
    %1511 = vmatpush1.xpose.msra.mxu0 0.0
    %1512 = vmatprep.subr.mxu0 0.0
    %1513 = vmatpush1.xpose.msra.mxu0 0.0
    %1514 = vmatprep.subr.mxu0 0.0
    %1515 = vmatpush1.xpose.msra.mxu0 0.0
    %1516 = vmatprep.subr.mxu0 0.0
    %1517 = vmatpush1.xpose.msra.mxu0 0.0
    %1518 = vmatprep.subr.mxu0 0.0
    %1519 = vmatpush1.xpose.msra.mxu0 0.0
    %1520 = vmatprep.subr.mxu0 0.0
    %1521 = vmatpush1.xpose.msra.mxu0 0.0
    %1522 = vmatprep.subr.mxu0 0.0
    %1523 = vmatpush1.xpose.msra.mxu0 0.0
    %1524 = vmatprep.subr.mxu0 0.0
    %1525 = vmatpush1.xpose.msra.mxu0 0.0
    %1526 = vmatprep.subr.mxu0 0.0
    %1527 = vmatpush1.xpose.msra.mxu0 0.0
    %1528 = vmatprep.subr.mxu0 0.0
    %1529 = vmatpush1.xpose.msra.mxu0 0.0
    %1530 = vmatprep.subr.mxu0 0.0
    %1531 = vmatpush1.xpose.msra.mxu0 0.0
    %1532 = vmatprep.subr.mxu0 0.0
    %1533 = vmatpush1.xpose.msra.mxu0 0.0
    %1534 = vmatprep.subr.mxu0 0.0
    %1535 = vmatpush1.xpose.msra.mxu0 0.0
    %1536 = vmatprep.subr.mxu0 0.0
    %1537 = vmatpush1.xpose.msra.mxu0 0.0
    %1538 = vmatprep.subr.mxu0 0.0
    %1539 = vmatpush1.xpose.msra.mxu0 0.0
    %1540 = vmatprep.subr.mxu0 0.0
    %1541 = vmatpush1.xpose.msra.mxu0 0.0
    %1542 = vmatprep.subr.mxu0 0.0
    %1543 = vmatpush1.xpose.msra.mxu0 0.0
    %1544 = vmatprep.subr.mxu0 0.0
    %1545 = vmatpush1.xpose.msra.mxu0 0.0
    %1546 = vmatprep.mubr.f32.mxu0 0.0
    %1547 = vmatmul.mubr.f32.gmra.mrb[0].mxu0 %v1474
    %v1548 = vpop.f32.mrb[0].mxu0
    %v1549 = vadd.f32 0.0, %v1548
    %v1550 = vpop.f32.mrb[0].mxu0
    %1551 = vdwg.mxu0
    %vm1552 = vcmask 90112
    %1553 = vst.msk [vmem:[%s16] sm:$0x1] %vm1552, %v1549
    // Predicated region
    $region66: #{edmd_pool_forward.9} parent=1 // pred_check
      _
    $region67: #{edmd_pool_forward.9} parent=1 // pred_check_branch
      %1555 = sbr.rel (0) target = $region69
    $region68: #{edmd_pool_forward.9} parent=1 // pred_region
      _
    $region69: #{edmd_pool_forward.9} parent=1 // pred_fallthru
      _
    // Predicated region
    $region70: #{edmd_pool_forward.9} parent=1 // pred_check
      _
    $region71: #{edmd_pool_forward.9} parent=1 // pred_check_branch
      %1557 = sbr.rel (0) target = $region73
    $region72: #{edmd_pool_forward.9} parent=1 // pred_region
      _
    $region73: #{edmd_pool_forward.9} parent=1 // pred_fallthru
      _
    // Predicated region
    $region74: #{edmd_pool_forward.9} parent=1 // pred_check
      _
    $region75: #{edmd_pool_forward.9} parent=1 // pred_check_branch
      %1559 = sbr.rel (0) target = $region77
    $region76: #{edmd_pool_forward.9} parent=1 // pred_region
      _
    $region77: #{edmd_pool_forward.9} parent=1 // pred_fallthru
      _
    // Predicated region
    $region78: #{edmd_pool_forward.9} parent=1 // pred_check
      _
    $region79: #{edmd_pool_forward.9} parent=1 // pred_check_branch
      %1561 = sbr.rel (0) target = $region81
    $region80: #{edmd_pool_forward.9} parent=1 // pred_region
      _
    $region81: #{edmd_pool_forward.9} parent=1 // pred_fallthru
      _
    // Predicated region
    $region82: #{edmd_pool_forward.9} parent=1 // pred_check
      _
    $region83: #{edmd_pool_forward.9} parent=1 // pred_check_branch
      %1563 = sbr.rel (0) target = $region85
    $region84: #{edmd_pool_forward.9} parent=1 // pred_region
      _
    $region85: #{edmd_pool_forward.9} parent=1 // pred_fallthru
      _
    // Predicated region
    $region86: #{edmd_pool_forward.9} parent=1 // pred_check
      _
    $region87: #{edmd_pool_forward.9} parent=1 // pred_check_branch
      %1565 = sbr.rel (0) target = $region89
    $region88: #{edmd_pool_forward.9} parent=1 // pred_region
      _
    $region89: #{edmd_pool_forward.9} parent=1 // pred_fallthru
      _
    %1566 = vsyncpa [#allocation4], 1
    %1567 = vsyncpa [#allocation6], 1

// kernel: edmd_pool_forward.10
$region0: #{edmd_pool_forward.10}
  #allocation0 [shape = 'u32[]', space=smem, size = 0x4, offset = 0x4, fixed_abs, tag = 'smem constant byte address 0x4 - core index']
  #allocation1 [shape = 'u32[144,128]{1,0:T(1,128)}', space=vmem, size = 0x12000, scoped, tag = 'internal scratch']
  %s0 = inlined_call_operand.vmem [shape: f32[12,12], index: 0, kind: input, shape index: {}]
  %s1 = inlined_call_operand.vmem [shape: f32[12,32], index: 1, kind: input, shape index: {}]
  %s2 = inlined_call_operand.vmem [shape: s32[7,1], index: 2, kind: input, shape index: {}]
  %s3 = inlined_call_operand.vmem [shape: f32[7,1], index: 3, kind: input, shape index: {}]
  %s4 = inlined_call_operand.vmem [shape: f32[7,7], index: 4, kind: output, shape index: {0}]
  %s5 = inlined_call_operand.vmem [shape: f32[7,32], index: 5, kind: output, shape index: {1}]
  %6 = xla_tuple %s4, %s5
  %s7 = sld [smem:[#allocation0]]
  $region34: #{edmd_pool_forward.10} parent=0
    _
  %s9 = ssub.s32 1, %s7
  %s10 = scalar_select 0, %s9, %s7
  // Predicated region
  $region2: #{edmd_pool_forward.10} parent=0 // pred_check
    _
  $region3: #{edmd_pool_forward.10} parent=0 // pred_check_branch
    %12 = sbr.rel (0) target = $region5
  $region4: #{edmd_pool_forward.10} parent=0 // pred_region
    _
  $region5: #{edmd_pool_forward.10} parent=0 // pred_fallthru
    _
  // Predicated region
  $region6: #{edmd_pool_forward.10} parent=0 // pred_check
    _
  $region7: #{edmd_pool_forward.10} parent=0 // pred_check_branch
    %14 = sbr.rel (0) target = $region9
  $region8: #{edmd_pool_forward.10} parent=0 // pred_region
    _
  $region9: #{edmd_pool_forward.10} parent=0 // pred_fallthru
    _
  // Predicated region
  $region10: #{edmd_pool_forward.10} parent=0 // pred_check
    _
  $region11: #{edmd_pool_forward.10} parent=0 // pred_check_branch
    %16 = sbr.rel (0) target = $region13
  $region12: #{edmd_pool_forward.10} parent=0 // pred_region
    _
  $region13: #{edmd_pool_forward.10} parent=0 // pred_fallthru
    _
  // Predicated region
  $region14: #{edmd_pool_forward.10} parent=0 // pred_check
    _
  $region15: #{edmd_pool_forward.10} parent=0 // pred_check_branch
    %18 = sbr.rel (0) target = $region17
  $region16: #{edmd_pool_forward.10} parent=0 // pred_region
    _
  $region17: #{edmd_pool_forward.10} parent=0 // pred_fallthru
    _
  %v20 = vld [vmem:[%s0] sm:$0xff]
  %v21 = vld [vmem:[%s0 + $0x8] sm:$0xf]
  %vm22 = vcmp.ne.f32.partialorder %v20, 0.0
  %vm23 = vcmp.ne.f32.partialorder %v21, 0.0
  %v24 = vsel %vm22, 1, 0
  %v25 = vsel %vm23, 1, 0
  %v26 = vcvt.s32.f32 %v24
  %v27 = vcvt.s32.f32 %v25
  %v28 = vpack.c.bf16 %v27, %v26
  %vm29 = vcmask 97280
  %v31 = vsel %vm29, %v28, 0
  %vm33 = vcmask 1045504
  %v34 = vsel %vm33, %v28, 0
  %36 = vmatprep.subr.bf16.mxu0 0
  %37 = vmatpush1.bf16.msra.mxu0 %v34
  %38 = vmatprep.subr.bf16.mxu0 0
  %39 = vmatpush1.bf16.msra.mxu0 0
  %40 = vmatprep.subr.bf16.mxu0 0
  %41 = vmatpush1.bf16.msra.mxu0 0
  %42 = vmatprep.subr.bf16.mxu0 0
  %43 = vmatpush1.bf16.msra.mxu0 0
  %44 = vmatprep.subr.bf16.mxu0 0
  %45 = vmatpush1.bf16.msra.mxu0 0
  %46 = vmatprep.subr.bf16.mxu0 0
  %47 = vmatpush1.bf16.msra.mxu0 0
  %48 = vmatprep.subr.bf16.mxu0 0
  %49 = vmatpush1.bf16.msra.mxu0 0
  %50 = vmatprep.subr.bf16.mxu0 0
  %51 = vmatpush1.bf16.msra.mxu0 0
  %52 = vmatprep.subr.bf16.mxu0 0
  %53 = vmatpush1.bf16.msra.mxu0 0
  %54 = vmatprep.subr.bf16.mxu0 0
  %55 = vmatpush1.bf16.msra.mxu0 0
  %56 = vmatprep.subr.bf16.mxu0 0
  %57 = vmatpush1.bf16.msra.mxu0 0
  %58 = vmatprep.subr.bf16.mxu0 0
  %59 = vmatpush1.bf16.msra.mxu0 0
  %60 = vmatprep.subr.bf16.mxu0 0
  %61 = vmatpush1.bf16.msra.mxu0 0
  %62 = vmatprep.subr.bf16.mxu0 0
  %63 = vmatpush1.bf16.msra.mxu0 0
  %64 = vmatprep.subr.bf16.mxu0 0
  %65 = vmatpush1.bf16.msra.mxu0 0
  %66 = vmatprep.subr.bf16.mxu0 0
  %67 = vmatpush1.bf16.msra.mxu0 0
  %68 = vmatprep.mubr.bf16.mxu0 0
  %69 = vmatmul.mubr.bf16.gmra.mrb[0].mxu0 %v31
  %v70 = vpop.f32.mrb[0].mxu0
  %v71 = vadd.f32 0.0, %v70
  %v72 = vpop.f32.mrb[0].mxu0
  %v73 = vpop.f32.mrb[0].mxu0
  %v74 = vadd.f32 0.0, %v73
  %v75 = vpop.f32.mrb[0].mxu0
  %76 = vdwg.mxu0
  %vm77 = vcmp.gt.f32.partialorder %v71, 0.5
  %vm78 = vcmp.gt.f32.partialorder %v74, 0.5
  %v79 = vsel %vm77, 1, 0
  %v80 = vsel %vm78, 1, 0
  %v81 = vcvt.s32.f32 %v79
  %v82 = vcvt.s32.f32 %v80
  %v83 = vld [vmem:[%s2] sm:$0x7f]
  %v84 = vlaneseq
  %v85 = vand.u32 %v84, 127
  %86 = vset.pattern.permute.xlu0 0
  %87 = vperm.xlu0 %86, %v83
  %v88 = vpop.permute.xlu0 %87
  %vm89 = vcmp.eq.s32.totalorder %v85, %v88
  %v90 = vsel %vm89, 1, 0
  %v91 = vcvt.s32.f32 %v90
  %v93 = vsel %vm29, %v91, 0
  %vm95 = vcmask 1043456
  %v97 = vsel %vm95, %v82, 0
  %99 = vmatprep.subr.mxu0 0.0
  %100 = vmatpush1.msra.mxu0 %v81
  %101 = vmatprep.subr.mxu0 0.0
  %102 = vmatpush1.msra.mxu0 %v97
  %103 = vmatprep.subr.mxu0 0.0
  %104 = vmatpush1.msra.mxu0 0.0
  %105 = vmatprep.subr.mxu0 0.0
  %106 = vmatpush1.msra.mxu0 0.0
  %107 = vmatprep.subr.mxu0 0.0
  %108 = vmatpush1.msra.mxu0 0.0
  %109 = vmatprep.subr.mxu0 0.0
  %110 = vmatpush1.msra.mxu0 0.0
  %111 = vmatprep.subr.mxu0 0.0
  %112 = vmatpush1.msra.mxu0 0.0
  %113 = vmatprep.subr.mxu0 0.0
  %114 = vmatpush1.msra.mxu0 0.0
  %115 = vmatprep.subr.mxu0 0.0
  %116 = vmatpush1.msra.mxu0 0.0
  %117 = vmatprep.subr.mxu0 0.0
  %118 = vmatpush1.msra.mxu0 0.0
  %119 = vmatprep.subr.mxu0 0.0
  %120 = vmatpush1.msra.mxu0 0.0
  %121 = vmatprep.subr.mxu0 0.0
  %122 = vmatpush1.msra.mxu0 0.0
  %123 = vmatprep.subr.mxu0 0.0
  %124 = vmatpush1.msra.mxu0 0.0
  %125 = vmatprep.subr.mxu0 0.0
  %126 = vmatpush1.msra.mxu0 0.0
  %127 = vmatprep.subr.mxu0 0.0
  %128 = vmatpush1.msra.mxu0 0.0
  %129 = vmatprep.subr.mxu0 0.0
  %130 = vmatpush1.msra.mxu0 0.0
  %131 = vmatprep.subr.mxu0 0.0
  %132 = vmatpush1.msra.mxu0 0.0
  %133 = vmatprep.subr.mxu0 0.0
  %134 = vmatpush1.msra.mxu0 0.0
  %135 = vmatprep.subr.mxu0 0.0
  %136 = vmatpush1.msra.mxu0 0.0
  %137 = vmatprep.subr.mxu0 0.0
  %138 = vmatpush1.msra.mxu0 0.0
  %139 = vmatprep.subr.mxu0 0.0
  %140 = vmatpush1.msra.mxu0 0.0
  %141 = vmatprep.subr.mxu0 0.0
  %142 = vmatpush1.msra.mxu0 0.0
  %143 = vmatprep.subr.mxu0 0.0
  %144 = vmatpush1.msra.mxu0 0.0
  %145 = vmatprep.subr.mxu0 0.0
  %146 = vmatpush1.msra.mxu0 0.0
  %147 = vmatprep.subr.mxu0 0.0
  %148 = vmatpush1.msra.mxu0 0.0
  %149 = vmatprep.subr.mxu0 0.0
  %150 = vmatpush1.msra.mxu0 0.0
  %151 = vmatprep.subr.mxu0 0.0
  %152 = vmatpush1.msra.mxu0 0.0
  %153 = vmatprep.subr.mxu0 0.0
  %154 = vmatpush1.msra.mxu0 0.0
  %155 = vmatprep.subr.mxu0 0.0
  %156 = vmatpush1.msra.mxu0 0.0
  %157 = vmatprep.subr.mxu0 0.0
  %158 = vmatpush1.msra.mxu0 0.0
  %159 = vmatprep.subr.mxu0 0.0
  %160 = vmatpush1.msra.mxu0 0.0
  %161 = vmatprep.subr.mxu0 0.0
  %162 = vmatpush1.msra.mxu0 0.0
  %163 = vmatprep.mubr.f32.mxu0 0.0
  %164 = vmatmul.mubr.f32.gmra.mrb[0].mxu0 %v93
  %v165 = vpop.f32.mrb[0].mxu0
  %v166 = vadd.f32 0.0, %v165
  %v167 = vpop.f32.mrb[0].mxu0
  %168 = vdwg.mxu0
  %v170 = vsel %vm29, %v166, 0
  %172 = vmatprep.subr.mxu0 0.0
  %173 = vmatpush1.xpose.msra.mxu0 %v93
  %174 = vmatprep.subr.mxu0 0.0
  %175 = vmatpush1.xpose.msra.mxu0 0.0
  %176 = vmatprep.subr.mxu0 0.0
  %177 = vmatpush1.xpose.msra.mxu0 0.0
  %178 = vmatprep.subr.mxu0 0.0
  %179 = vmatpush1.xpose.msra.mxu0 0.0
  %180 = vmatprep.subr.mxu0 0.0
  %181 = vmatpush1.xpose.msra.mxu0 0.0
  %182 = vmatprep.subr.mxu0 0.0
  %183 = vmatpush1.xpose.msra.mxu0 0.0
  %184 = vmatprep.subr.mxu0 0.0
  %185 = vmatpush1.xpose.msra.mxu0 0.0
  %186 = vmatprep.subr.mxu0 0.0
  %187 = vmatpush1.xpose.msra.mxu0 0.0
  %188 = vmatprep.subr.mxu0 0.0
  %189 = vmatpush1.xpose.msra.mxu0 0.0
  %190 = vmatprep.subr.mxu0 0.0
  %191 = vmatpush1.xpose.msra.mxu0 0.0
  %192 = vmatprep.subr.mxu0 0.0
  %193 = vmatpush1.xpose.msra.mxu0 0.0
  %194 = vmatprep.subr.mxu0 0.0
  %195 = vmatpush1.xpose.msra.mxu0 0.0
  %196 = vmatprep.subr.mxu0 0.0
  %197 = vmatpush1.xpose.msra.mxu0 0.0
  %198 = vmatprep.subr.mxu0 0.0
  %199 = vmatpush1.xpose.msra.mxu0 0.0
  %200 = vmatprep.subr.mxu0 0.0
  %201 = vmatpush1.xpose.msra.mxu0 0.0
  %202 = vmatprep.subr.mxu0 0.0
  %203 = vmatpush1.xpose.msra.mxu0 0.0
  %204 = vmatprep.subr.mxu0 0.0
  %205 = vmatpush1.xpose.msra.mxu0 0.0
  %206 = vmatprep.subr.mxu0 0.0
  %207 = vmatpush1.xpose.msra.mxu0 0.0
  %208 = vmatprep.subr.mxu0 0.0
  %209 = vmatpush1.xpose.msra.mxu0 0.0
  %210 = vmatprep.subr.mxu0 0.0
  %211 = vmatpush1.xpose.msra.mxu0 0.0
  %212 = vmatprep.subr.mxu0 0.0
  %213 = vmatpush1.xpose.msra.mxu0 0.0
  %214 = vmatprep.subr.mxu0 0.0
  %215 = vmatpush1.xpose.msra.mxu0 0.0
  %216 = vmatprep.subr.mxu0 0.0
  %217 = vmatpush1.xpose.msra.mxu0 0.0
  %218 = vmatprep.subr.mxu0 0.0
  %219 = vmatpush1.xpose.msra.mxu0 0.0
  %220 = vmatprep.subr.mxu0 0.0
  %221 = vmatpush1.xpose.msra.mxu0 0.0
  %222 = vmatprep.subr.mxu0 0.0
  %223 = vmatpush1.xpose.msra.mxu0 0.0
  %224 = vmatprep.subr.mxu0 0.0
  %225 = vmatpush1.xpose.msra.mxu0 0.0
  %226 = vmatprep.subr.mxu0 0.0
  %227 = vmatpush1.xpose.msra.mxu0 0.0
  %228 = vmatprep.subr.mxu0 0.0
  %229 = vmatpush1.xpose.msra.mxu0 0.0
  %230 = vmatprep.subr.mxu0 0.0
  %231 = vmatpush1.xpose.msra.mxu0 0.0
  %232 = vmatprep.subr.mxu0 0.0
  %233 = vmatpush1.xpose.msra.mxu0 0.0
  %234 = vmatprep.subr.mxu0 0.0
  %235 = vmatpush1.xpose.msra.mxu0 0.0
  %236 = vmatprep.mubr.f32.mxu0 0.0
  %237 = vmatmul.mubr.f32.gmra.mrb[0].mxu0 %v170
  %v238 = vpop.f32.mrb[0].mxu0
  %v239 = vadd.f32 0.0, %v238
  %v240 = vpop.f32.mrb[0].mxu0
  %241 = vdwg.mxu0
  %vm242 = vcmask 56320
  %v244 = vsel %vm242, 1.0, 0
  %v247 = vsel %vm242, %v239, 0
  %249 = vmatprep.subr.mxu0 0.0
  %250 = vmatpush1.xpose.msra.mxu0 %v247
  %251 = vmatprep.subr.mxu0 0.0
  %252 = vmatpush1.xpose.msra.mxu0 0.0
  %253 = vmatprep.subr.mxu0 0.0
  %254 = vmatpush1.xpose.msra.mxu0 0.0
  %255 = vmatprep.subr.mxu0 0.0
  %256 = vmatpush1.xpose.msra.mxu0 0.0
  %257 = vmatprep.subr.mxu0 0.0
  %258 = vmatpush1.xpose.msra.mxu0 0.0
  %259 = vmatprep.subr.mxu0 0.0
  %260 = vmatpush1.xpose.msra.mxu0 0.0
  %261 = vmatprep.subr.mxu0 0.0
  %262 = vmatpush1.xpose.msra.mxu0 0.0
  %263 = vmatprep.subr.mxu0 0.0
  %264 = vmatpush1.xpose.msra.mxu0 0.0
  %265 = vmatprep.subr.mxu0 0.0
  %266 = vmatpush1.xpose.msra.mxu0 0.0
  %267 = vmatprep.subr.mxu0 0.0
  %268 = vmatpush1.xpose.msra.mxu0 0.0
  %269 = vmatprep.subr.mxu0 0.0
  %270 = vmatpush1.xpose.msra.mxu0 0.0
  %271 = vmatprep.subr.mxu0 0.0
  %272 = vmatpush1.xpose.msra.mxu0 0.0
  %273 = vmatprep.subr.mxu0 0.0
  %274 = vmatpush1.xpose.msra.mxu0 0.0
  %275 = vmatprep.subr.mxu0 0.0
  %276 = vmatpush1.xpose.msra.mxu0 0.0
  %277 = vmatprep.subr.mxu0 0.0
  %278 = vmatpush1.xpose.msra.mxu0 0.0
  %279 = vmatprep.subr.mxu0 0.0
  %280 = vmatpush1.xpose.msra.mxu0 0.0
  %281 = vmatprep.subr.mxu0 0.0
  %282 = vmatpush1.xpose.msra.mxu0 0.0
  %283 = vmatprep.subr.mxu0 0.0
  %284 = vmatpush1.xpose.msra.mxu0 0.0
  %285 = vmatprep.subr.mxu0 0.0
  %286 = vmatpush1.xpose.msra.mxu0 0.0
  %287 = vmatprep.subr.mxu0 0.0
  %288 = vmatpush1.xpose.msra.mxu0 0.0
  %289 = vmatprep.subr.mxu0 0.0
  %290 = vmatpush1.xpose.msra.mxu0 0.0
  %291 = vmatprep.subr.mxu0 0.0
  %292 = vmatpush1.xpose.msra.mxu0 0.0
  %293 = vmatprep.subr.mxu0 0.0
  %294 = vmatpush1.xpose.msra.mxu0 0.0
  %295 = vmatprep.subr.mxu0 0.0
  %296 = vmatpush1.xpose.msra.mxu0 0.0
  %297 = vmatprep.subr.mxu0 0.0
  %298 = vmatpush1.xpose.msra.mxu0 0.0
  %299 = vmatprep.subr.mxu0 0.0
  %300 = vmatpush1.xpose.msra.mxu0 0.0
  %301 = vmatprep.subr.mxu0 0.0
  %302 = vmatpush1.xpose.msra.mxu0 0.0
  %303 = vmatprep.subr.mxu0 0.0
  %304 = vmatpush1.xpose.msra.mxu0 0.0
  %305 = vmatprep.subr.mxu0 0.0
  %306 = vmatpush1.xpose.msra.mxu0 0.0
  %307 = vmatprep.subr.mxu0 0.0
  %308 = vmatpush1.xpose.msra.mxu0 0.0
  %309 = vmatprep.subr.mxu0 0.0
  %310 = vmatpush1.xpose.msra.mxu0 0.0
  %311 = vmatprep.subr.mxu0 0.0
  %312 = vmatpush1.xpose.msra.mxu0 0.0
  %313 = vmatprep.mubr.f32.mxu0 0.0
  %314 = vmatmul.mubr.f32.gmra.mrb[0].mxu0 %v244
  %v315 = vpop.f32.mrb[0].mxu0
  %v316 = vadd.f32 0.0, %v315
  %v317 = vpop.f32.mrb[0].mxu0
  %318 = vdwg.mxu0
  %v319 = vlaneseq
  %v320 = vshrl.u32 %v319, 7
  %v321 = vsub.s32 0, %v320
  %v322 = vrot.slane %v316, %v321
  %v323 = vrcp.pop %v322
  %v324 = vmul.f32 %v239, %v323
  %vm325 = vcmask 55296
  %326 = vst.msk [vmem:[%s4] sm:$0x7f] %vm325, %v324
  %v327 = vld [vmem:[%s3] sm:$0x7f]
  %329 = vset.pattern.permute.xlu0 0
  %330 = vperm.xlu0 %329, %v327
  %v331 = vpop.permute.xlu0 %330
  %v333 = vmul.f32 %v91, %v331
  %v334 = vld [vmem:[%s1] sm:$0xff]
  %v335 = vld [vmem:[%s1 + $0x8] sm:$0xf]
  %v337 = vsel %vm29, %v333, 0
  %v340 = vsel %vm95, %v335, 0
  %342 = vmatprep.subr.mxu0 0.0
  %343 = vmatpush1.msra.mxu0 %v334
  %344 = vmatprep.subr.mxu0 0.0
  %345 = vmatpush1.msra.mxu0 %v340
  %346 = vmatprep.subr.mxu0 0.0
  %347 = vmatpush1.msra.mxu0 0.0
  %348 = vmatprep.subr.mxu0 0.0
  %349 = vmatpush1.msra.mxu0 0.0
  %350 = vmatprep.subr.mxu0 0.0
  %351 = vmatpush1.msra.mxu0 0.0
  %352 = vmatprep.subr.mxu0 0.0
  %353 = vmatpush1.msra.mxu0 0.0
  %354 = vmatprep.subr.mxu0 0.0
  %355 = vmatpush1.msra.mxu0 0.0
  %356 = vmatprep.subr.mxu0 0.0
  %357 = vmatpush1.msra.mxu0 0.0
  %358 = vmatprep.subr.mxu0 0.0
  %359 = vmatpush1.msra.mxu0 0.0
  %360 = vmatprep.subr.mxu0 0.0
  %361 = vmatpush1.msra.mxu0 0.0
  %362 = vmatprep.subr.mxu0 0.0
  %363 = vmatpush1.msra.mxu0 0.0
  %364 = vmatprep.subr.mxu0 0.0
  %365 = vmatpush1.msra.mxu0 0.0
  %366 = vmatprep.subr.mxu0 0.0
  %367 = vmatpush1.msra.mxu0 0.0
  %368 = vmatprep.subr.mxu0 0.0
  %369 = vmatpush1.msra.mxu0 0.0
  %370 = vmatprep.subr.mxu0 0.0
  %371 = vmatpush1.msra.mxu0 0.0
  %372 = vmatprep.subr.mxu0 0.0
  %373 = vmatpush1.msra.mxu0 0.0
  %374 = vmatprep.subr.mxu0 0.0
  %375 = vmatpush1.msra.mxu0 0.0
  %376 = vmatprep.subr.mxu0 0.0
  %377 = vmatpush1.msra.mxu0 0.0
  %378 = vmatprep.subr.mxu0 0.0
  %379 = vmatpush1.msra.mxu0 0.0
  %380 = vmatprep.subr.mxu0 0.0
  %381 = vmatpush1.msra.mxu0 0.0
  %382 = vmatprep.subr.mxu0 0.0
  %383 = vmatpush1.msra.mxu0 0.0
  %384 = vmatprep.subr.mxu0 0.0
  %385 = vmatpush1.msra.mxu0 0.0
  %386 = vmatprep.subr.mxu0 0.0
  %387 = vmatpush1.msra.mxu0 0.0
  %388 = vmatprep.subr.mxu0 0.0
  %389 = vmatpush1.msra.mxu0 0.0
  %390 = vmatprep.subr.mxu0 0.0
  %391 = vmatpush1.msra.mxu0 0.0
  %392 = vmatprep.subr.mxu0 0.0
  %393 = vmatpush1.msra.mxu0 0.0
  %394 = vmatprep.subr.mxu0 0.0
  %395 = vmatpush1.msra.mxu0 0.0
  %396 = vmatprep.subr.mxu0 0.0
  %397 = vmatpush1.msra.mxu0 0.0
  %398 = vmatprep.subr.mxu0 0.0
  %399 = vmatpush1.msra.mxu0 0.0
  %400 = vmatprep.subr.mxu0 0.0
  %401 = vmatpush1.msra.mxu0 0.0
  %402 = vmatprep.subr.mxu0 0.0
  %403 = vmatpush1.msra.mxu0 0.0
  %404 = vmatprep.subr.mxu0 0.0
  %405 = vmatpush1.msra.mxu0 0.0
  %406 = vmatprep.mubr.f32.mxu0 0.0
  %407 = vmatmul.mubr.f32.gmra.mrb[0].mxu0 %v337
  %v408 = vpop.f32.mrb[0].mxu0
  %v409 = vadd.f32 0.0, %v408
  %v410 = vpop.f32.mrb[0].mxu0
  %411 = vdwg.mxu0
  %vm412 = vcmask 260096
  %413 = vst.msk [vmem:[%s5] sm:$0x7f] %vm412, %v409
  // Predicated region
  $region18: #{edmd_pool_forward.10} parent=0 // pred_check
    _
  $region19: #{edmd_pool_forward.10} parent=0 // pred_check_branch
    %415 = sbr.rel (0) target = $region21
  $region20: #{edmd_pool_forward.10} parent=0 // pred_region
    _
  $region21: #{edmd_pool_forward.10} parent=0 // pred_fallthru
    _
  // Predicated region
  $region22: #{edmd_pool_forward.10} parent=0 // pred_check
    _
  $region23: #{edmd_pool_forward.10} parent=0 // pred_check_branch
    %417 = sbr.rel (0) target = $region25
  $region24: #{edmd_pool_forward.10} parent=0 // pred_region
    _
  $region25: #{edmd_pool_forward.10} parent=0 // pred_fallthru
    _
  // Predicated region
  $region26: #{edmd_pool_forward.10} parent=0 // pred_check
    _
  $region27: #{edmd_pool_forward.10} parent=0 // pred_check_branch
    %419 = sbr.rel (0) target = $region29
  $region28: #{edmd_pool_forward.10} parent=0 // pred_region
    _
  $region29: #{edmd_pool_forward.10} parent=0 // pred_fallthru
    _
  // Predicated region
  $region30: #{edmd_pool_forward.10} parent=0 // pred_check
    _
  $region31: #{edmd_pool_forward.10} parent=0 // pred_check_branch
    %421 = sbr.rel (0) target = $region33
  $region32: #{edmd_pool_forward.10} parent=0 // pred_region
    _
  $region33: #{edmd_pool_forward.10} parent=0 // pred_fallthru
    _

// kernel: edmd_pool_forward.11
$region0: #{edmd_pool_forward.11}
  #allocation0 [shape = 'u32[]', space=smem, size = 0x4, offset = 0x4, fixed_abs, tag = 'smem constant byte address 0x4 - core index']
  #allocation1 [shape = 'u32[144,128]{1,0:T(1,128)}', space=vmem, size = 0x12000, scoped, tag = 'internal scratch']
  %s0 = inlined_call_operand.vmem [shape: f32[7,7], index: 0, kind: input, shape index: {}]
  %s1 = inlined_call_operand.vmem [shape: f32[7,32], index: 1, kind: input, shape index: {}]
  %s2 = inlined_call_operand.vmem [shape: f32[32,32], index: 2, kind: input, shape index: {}]
  %s3 = inlined_call_operand.vmem [shape: f32[1,32], index: 3, kind: input, shape index: {}]
  %s4 = inlined_call_operand.vmem [shape: f32[7,32], index: 4, kind: output, shape index: {}]
  %s5 = sld [smem:[#allocation0]]
  $region26: #{edmd_pool_forward.11} parent=0
    _
  %s7 = ssub.s32 1, %s5
  %s8 = scalar_select 0, %s7, %s5
  // Predicated region
  $region2: #{edmd_pool_forward.11} parent=0 // pred_check
    _
  $region3: #{edmd_pool_forward.11} parent=0 // pred_check_branch
    %10 = sbr.rel (0) target = $region5
  $region4: #{edmd_pool_forward.11} parent=0 // pred_region
    _
  $region5: #{edmd_pool_forward.11} parent=0 // pred_fallthru
    _
  // Predicated region
  $region6: #{edmd_pool_forward.11} parent=0 // pred_check
    _
  $region7: #{edmd_pool_forward.11} parent=0 // pred_check_branch
    %12 = sbr.rel (0) target = $region9
  $region8: #{edmd_pool_forward.11} parent=0 // pred_region
    _
  $region9: #{edmd_pool_forward.11} parent=0 // pred_fallthru
    _
  // Predicated region
  $region10: #{edmd_pool_forward.11} parent=0 // pred_check
    _
  $region11: #{edmd_pool_forward.11} parent=0 // pred_check_branch
    %14 = sbr.rel (0) target = $region13
  $region12: #{edmd_pool_forward.11} parent=0 // pred_region
    _
  $region13: #{edmd_pool_forward.11} parent=0 // pred_fallthru
    _
  // Predicated region
  $region14: #{edmd_pool_forward.11} parent=0 // pred_check
    _
  $region15: #{edmd_pool_forward.11} parent=0 // pred_check_branch
    %16 = sbr.rel (0) target = $region17
  $region16: #{edmd_pool_forward.11} parent=0 // pred_region
    _
  $region17: #{edmd_pool_forward.11} parent=0 // pred_fallthru
    _
  %v17 = vld [vmem:[%s0] sm:$0x7f]
  %v18 = vlaneseq
  %v19 = vshrl.u32 %v18, 7
  %v20 = vlaneseq
  %v21 = vand.u32 %v20, 127
  %vm22 = vcmp.eq.s32.totalorder %v19, %v21
  %v23 = vsel %vm22, 1, 0
  %v24 = vcvt.s32.f32 %v23
  %vm25 = vcmp.ne.f32.partialorder %v17, 0.0
  %v26 = vsel %vm25, 1, 0
  %v27 = vcvt.s32.f32 %v26
  %v28 = vmax.f32 %v27, %v24
  %vm29 = vcmask 55296
  %v30 = vsel %vm29, %v28, 0.0
  %31 = vadd.xlane.f32.xlu0 %v30
  %v32 = vpop.xlane.xlu0 %31
  %vm33 = vcmask 56320
  %v35 = vsel %vm33, 1.0, 0
  %v38 = vsel %vm33, %v28, 0
  %40 = vmatprep.subr.mxu0 0.0
  %41 = vmatpush1.xpose.msra.mxu0 %v38
  %42 = vmatprep.subr.mxu0 0.0
  %43 = vmatpush1.xpose.msra.mxu0 0.0
  %44 = vmatprep.subr.mxu0 0.0
  %45 = vmatpush1.xpose.msra.mxu0 0.0
  %46 = vmatprep.subr.mxu0 0.0
  %47 = vmatpush1.xpose.msra.mxu0 0.0
  %48 = vmatprep.subr.mxu0 0.0
  %49 = vmatpush1.xpose.msra.mxu0 0.0
  %50 = vmatprep.subr.mxu0 0.0
  %51 = vmatpush1.xpose.msra.mxu0 0.0
  %52 = vmatprep.subr.mxu0 0.0
  %53 = vmatpush1.xpose.msra.mxu0 0.0
  %54 = vmatprep.subr.mxu0 0.0
  %55 = vmatpush1.xpose.msra.mxu0 0.0
  %56 = vmatprep.subr.mxu0 0.0
  %57 = vmatpush1.xpose.msra.mxu0 0.0
  %58 = vmatprep.subr.mxu0 0.0
  %59 = vmatpush1.xpose.msra.mxu0 0.0
  %60 = vmatprep.subr.mxu0 0.0
  %61 = vmatpush1.xpose.msra.mxu0 0.0
  %62 = vmatprep.subr.mxu0 0.0
  %63 = vmatpush1.xpose.msra.mxu0 0.0
  %64 = vmatprep.subr.mxu0 0.0
  %65 = vmatpush1.xpose.msra.mxu0 0.0
  %66 = vmatprep.subr.mxu0 0.0
  %67 = vmatpush1.xpose.msra.mxu0 0.0
  %68 = vmatprep.subr.mxu0 0.0
  %69 = vmatpush1.xpose.msra.mxu0 0.0
  %70 = vmatprep.subr.mxu0 0.0
  %71 = vmatpush1.xpose.msra.mxu0 0.0
  %72 = vmatprep.subr.mxu0 0.0
  %73 = vmatpush1.xpose.msra.mxu0 0.0
  %74 = vmatprep.subr.mxu0 0.0
  %75 = vmatpush1.xpose.msra.mxu0 0.0
  %76 = vmatprep.subr.mxu0 0.0
  %77 = vmatpush1.xpose.msra.mxu0 0.0
  %78 = vmatprep.subr.mxu0 0.0
  %79 = vmatpush1.xpose.msra.mxu0 0.0
  %80 = vmatprep.subr.mxu0 0.0
  %81 = vmatpush1.xpose.msra.mxu0 0.0
  %82 = vmatprep.subr.mxu0 0.0
  %83 = vmatpush1.xpose.msra.mxu0 0.0
  %84 = vmatprep.subr.mxu0 0.0
  %85 = vmatpush1.xpose.msra.mxu0 0.0
  %86 = vmatprep.subr.mxu0 0.0
  %87 = vmatpush1.xpose.msra.mxu0 0.0
  %88 = vmatprep.subr.mxu0 0.0
  %89 = vmatpush1.xpose.msra.mxu0 0.0
  %90 = vmatprep.subr.mxu0 0.0
  %91 = vmatpush1.xpose.msra.mxu0 0.0
  %92 = vmatprep.subr.mxu0 0.0
  %93 = vmatpush1.xpose.msra.mxu0 0.0
  %94 = vmatprep.subr.mxu0 0.0
  %95 = vmatpush1.xpose.msra.mxu0 0.0
  %96 = vmatprep.subr.mxu0 0.0
  %97 = vmatpush1.xpose.msra.mxu0 0.0
  %98 = vmatprep.subr.mxu0 0.0
  %99 = vmatpush1.xpose.msra.mxu0 0.0
  %100 = vmatprep.subr.mxu0 0.0
  %101 = vmatpush1.xpose.msra.mxu0 0.0
  %102 = vmatprep.subr.mxu0 0.0
  %103 = vmatpush1.xpose.msra.mxu0 0.0
  %104 = vmatprep.mubr.f32.mxu0 0.0
  %105 = vmatmul.mubr.f32.gmra.mrb[0].mxu0 %v35
  %v106 = vpop.f32.mrb[0].mxu0
  %v107 = vadd.f32 0.0, %v106
  %v108 = vpop.f32.mrb[0].mxu0
  %109 = vdwg.mxu0
  %v110 = vrsqrt.pop %v32
  %v111 = vmul.f32 %v28, %v110
  %v112 = vrsqrt.pop %v107
  %v113 = vlaneseq
  %v114 = vshrl.u32 %v113, 7
  %v115 = vsub.s32 0, %v114
  %v116 = vrot.slane %v112, %v115
  %v117 = vmul.f32 %v111, %v116
  %v118 = vld [vmem:[%s1] sm:$0x7f]
  %v119 = vld [vmem:[%s2] sm:$0xff]
  %v120 = vld [vmem:[%s2 + $0x8] sm:$0xff]
  %v121 = vld [vmem:[%s2 + $0x10] sm:$0xff]
  %v122 = vld [vmem:[%s2 + $0x18] sm:$0xff]
  %vm123 = vcmask 261120
  %v125 = vsel %vm123, %v118, 0
  %127 = vmatprep.subr.mxu0 0.0
  %128 = vmatpush1.msra.mxu0 %v119
  %129 = vmatprep.subr.mxu0 0.0
  %130 = vmatpush1.msra.mxu0 %v120
  %131 = vmatprep.subr.mxu0 0.0
  %132 = vmatpush1.msra.mxu0 %v121
  %133 = vmatprep.subr.mxu0 0.0
  %134 = vmatpush1.msra.mxu0 %v122
  %135 = vmatprep.subr.mxu0 0.0
  %136 = vmatpush1.msra.mxu0 0.0
  %137 = vmatprep.subr.mxu0 0.0
  %138 = vmatpush1.msra.mxu0 0.0
  %139 = vmatprep.subr.mxu0 0.0
  %140 = vmatpush1.msra.mxu0 0.0
  %141 = vmatprep.subr.mxu0 0.0
  %142 = vmatpush1.msra.mxu0 0.0
  %143 = vmatprep.subr.mxu0 0.0
  %144 = vmatpush1.msra.mxu0 0.0
  %145 = vmatprep.subr.mxu0 0.0
  %146 = vmatpush1.msra.mxu0 0.0
  %147 = vmatprep.subr.mxu0 0.0
  %148 = vmatpush1.msra.mxu0 0.0
  %149 = vmatprep.subr.mxu0 0.0
  %150 = vmatpush1.msra.mxu0 0.0
  %151 = vmatprep.subr.mxu0 0.0
  %152 = vmatpush1.msra.mxu0 0.0
  %153 = vmatprep.subr.mxu0 0.0
  %154 = vmatpush1.msra.mxu0 0.0
  %155 = vmatprep.subr.mxu0 0.0
  %156 = vmatpush1.msra.mxu0 0.0
  %157 = vmatprep.subr.mxu0 0.0
  %158 = vmatpush1.msra.mxu0 0.0
  %159 = vmatprep.subr.mxu0 0.0
  %160 = vmatpush1.msra.mxu0 0.0
  %161 = vmatprep.subr.mxu0 0.0
  %162 = vmatpush1.msra.mxu0 0.0
  %163 = vmatprep.subr.mxu0 0.0
  %164 = vmatpush1.msra.mxu0 0.0
  %165 = vmatprep.subr.mxu0 0.0
  %166 = vmatpush1.msra.mxu0 0.0
  %167 = vmatprep.subr.mxu0 0.0
  %168 = vmatpush1.msra.mxu0 0.0
  %169 = vmatprep.subr.mxu0 0.0
  %170 = vmatpush1.msra.mxu0 0.0
  %171 = vmatprep.subr.mxu0 0.0
  %172 = vmatpush1.msra.mxu0 0.0
  %173 = vmatprep.subr.mxu0 0.0
  %174 = vmatpush1.msra.mxu0 0.0
  %175 = vmatprep.subr.mxu0 0.0
  %176 = vmatpush1.msra.mxu0 0.0
  %177 = vmatprep.subr.mxu0 0.0
  %178 = vmatpush1.msra.mxu0 0.0
  %179 = vmatprep.subr.mxu0 0.0
  %180 = vmatpush1.msra.mxu0 0.0
  %181 = vmatprep.subr.mxu0 0.0
  %182 = vmatpush1.msra.mxu0 0.0
  %183 = vmatprep.subr.mxu0 0.0
  %184 = vmatpush1.msra.mxu0 0.0
  %185 = vmatprep.subr.mxu0 0.0
  %186 = vmatpush1.msra.mxu0 0.0
  %187 = vmatprep.subr.mxu0 0.0
  %188 = vmatpush1.msra.mxu0 0.0
  %189 = vmatprep.subr.mxu0 0.0
  %190 = vmatpush1.msra.mxu0 0.0
  %191 = vmatprep.mubr.f32.mxu0 0.0
  %192 = vmatmul.mubr.f32.gmra.mrb[0].mxu0 %v125
  %v193 = vpop.f32.mrb[0].mxu0
  %v194 = vadd.f32 0.0, %v193
  %v195 = vpop.f32.mrb[0].mxu0
  %196 = vdwg.mxu0
  %v197 = vld [vmem:[%s3] sm:$0x1]
  %v199 = vlaneseq
  %v200 = vshrl.u32 %v199, 7
  %v201 = vsub.s32 0, %v200
  %v202 = vrot.slane %v197, %v201
  %v205 = vsel %vm33, %v117, 0
  %vm207 = vcmask 1046528
  %v209 = vsel %vm207, %v194, 0
  %211 = vmatprep.subr.mxu0 0.0
  %212 = vmatpush1.msra.mxu0 %v209
  %213 = vmatprep.subr.mxu0 0.0
  %214 = vmatpush1.msra.mxu0 0.0
  %215 = vmatprep.subr.mxu0 0.0
  %216 = vmatpush1.msra.mxu0 0.0
  %217 = vmatprep.subr.mxu0 0.0
  %218 = vmatpush1.msra.mxu0 0.0
  %219 = vmatprep.subr.mxu0 0.0
  %220 = vmatpush1.msra.mxu0 0.0
  %221 = vmatprep.subr.mxu0 0.0
  %222 = vmatpush1.msra.mxu0 0.0
  %223 = vmatprep.subr.mxu0 0.0
  %224 = vmatpush1.msra.mxu0 0.0
  %225 = vmatprep.subr.mxu0 0.0
  %226 = vmatpush1.msra.mxu0 0.0
  %227 = vmatprep.subr.mxu0 0.0
  %228 = vmatpush1.msra.mxu0 0.0
  %229 = vmatprep.subr.mxu0 0.0
  %230 = vmatpush1.msra.mxu0 0.0
  %231 = vmatprep.subr.mxu0 0.0
  %232 = vmatpush1.msra.mxu0 0.0
  %233 = vmatprep.subr.mxu0 0.0
  %234 = vmatpush1.msra.mxu0 0.0
  %235 = vmatprep.subr.mxu0 0.0
  %236 = vmatpush1.msra.mxu0 0.0
  %237 = vmatprep.subr.mxu0 0.0
  %238 = vmatpush1.msra.mxu0 0.0
  %239 = vmatprep.subr.mxu0 0.0
  %240 = vmatpush1.msra.mxu0 0.0
  %241 = vmatprep.subr.mxu0 0.0
  %242 = vmatpush1.msra.mxu0 0.0
  %243 = vmatprep.subr.mxu0 0.0
  %244 = vmatpush1.msra.mxu0 0.0
  %245 = vmatprep.subr.mxu0 0.0
  %246 = vmatpush1.msra.mxu0 0.0
  %247 = vmatprep.subr.mxu0 0.0
  %248 = vmatpush1.msra.mxu0 0.0
  %249 = vmatprep.subr.mxu0 0.0
  %250 = vmatpush1.msra.mxu0 0.0
  %251 = vmatprep.subr.mxu0 0.0
  %252 = vmatpush1.msra.mxu0 0.0
  %253 = vmatprep.subr.mxu0 0.0
  %254 = vmatpush1.msra.mxu0 0.0
  %255 = vmatprep.subr.mxu0 0.0
  %256 = vmatpush1.msra.mxu0 0.0
  %257 = vmatprep.subr.mxu0 0.0
  %258 = vmatpush1.msra.mxu0 0.0
  %259 = vmatprep.subr.mxu0 0.0
  %260 = vmatpush1.msra.mxu0 0.0
  %261 = vmatprep.subr.mxu0 0.0
  %262 = vmatpush1.msra.mxu0 0.0
  %263 = vmatprep.subr.mxu0 0.0
  %264 = vmatpush1.msra.mxu0 0.0
  %265 = vmatprep.subr.mxu0 0.0
  %266 = vmatpush1.msra.mxu0 0.0
  %267 = vmatprep.subr.mxu0 0.0
  %268 = vmatpush1.msra.mxu0 0.0
  %269 = vmatprep.subr.mxu0 0.0
  %270 = vmatpush1.msra.mxu0 0.0
  %271 = vmatprep.subr.mxu0 0.0
  %272 = vmatpush1.msra.mxu0 0.0
  %273 = vmatprep.subr.mxu0 0.0
  %274 = vmatpush1.msra.mxu0 0.0
  %275 = vmatprep.mubr.f32.mxu0 0.0
  %276 = vmatmul.mubr.f32.gmra.mrb[0].mxu0 %v205
  %v277 = vpop.f32.mrb[0].mxu0
  %v278 = vadd.f32 %v202, %v277
  %v279 = vpop.f32.mrb[0].mxu0
  %280 = vdwg.mxu0
  %v281 = vmax.f32 %v278, 0.0
  %vm282 = vcmask 260096
  %283 = vst.msk [vmem:[%s4] sm:$0x7f] %vm282, %v281
  // Predicated region
  $region18: #{edmd_pool_forward.11} parent=0 // pred_check
    _
  $region19: #{edmd_pool_forward.11} parent=0 // pred_check_branch
    %285 = sbr.rel (0) target = $region21
  $region20: #{edmd_pool_forward.11} parent=0 // pred_region
    _
  $region21: #{edmd_pool_forward.11} parent=0 // pred_fallthru
    _
  // Predicated region
  $region22: #{edmd_pool_forward.11} parent=0 // pred_check
    _
  $region23: #{edmd_pool_forward.11} parent=0 // pred_check_branch
    %287 = sbr.rel (0) target = $region25
  $region24: #{edmd_pool_forward.11} parent=0 // pred_region
    _
  $region25: #{edmd_pool_forward.11} parent=0 // pred_fallthru
    _

// kernel: edmd_pool_forward.13
$region0: #{edmd_pool_forward.13}
  #allocation0 [shape = 'u32[]', space=smem, size = 0x4, offset = 0x4, fixed_abs, tag = 'smem constant byte address 0x4 - core index']
  #allocation1 [shape = 'u32[144,128]{1,0:T(1,128)}', space=vmem, size = 0x12000, scoped, tag = 'internal scratch']
  %s0 = inlined_call_operand.vmem [shape: f32[16,16], index: 0, kind: input, shape index: {}]
  %s1 = inlined_call_operand.vmem [shape: f32[12,32], index: 1, kind: input, shape index: {}]
  %s2 = inlined_call_operand.vmem [shape: s32[1,12], index: 2, kind: input, shape index: {}]
  %s3 = inlined_call_operand.vmem [shape: f32[32,32], index: 3, kind: input, shape index: {}]
  %s4 = inlined_call_operand.vmem [shape: f32[1,32], index: 4, kind: input, shape index: {}]
  %s5 = inlined_call_operand.vmem [shape: f32[16,32], index: 5, kind: input, shape index: {}]
  %s6 = inlined_call_operand.vmem [shape: f32[16,32], index: 6, kind: output, shape index: {}]
  %s7 = sld [smem:[#allocation0]]
  $region34: #{edmd_pool_forward.13} parent=0
    _
  %s9 = ssub.s32 1, %s7
  %s10 = scalar_select 0, %s9, %s7
  // Predicated region
  $region2: #{edmd_pool_forward.13} parent=0 // pred_check
    _
  $region3: #{edmd_pool_forward.13} parent=0 // pred_check_branch
    %12 = sbr.rel (0) target = $region5
  $region4: #{edmd_pool_forward.13} parent=0 // pred_region
    _
  $region5: #{edmd_pool_forward.13} parent=0 // pred_fallthru
    _
  // Predicated region
  $region6: #{edmd_pool_forward.13} parent=0 // pred_check
    _
  $region7: #{edmd_pool_forward.13} parent=0 // pred_check_branch
    %14 = sbr.rel (0) target = $region9
  $region8: #{edmd_pool_forward.13} parent=0 // pred_region
    _
  $region9: #{edmd_pool_forward.13} parent=0 // pred_fallthru
    _
  // Predicated region
  $region10: #{edmd_pool_forward.13} parent=0 // pred_check
    _
  $region11: #{edmd_pool_forward.13} parent=0 // pred_check_branch
    %16 = sbr.rel (0) target = $region13
  $region12: #{edmd_pool_forward.13} parent=0 // pred_region
    _
  $region13: #{edmd_pool_forward.13} parent=0 // pred_fallthru
    _
  // Predicated region
  $region14: #{edmd_pool_forward.13} parent=0 // pred_check
    _
  $region15: #{edmd_pool_forward.13} parent=0 // pred_check_branch
    %18 = sbr.rel (0) target = $region17
  $region16: #{edmd_pool_forward.13} parent=0 // pred_region
    _
  $region17: #{edmd_pool_forward.13} parent=0 // pred_fallthru
    _
  // Predicated region
  $region18: #{edmd_pool_forward.13} parent=0 // pred_check
    _
  $region19: #{edmd_pool_forward.13} parent=0 // pred_check_branch
    %20 = sbr.rel (0) target = $region21
  $region20: #{edmd_pool_forward.13} parent=0 // pred_region
    _
  $region21: #{edmd_pool_forward.13} parent=0 // pred_fallthru
    _
  // Predicated region
  $region22: #{edmd_pool_forward.13} parent=0 // pred_check
    _
  $region23: #{edmd_pool_forward.13} parent=0 // pred_check_branch
    %22 = sbr.rel (0) target = $region25
  $region24: #{edmd_pool_forward.13} parent=0 // pred_region
    _
  $region25: #{edmd_pool_forward.13} parent=0 // pred_fallthru
    _
  %v23 = vld [vmem:[%s2] sm:$0x1]
  %v24 = vlaneseq
  %v25 = vshrl.u32 %v24, 7
  %v26 = vadd.s32 %v25, 8
  %v27 = vlaneseq
  %v28 = vshrl.u32 %v27, 7
  %v29 = vsub.s32 0, %v28
  %v30 = vrot.slane %v23, %v29
  %vm31 = vcmp.eq.s32.totalorder %v25, %v30
  %vm32 = vcmp.eq.s32.totalorder %v26, %v30
  %v33 = vsel %vm31, 1, 0
  %v34 = vsel %vm32, 1, 0
  %v35 = vcvt.s32.f32 %v33
  %v36 = vcvt.s32.f32 %v34
  %v37 = vld [vmem:[%s1] sm:$0xff]
  %v38 = vld [vmem:[%s1 + $0x8] sm:$0xf]
  %v39 = vld [vmem:[%s3] sm:$0xff]
  %v40 = vld [vmem:[%s3 + $0x8] sm:$0xff]
  %v41 = vld [vmem:[%s3 + $0x10] sm:$0xff]
  %v42 = vld [vmem:[%s3 + $0x18] sm:$0xff]
  %vm43 = vcmask 261120
  %v45 = vsel %vm43, %v37, 0
  %v48 = vsel %vm43, %v38, 0
  %50 = vmatprep.subr.mxu0 0.0
  %51 = vmatpush1.msra.mxu0 %v39
  %52 = vmatprep.subr.mxu0 0.0
  %53 = vmatpush1.msra.mxu0 %v40
  %54 = vmatprep.subr.mxu0 0.0
  %55 = vmatpush1.msra.mxu0 %v41
  %56 = vmatprep.subr.mxu0 0.0
  %57 = vmatpush1.msra.mxu0 %v42
  %58 = vmatprep.subr.mxu0 0.0
  %59 = vmatpush1.msra.mxu0 0.0
  %60 = vmatprep.subr.mxu0 0.0
  %61 = vmatpush1.msra.mxu0 0.0
  %62 = vmatprep.subr.mxu0 0.0
  %63 = vmatpush1.msra.mxu0 0.0
  %64 = vmatprep.subr.mxu0 0.0
  %65 = vmatpush1.msra.mxu0 0.0
  %66 = vmatprep.subr.mxu0 0.0
  %67 = vmatpush1.msra.mxu0 0.0
  %68 = vmatprep.subr.mxu0 0.0
  %69 = vmatpush1.msra.mxu0 0.0
  %70 = vmatprep.subr.mxu0 0.0
  %71 = vmatpush1.msra.mxu0 0.0
  %72 = vmatprep.subr.mxu0 0.0
  %73 = vmatpush1.msra.mxu0 0.0
  %74 = vmatprep.subr.mxu0 0.0
  %75 = vmatpush1.msra.mxu0 0.0
  %76 = vmatprep.subr.mxu0 0.0
  %77 = vmatpush1.msra.mxu0 0.0
  %78 = vmatprep.subr.mxu0 0.0
  %79 = vmatpush1.msra.mxu0 0.0
  %80 = vmatprep.subr.mxu0 0.0
  %81 = vmatpush1.msra.mxu0 0.0
  %82 = vmatprep.subr.mxu0 0.0
  %83 = vmatpush1.msra.mxu0 0.0
  %84 = vmatprep.subr.mxu0 0.0
  %85 = vmatpush1.msra.mxu0 0.0
  %86 = vmatprep.subr.mxu0 0.0
  %87 = vmatpush1.msra.mxu0 0.0
  %88 = vmatprep.subr.mxu0 0.0
  %89 = vmatpush1.msra.mxu0 0.0
  %90 = vmatprep.subr.mxu0 0.0
  %91 = vmatpush1.msra.mxu0 0.0
  %92 = vmatprep.subr.mxu0 0.0
  %93 = vmatpush1.msra.mxu0 0.0
  %94 = vmatprep.subr.mxu0 0.0
  %95 = vmatpush1.msra.mxu0 0.0
  %96 = vmatprep.subr.mxu0 0.0
  %97 = vmatpush1.msra.mxu0 0.0
  %98 = vmatprep.subr.mxu0 0.0
  %99 = vmatpush1.msra.mxu0 0.0
  %100 = vmatprep.subr.mxu0 0.0
  %101 = vmatpush1.msra.mxu0 0.0
  %102 = vmatprep.subr.mxu0 0.0
  %103 = vmatpush1.msra.mxu0 0.0
  %104 = vmatprep.subr.mxu0 0.0
  %105 = vmatpush1.msra.mxu0 0.0
  %106 = vmatprep.subr.mxu0 0.0
  %107 = vmatpush1.msra.mxu0 0.0
  %108 = vmatprep.subr.mxu0 0.0
  %109 = vmatpush1.msra.mxu0 0.0
  %110 = vmatprep.subr.mxu0 0.0
  %111 = vmatpush1.msra.mxu0 0.0
  %112 = vmatprep.subr.mxu0 0.0
  %113 = vmatpush1.msra.mxu0 0.0
  %114 = vmatprep.mubr.f32.mxu0 0.0
  %115 = vmatmul.mubr.f32.gmra.mrb[0].mxu0 %v45
  %v116 = vpop.f32.mrb[0].mxu0
  %v117 = vadd.f32 0.0, %v116
  %v118 = vpop.f32.mrb[0].mxu0
  %119 = vmatprep.mubr.f32.mxu0 0.0
  %120 = vmatmul.mubr.f32.gmra.mrb[0].mxu0 %v48
  %v121 = vpop.f32.mrb[0].mxu0
  %v122 = vadd.f32 0.0, %v121
  %v123 = vpop.f32.mrb[0].mxu0
  %124 = vdwg.mxu0
  %vm125 = vcmask 97280
  %v127 = vsel %vm125, %v35, 0
  %v130 = vsel %vm125, %v36, 0
  %vm132 = vcmask 1043456
  %v134 = vsel %vm132, %v122, 0
  %136 = vmatprep.subr.mxu0 0.0
  %137 = vmatpush1.msra.mxu0 %v117
  %138 = vmatprep.subr.mxu0 0.0
  %139 = vmatpush1.msra.mxu0 %v134
  %140 = vmatprep.subr.mxu0 0.0
  %141 = vmatpush1.msra.mxu0 0.0
  %142 = vmatprep.subr.mxu0 0.0
  %143 = vmatpush1.msra.mxu0 0.0
  %144 = vmatprep.subr.mxu0 0.0
  %145 = vmatpush1.msra.mxu0 0.0
  %146 = vmatprep.subr.mxu0 0.0
  %147 = vmatpush1.msra.mxu0 0.0
  %148 = vmatprep.subr.mxu0 0.0
  %149 = vmatpush1.msra.mxu0 0.0
  %150 = vmatprep.subr.mxu0 0.0
  %151 = vmatpush1.msra.mxu0 0.0
  %152 = vmatprep.subr.mxu0 0.0
  %153 = vmatpush1.msra.mxu0 0.0
  %154 = vmatprep.subr.mxu0 0.0
  %155 = vmatpush1.msra.mxu0 0.0
  %156 = vmatprep.subr.mxu0 0.0
  %157 = vmatpush1.msra.mxu0 0.0
  %158 = vmatprep.subr.mxu0 0.0
  %159 = vmatpush1.msra.mxu0 0.0
  %160 = vmatprep.subr.mxu0 0.0
  %161 = vmatpush1.msra.mxu0 0.0
  %162 = vmatprep.subr.mxu0 0.0
  %163 = vmatpush1.msra.mxu0 0.0
  %164 = vmatprep.subr.mxu0 0.0
  %165 = vmatpush1.msra.mxu0 0.0
  %166 = vmatprep.subr.mxu0 0.0
  %167 = vmatpush1.msra.mxu0 0.0
  %168 = vmatprep.subr.mxu0 0.0
  %169 = vmatpush1.msra.mxu0 0.0
  %170 = vmatprep.subr.mxu0 0.0
  %171 = vmatpush1.msra.mxu0 0.0
  %172 = vmatprep.subr.mxu0 0.0
  %173 = vmatpush1.msra.mxu0 0.0
  %174 = vmatprep.subr.mxu0 0.0
  %175 = vmatpush1.msra.mxu0 0.0
  %176 = vmatprep.subr.mxu0 0.0
  %177 = vmatpush1.msra.mxu0 0.0
  %178 = vmatprep.subr.mxu0 0.0
  %179 = vmatpush1.msra.mxu0 0.0
  %180 = vmatprep.subr.mxu0 0.0
  %181 = vmatpush1.msra.mxu0 0.0
  %182 = vmatprep.subr.mxu0 0.0
  %183 = vmatpush1.msra.mxu0 0.0
  %184 = vmatprep.subr.mxu0 0.0
  %185 = vmatpush1.msra.mxu0 0.0
  %186 = vmatprep.subr.mxu0 0.0
  %187 = vmatpush1.msra.mxu0 0.0
  %188 = vmatprep.subr.mxu0 0.0
  %189 = vmatpush1.msra.mxu0 0.0
  %190 = vmatprep.subr.mxu0 0.0
  %191 = vmatpush1.msra.mxu0 0.0
  %192 = vmatprep.subr.mxu0 0.0
  %193 = vmatpush1.msra.mxu0 0.0
  %194 = vmatprep.subr.mxu0 0.0
  %195 = vmatpush1.msra.mxu0 0.0
  %196 = vmatprep.subr.mxu0 0.0
  %197 = vmatpush1.msra.mxu0 0.0
  %198 = vmatprep.subr.mxu0 0.0
  %199 = vmatpush1.msra.mxu0 0.0
  %200 = vmatprep.mubr.f32.mxu0 0.0
  %201 = vmatmul.mubr.f32.gmra.mrb[0].mxu0 %v127
  %v202 = vpop.f32.mrb[0].mxu0
  %v203 = vadd.f32 0.0, %v202
  %v204 = vpop.f32.mrb[0].mxu0
  %205 = vmatprep.mubr.f32.mxu0 0.0
  %206 = vmatmul.mubr.f32.gmra.mrb[0].mxu0 %v130
  %v207 = vpop.f32.mrb[0].mxu0
  %v208 = vadd.f32 0.0, %v207
  %v209 = vpop.f32.mrb[0].mxu0
  %210 = vdwg.mxu0
  %v211 = vld [vmem:[%s0] sm:$0xff]
  %v212 = vld [vmem:[%s0 + $0x8] sm:$0xff]
  %v213 = vld [vmem:[%s4] sm:$0x1]
  %v215 = vlaneseq
  %v216 = vshrl.u32 %v215, 7
  %v217 = vsub.s32 0, %v216
  %v218 = vrot.slane %v213, %v217
  %vm220 = vcmask 130048
  %v222 = vsel %vm220, %v211, 0
  %v225 = vsel %vm220, %v212, 0
  %227 = vmatprep.subr.mxu0 0.0
  %228 = vmatpush1.msra.mxu0 %v203
  %229 = vmatprep.subr.mxu0 0.0
  %230 = vmatpush1.msra.mxu0 %v208
  %231 = vmatprep.subr.mxu0 0.0
  %232 = vmatpush1.msra.mxu0 0.0
  %233 = vmatprep.subr.mxu0 0.0
  %234 = vmatpush1.msra.mxu0 0.0
  %235 = vmatprep.subr.mxu0 0.0
  %236 = vmatpush1.msra.mxu0 0.0
  %237 = vmatprep.subr.mxu0 0.0
  %238 = vmatpush1.msra.mxu0 0.0
  %239 = vmatprep.subr.mxu0 0.0
  %240 = vmatpush1.msra.mxu0 0.0
  %241 = vmatprep.subr.mxu0 0.0
  %242 = vmatpush1.msra.mxu0 0.0
  %243 = vmatprep.subr.mxu0 0.0
  %244 = vmatpush1.msra.mxu0 0.0
  %245 = vmatprep.subr.mxu0 0.0
  %246 = vmatpush1.msra.mxu0 0.0
  %247 = vmatprep.subr.mxu0 0.0
  %248 = vmatpush1.msra.mxu0 0.0
  %249 = vmatprep.subr.mxu0 0.0
  %250 = vmatpush1.msra.mxu0 0.0
  %251 = vmatprep.subr.mxu0 0.0
  %252 = vmatpush1.msra.mxu0 0.0
  %253 = vmatprep.subr.mxu0 0.0
  %254 = vmatpush1.msra.mxu0 0.0
  %255 = vmatprep.subr.mxu0 0.0
  %256 = vmatpush1.msra.mxu0 0.0
  %257 = vmatprep.subr.mxu0 0.0
  %258 = vmatpush1.msra.mxu0 0.0
  %259 = vmatprep.subr.mxu0 0.0
  %260 = vmatpush1.msra.mxu0 0.0
  %261 = vmatprep.subr.mxu0 0.0
  %262 = vmatpush1.msra.mxu0 0.0
  %263 = vmatprep.subr.mxu0 0.0
  %264 = vmatpush1.msra.mxu0 0.0
  %265 = vmatprep.subr.mxu0 0.0
  %266 = vmatpush1.msra.mxu0 0.0
  %267 = vmatprep.subr.mxu0 0.0
  %268 = vmatpush1.msra.mxu0 0.0
  %269 = vmatprep.subr.mxu0 0.0
  %270 = vmatpush1.msra.mxu0 0.0
  %271 = vmatprep.subr.mxu0 0.0
  %272 = vmatpush1.msra.mxu0 0.0
  %273 = vmatprep.subr.mxu0 0.0
  %274 = vmatpush1.msra.mxu0 0.0
  %275 = vmatprep.subr.mxu0 0.0
  %276 = vmatpush1.msra.mxu0 0.0
  %277 = vmatprep.subr.mxu0 0.0
  %278 = vmatpush1.msra.mxu0 0.0
  %279 = vmatprep.subr.mxu0 0.0
  %280 = vmatpush1.msra.mxu0 0.0
  %281 = vmatprep.subr.mxu0 0.0
  %282 = vmatpush1.msra.mxu0 0.0
  %283 = vmatprep.subr.mxu0 0.0
  %284 = vmatpush1.msra.mxu0 0.0
  %285 = vmatprep.subr.mxu0 0.0
  %286 = vmatpush1.msra.mxu0 0.0
  %287 = vmatprep.subr.mxu0 0.0
  %288 = vmatpush1.msra.mxu0 0.0
  %289 = vmatprep.subr.mxu0 0.0
  %290 = vmatpush1.msra.mxu0 0.0
  %291 = vmatprep.mubr.f32.mxu0 0.0
  %292 = vmatmul.mubr.f32.gmra.mrb[0].mxu0 %v222
  %v293 = vpop.f32.mrb[0].mxu0
  %v294 = vadd.f32 %v218, %v293
  %v295 = vpop.f32.mrb[0].mxu0
  %296 = vmatprep.mubr.f32.mxu0 0.0
  %297 = vmatmul.mubr.f32.gmra.mrb[0].mxu0 %v225
  %v298 = vpop.f32.mrb[0].mxu0
  %v299 = vadd.f32 %v218, %v298
  %v300 = vpop.f32.mrb[0].mxu0
  %301 = vdwg.mxu0
  %v302 = vmax.f32 %v294, 0.0
  %v303 = vmax.f32 %v299, 0.0
  %v304 = vld [vmem:[%s5] sm:$0xff]
  %v305 = vld [vmem:[%s5 + $0x8] sm:$0xff]
  %v306 = vadd.f32 %v302, %v304
  %v307 = vadd.f32 %v303, %v305
  %308 = vst.msk [vmem:[%s6] sm:$0xff] %vm43, %v306
  %309 = vst.msk [vmem:[%s6 + $0x8] sm:$0xff] %vm43, %v307
  // Predicated region
  $region26: #{edmd_pool_forward.13} parent=0 // pred_check
    _
  $region27: #{edmd_pool_forward.13} parent=0 // pred_check_branch
    %311 = sbr.rel (0) target = $region29
  $region28: #{edmd_pool_forward.13} parent=0 // pred_region
    _
  $region29: #{edmd_pool_forward.13} parent=0 // pred_fallthru
    _
  // Predicated region
  $region30: #{edmd_pool_forward.13} parent=0 // pred_check
    _
  $region31: #{edmd_pool_forward.13} parent=0 // pred_check_branch
    %313 = sbr.rel (0) target = $region33
  $region32: #{edmd_pool_forward.13} parent=0 // pred_region
    _
  $region33: #{edmd_pool_forward.13} parent=0 // pred_fallthru
    _

// kernel: edmd_pool_forward.12
$region0: #{edmd_pool_forward.12}
  #allocation0 [shape = 'u32[]', space=smem, size = 0x4, offset = 0x4, fixed_abs, tag = 'smem constant byte address 0x4 - core index']
  #allocation1 [shape = 'u32[144,128]{1,0:T(1,128)}', space=vmem, size = 0x12000, scoped, tag = 'internal scratch']
  %s0 = inlined_call_operand.vmem [shape: f32[12,12], index: 0, kind: input, shape index: {}]
  %s1 = inlined_call_operand.vmem [shape: f32[7,32], index: 1, kind: input, shape index: {}]
  %s2 = inlined_call_operand.vmem [shape: s32[1,7], index: 2, kind: input, shape index: {}]
  %s3 = inlined_call_operand.vmem [shape: f32[32,32], index: 3, kind: input, shape index: {}]
  %s4 = inlined_call_operand.vmem [shape: f32[1,32], index: 4, kind: input, shape index: {}]
  %s5 = inlined_call_operand.vmem [shape: f32[12,32], index: 5, kind: input, shape index: {}]
  %s6 = inlined_call_operand.vmem [shape: f32[12,32], index: 6, kind: output, shape index: {}]
  %s7 = sld [smem:[#allocation0]]
  $region34: #{edmd_pool_forward.12} parent=0
    _
  %s9 = ssub.s32 1, %s7
  %s10 = scalar_select 0, %s9, %s7
  // Predicated region
  $region2: #{edmd_pool_forward.12} parent=0 // pred_check
    _
  $region3: #{edmd_pool_forward.12} parent=0 // pred_check_branch
    %12 = sbr.rel (0) target = $region5
  $region4: #{edmd_pool_forward.12} parent=0 // pred_region
    _
  $region5: #{edmd_pool_forward.12} parent=0 // pred_fallthru
    _
  // Predicated region
  $region6: #{edmd_pool_forward.12} parent=0 // pred_check
    _
  $region7: #{edmd_pool_forward.12} parent=0 // pred_check_branch
    %14 = sbr.rel (0) target = $region9
  $region8: #{edmd_pool_forward.12} parent=0 // pred_region
    _
  $region9: #{edmd_pool_forward.12} parent=0 // pred_fallthru
    _
  // Predicated region
  $region10: #{edmd_pool_forward.12} parent=0 // pred_check
    _
  $region11: #{edmd_pool_forward.12} parent=0 // pred_check_branch
    %16 = sbr.rel (0) target = $region13
  $region12: #{edmd_pool_forward.12} parent=0 // pred_region
    _
  $region13: #{edmd_pool_forward.12} parent=0 // pred_fallthru
    _
  // Predicated region
  $region14: #{edmd_pool_forward.12} parent=0 // pred_check
    _
  $region15: #{edmd_pool_forward.12} parent=0 // pred_check_branch
    %18 = sbr.rel (0) target = $region17
  $region16: #{edmd_pool_forward.12} parent=0 // pred_region
    _
  $region17: #{edmd_pool_forward.12} parent=0 // pred_fallthru
    _
  // Predicated region
  $region18: #{edmd_pool_forward.12} parent=0 // pred_check
    _
  $region19: #{edmd_pool_forward.12} parent=0 // pred_check_branch
    %20 = sbr.rel (0) target = $region21
  $region20: #{edmd_pool_forward.12} parent=0 // pred_region
    _
  $region21: #{edmd_pool_forward.12} parent=0 // pred_fallthru
    _
  // Predicated region
  $region22: #{edmd_pool_forward.12} parent=0 // pred_check
    _
  $region23: #{edmd_pool_forward.12} parent=0 // pred_check_branch
    %22 = sbr.rel (0) target = $region25
  $region24: #{edmd_pool_forward.12} parent=0 // pred_region
    _
  $region25: #{edmd_pool_forward.12} parent=0 // pred_fallthru
    _
  %v23 = vld [vmem:[%s2] sm:$0x1]
  %v24 = vlaneseq
  %v25 = vshrl.u32 %v24, 7
  %v26 = vadd.s32 %v25, 8
  %v27 = vlaneseq
  %v28 = vshrl.u32 %v27, 7
  %v29 = vsub.s32 0, %v28
  %v30 = vrot.slane %v23, %v29
  %vm31 = vcmp.eq.s32.totalorder %v25, %v30
  %vm32 = vcmp.eq.s32.totalorder %v26, %v30
  %v33 = vsel %vm31, 1, 0
  %v34 = vsel %vm32, 1, 0
  %v35 = vcvt.s32.f32 %v33
  %v36 = vcvt.s32.f32 %v34
  %v37 = vld [vmem:[%s1] sm:$0x7f]
  %v38 = vld [vmem:[%s3] sm:$0xff]
  %v39 = vld [vmem:[%s3 + $0x8] sm:$0xff]
  %v40 = vld [vmem:[%s3 + $0x10] sm:$0xff]
  %v41 = vld [vmem:[%s3 + $0x18] sm:$0xff]
  %vm42 = vcmask 261120
  %v44 = vsel %vm42, %v37, 0
  %46 = vmatprep.subr.mxu0 0.0
  %47 = vmatpush1.msra.mxu0 %v38
  %48 = vmatprep.subr.mxu0 0.0
  %49 = vmatpush1.msra.mxu0 %v39
  %50 = vmatprep.subr.mxu0 0.0
  %51 = vmatpush1.msra.mxu0 %v40
  %52 = vmatprep.subr.mxu0 0.0
  %53 = vmatpush1.msra.mxu0 %v41
  %54 = vmatprep.subr.mxu0 0.0
  %55 = vmatpush1.msra.mxu0 0.0
  %56 = vmatprep.subr.mxu0 0.0
  %57 = vmatpush1.msra.mxu0 0.0
  %58 = vmatprep.subr.mxu0 0.0
  %59 = vmatpush1.msra.mxu0 0.0
  %60 = vmatprep.subr.mxu0 0.0
  %61 = vmatpush1.msra.mxu0 0.0
  %62 = vmatprep.subr.mxu0 0.0
  %63 = vmatpush1.msra.mxu0 0.0
  %64 = vmatprep.subr.mxu0 0.0
  %65 = vmatpush1.msra.mxu0 0.0
  %66 = vmatprep.subr.mxu0 0.0
  %67 = vmatpush1.msra.mxu0 0.0
  %68 = vmatprep.subr.mxu0 0.0
  %69 = vmatpush1.msra.mxu0 0.0
  %70 = vmatprep.subr.mxu0 0.0
  %71 = vmatpush1.msra.mxu0 0.0
  %72 = vmatprep.subr.mxu0 0.0
  %73 = vmatpush1.msra.mxu0 0.0
  %74 = vmatprep.subr.mxu0 0.0
  %75 = vmatpush1.msra.mxu0 0.0
  %76 = vmatprep.subr.mxu0 0.0
  %77 = vmatpush1.msra.mxu0 0.0
  %78 = vmatprep.subr.mxu0 0.0
  %79 = vmatpush1.msra.mxu0 0.0
  %80 = vmatprep.subr.mxu0 0.0
  %81 = vmatpush1.msra.mxu0 0.0
  %82 = vmatprep.subr.mxu0 0.0
  %83 = vmatpush1.msra.mxu0 0.0
  %84 = vmatprep.subr.mxu0 0.0
  %85 = vmatpush1.msra.mxu0 0.0
  %86 = vmatprep.subr.mxu0 0.0
  %87 = vmatpush1.msra.mxu0 0.0
  %88 = vmatprep.subr.mxu0 0.0
  %89 = vmatpush1.msra.mxu0 0.0
  %90 = vmatprep.subr.mxu0 0.0
  %91 = vmatpush1.msra.mxu0 0.0
  %92 = vmatprep.subr.mxu0 0.0
  %93 = vmatpush1.msra.mxu0 0.0
  %94 = vmatprep.subr.mxu0 0.0
  %95 = vmatpush1.msra.mxu0 0.0
  %96 = vmatprep.subr.mxu0 0.0
  %97 = vmatpush1.msra.mxu0 0.0
  %98 = vmatprep.subr.mxu0 0.0
  %99 = vmatpush1.msra.mxu0 0.0
  %100 = vmatprep.subr.mxu0 0.0
  %101 = vmatpush1.msra.mxu0 0.0
  %102 = vmatprep.subr.mxu0 0.0
  %103 = vmatpush1.msra.mxu0 0.0
  %104 = vmatprep.subr.mxu0 0.0
  %105 = vmatpush1.msra.mxu0 0.0
  %106 = vmatprep.subr.mxu0 0.0
  %107 = vmatpush1.msra.mxu0 0.0
  %108 = vmatprep.subr.mxu0 0.0
  %109 = vmatpush1.msra.mxu0 0.0
  %110 = vmatprep.mubr.f32.mxu0 0.0
  %111 = vmatmul.mubr.f32.gmra.mrb[0].mxu0 %v44
  %v112 = vpop.f32.mrb[0].mxu0
  %v113 = vadd.f32 0.0, %v112
  %v114 = vpop.f32.mrb[0].mxu0
  %115 = vdwg.mxu0
  %vm116 = vcmask 56320
  %v118 = vsel %vm116, %v35, 0
  %v121 = vsel %vm116, %v36, 0
  %vm123 = vcmask 1046528
  %v125 = vsel %vm123, %v113, 0
  %127 = vmatprep.subr.mxu0 0.0
  %128 = vmatpush1.msra.mxu0 %v125
  %129 = vmatprep.subr.mxu0 0.0
  %130 = vmatpush1.msra.mxu0 0.0
  %131 = vmatprep.subr.mxu0 0.0
  %132 = vmatpush1.msra.mxu0 0.0
  %133 = vmatprep.subr.mxu0 0.0
  %134 = vmatpush1.msra.mxu0 0.0
  %135 = vmatprep.subr.mxu0 0.0
  %136 = vmatpush1.msra.mxu0 0.0
  %137 = vmatprep.subr.mxu0 0.0
  %138 = vmatpush1.msra.mxu0 0.0
  %139 = vmatprep.subr.mxu0 0.0
  %140 = vmatpush1.msra.mxu0 0.0
  %141 = vmatprep.subr.mxu0 0.0
  %142 = vmatpush1.msra.mxu0 0.0
  %143 = vmatprep.subr.mxu0 0.0
  %144 = vmatpush1.msra.mxu0 0.0
  %145 = vmatprep.subr.mxu0 0.0
  %146 = vmatpush1.msra.mxu0 0.0
  %147 = vmatprep.subr.mxu0 0.0
  %148 = vmatpush1.msra.mxu0 0.0
  %149 = vmatprep.subr.mxu0 0.0
  %150 = vmatpush1.msra.mxu0 0.0
  %151 = vmatprep.subr.mxu0 0.0
  %152 = vmatpush1.msra.mxu0 0.0
  %153 = vmatprep.subr.mxu0 0.0
  %154 = vmatpush1.msra.mxu0 0.0
  %155 = vmatprep.subr.mxu0 0.0
  %156 = vmatpush1.msra.mxu0 0.0
  %157 = vmatprep.subr.mxu0 0.0
  %158 = vmatpush1.msra.mxu0 0.0
  %159 = vmatprep.subr.mxu0 0.0
  %160 = vmatpush1.msra.mxu0 0.0
  %161 = vmatprep.subr.mxu0 0.0
  %162 = vmatpush1.msra.mxu0 0.0
  %163 = vmatprep.subr.mxu0 0.0
  %164 = vmatpush1.msra.mxu0 0.0
  %165 = vmatprep.subr.mxu0 0.0
  %166 = vmatpush1.msra.mxu0 0.0
  %167 = vmatprep.subr.mxu0 0.0
  %168 = vmatpush1.msra.mxu0 0.0
  %169 = vmatprep.subr.mxu0 0.0
  %170 = vmatpush1.msra.mxu0 0.0
  %171 = vmatprep.subr.mxu0 0.0
  %172 = vmatpush1.msra.mxu0 0.0
  %173 = vmatprep.subr.mxu0 0.0
  %174 = vmatpush1.msra.mxu0 0.0
  %175 = vmatprep.subr.mxu0 0.0
  %176 = vmatpush1.msra.mxu0 0.0
  %177 = vmatprep.subr.mxu0 0.0
  %178 = vmatpush1.msra.mxu0 0.0
  %179 = vmatprep.subr.mxu0 0.0
  %180 = vmatpush1.msra.mxu0 0.0
  %181 = vmatprep.subr.mxu0 0.0
  %182 = vmatpush1.msra.mxu0 0.0
  %183 = vmatprep.subr.mxu0 0.0
  %184 = vmatpush1.msra.mxu0 0.0
  %185 = vmatprep.subr.mxu0 0.0
  %186 = vmatpush1.msra.mxu0 0.0
  %187 = vmatprep.subr.mxu0 0.0
  %188 = vmatpush1.msra.mxu0 0.0
  %189 = vmatprep.subr.mxu0 0.0
  %190 = vmatpush1.msra.mxu0 0.0
  %191 = vmatprep.mubr.f32.mxu0 0.0
  %192 = vmatmul.mubr.f32.gmra.mrb[0].mxu0 %v118
  %v193 = vpop.f32.mrb[0].mxu0
  %v194 = vadd.f32 0.0, %v193
  %v195 = vpop.f32.mrb[0].mxu0
  %196 = vmatprep.mubr.f32.mxu0 0.0
  %197 = vmatmul.mubr.f32.gmra.mrb[0].mxu0 %v121
  %v198 = vpop.f32.mrb[0].mxu0
  %v199 = vadd.f32 0.0, %v198
  %v200 = vpop.f32.mrb[0].mxu0
  %201 = vdwg.mxu0
  %v202 = vld [vmem:[%s0] sm:$0xff]
  %v203 = vld [vmem:[%s0 + $0x8] sm:$0xf]
  %v204 = vld [vmem:[%s4] sm:$0x1]
  %v206 = vlaneseq
  %v207 = vshrl.u32 %v206, 7
  %v208 = vsub.s32 0, %v207
  %v209 = vrot.slane %v204, %v208
  %vm211 = vcmask 97280
  %v213 = vsel %vm211, %v202, 0
  %v216 = vsel %vm211, %v203, 0
  %vm218 = vcmask 1043456
  %v220 = vsel %vm218, %v199, 0
  %222 = vmatprep.subr.mxu0 0.0
  %223 = vmatpush1.msra.mxu0 %v194
  %224 = vmatprep.subr.mxu0 0.0
  %225 = vmatpush1.msra.mxu0 %v220
  %226 = vmatprep.subr.mxu0 0.0
  %227 = vmatpush1.msra.mxu0 0.0
  %228 = vmatprep.subr.mxu0 0.0
  %229 = vmatpush1.msra.mxu0 0.0
  %230 = vmatprep.subr.mxu0 0.0
  %231 = vmatpush1.msra.mxu0 0.0
  %232 = vmatprep.subr.mxu0 0.0
  %233 = vmatpush1.msra.mxu0 0.0
  %234 = vmatprep.subr.mxu0 0.0
  %235 = vmatpush1.msra.mxu0 0.0
  %236 = vmatprep.subr.mxu0 0.0
  %237 = vmatpush1.msra.mxu0 0.0
  %238 = vmatprep.subr.mxu0 0.0
  %239 = vmatpush1.msra.mxu0 0.0
  %240 = vmatprep.subr.mxu0 0.0
  %241 = vmatpush1.msra.mxu0 0.0
  %242 = vmatprep.subr.mxu0 0.0
  %243 = vmatpush1.msra.mxu0 0.0
  %244 = vmatprep.subr.mxu0 0.0
  %245 = vmatpush1.msra.mxu0 0.0
  %246 = vmatprep.subr.mxu0 0.0
  %247 = vmatpush1.msra.mxu0 0.0
  %248 = vmatprep.subr.mxu0 0.0
  %249 = vmatpush1.msra.mxu0 0.0
  %250 = vmatprep.subr.mxu0 0.0
  %251 = vmatpush1.msra.mxu0 0.0
  %252 = vmatprep.subr.mxu0 0.0
  %253 = vmatpush1.msra.mxu0 0.0
  %254 = vmatprep.subr.mxu0 0.0
  %255 = vmatpush1.msra.mxu0 0.0
  %256 = vmatprep.subr.mxu0 0.0
  %257 = vmatpush1.msra.mxu0 0.0
  %258 = vmatprep.subr.mxu0 0.0
  %259 = vmatpush1.msra.mxu0 0.0
  %260 = vmatprep.subr.mxu0 0.0
  %261 = vmatpush1.msra.mxu0 0.0
  %262 = vmatprep.subr.mxu0 0.0
  %263 = vmatpush1.msra.mxu0 0.0
  %264 = vmatprep.subr.mxu0 0.0
  %265 = vmatpush1.msra.mxu0 0.0
  %266 = vmatprep.subr.mxu0 0.0
  %267 = vmatpush1.msra.mxu0 0.0
  %268 = vmatprep.subr.mxu0 0.0
  %269 = vmatpush1.msra.mxu0 0.0
  %270 = vmatprep.subr.mxu0 0.0
  %271 = vmatpush1.msra.mxu0 0.0
  %272 = vmatprep.subr.mxu0 0.0
  %273 = vmatpush1.msra.mxu0 0.0
  %274 = vmatprep.subr.mxu0 0.0
  %275 = vmatpush1.msra.mxu0 0.0
  %276 = vmatprep.subr.mxu0 0.0
  %277 = vmatpush1.msra.mxu0 0.0
  %278 = vmatprep.subr.mxu0 0.0
  %279 = vmatpush1.msra.mxu0 0.0
  %280 = vmatprep.subr.mxu0 0.0
  %281 = vmatpush1.msra.mxu0 0.0
  %282 = vmatprep.subr.mxu0 0.0
  %283 = vmatpush1.msra.mxu0 0.0
  %284 = vmatprep.subr.mxu0 0.0
  %285 = vmatpush1.msra.mxu0 0.0
  %286 = vmatprep.mubr.f32.mxu0 0.0
  %287 = vmatmul.mubr.f32.gmra.mrb[0].mxu0 %v213
  %v288 = vpop.f32.mrb[0].mxu0
  %v289 = vadd.f32 %v209, %v288
  %v290 = vpop.f32.mrb[0].mxu0
  %291 = vmatprep.mubr.f32.mxu0 0.0
  %292 = vmatmul.mubr.f32.gmra.mrb[0].mxu0 %v216
  %v293 = vpop.f32.mrb[0].mxu0
  %v294 = vadd.f32 %v209, %v293
  %v295 = vpop.f32.mrb[0].mxu0
  %296 = vdwg.mxu0
  %v297 = vmax.f32 %v289, 0.0
  %v298 = vmax.f32 %v294, 0.0
  %v299 = vld [vmem:[%s5] sm:$0xff]
  %v300 = vld [vmem:[%s5 + $0x8] sm:$0xf]
  %v301 = vadd.f32 %v297, %v299
  %v302 = vadd.f32 %v298, %v300
  %303 = vst.msk [vmem:[%s6] sm:$0xff] %vm42, %v301
  %vm304 = vcmask 257024
  %305 = vst.msk [vmem:[%s6 + $0x8] sm:$0xf] %vm304, %v302
  // Predicated region
  $region26: #{edmd_pool_forward.12} parent=0 // pred_check
    _
  $region27: #{edmd_pool_forward.12} parent=0 // pred_check_branch
    %307 = sbr.rel (0) target = $region29
  $region28: #{edmd_pool_forward.12} parent=0 // pred_region
    _
  $region29: #{edmd_pool_forward.12} parent=0 // pred_fallthru
    _
  // Predicated region
  $region30: #{edmd_pool_forward.12} parent=0 // pred_check
    _
  $region31: #{edmd_pool_forward.12} parent=0 // pred_check_branch
    %309 = sbr.rel (0) target = $region33
  $region32: #{edmd_pool_forward.12} parent=0 // pred_region
    _
  $region33: #{edmd_pool_forward.12} parent=0 // pred_fallthru
    _

</llo_original>
